<compile_context>
chip_gen: v5e
topology: v5e:2x2
jax: 0.10.0
libtpu: 0.0.40
codegen_flags: <defaults>
</compile_context>

<pallas_src>
import numpy as np

import jax
import jax.numpy as jnp
from jax import lax
from jax.experimental import pallas as pl
from jax.experimental.pallas import tpu as pltpu


# Architecture of Discriminator3: (ksize, stride, padding) per layer.
LAYER_CONF = [(5, 2, 2)] * 5 + [(3, 1, 1)]
NEG_SLOPE = 0.2


# ---------------------------------------------------------------------------
# Spectral normalization (Conv2DSpectralNorm semantics, n_iter=1) -- glue
# ---------------------------------------------------------------------------
def _spectral_normalize(w, u, eps=1e-12):
    cout = w.shape[0]
    w2 = w.reshape(cout, -1)                                  # [Cout, Cin*K*K]
    v = w2.T @ u                                              # [Cin*K*K, 1]
    v = v / jnp.maximum(jnp.linalg.norm(v), eps)              # F.normalize(dim=0)
    u_new = w2 @ v                                            # [Cout, 1]
    u_new = u_new / jnp.maximum(jnp.linalg.norm(u_new), eps)
    sigma = (u_new.T @ w2 @ v)[0, 0]
    return w / sigma
# TODO(synk): PyTorch also writes the updated `weight_u` buffer back in-place during
# forward; the power iteration is reproduced here but the new u is not returned.


# ---------------------------------------------------------------------------
# Fused 6-layer kernel.  Per image, per layer:
#   a_scr[:, q*CMAX:(q+1)*CMAX] = S[l,q] @ act     (k small H-tap selections)
#   act <- lrelu( a_scr @ T[l] + b[l] )            (one fused MXU matmul)
# ---------------------------------------------------------------------------
def _make_fused_kernel(num_layers, kmax, cmax):
    def kernel(x_ref, t_ref, s_ref, b_ref, *rest):
        out_refs = rest[:num_layers]
        a_scr = rest[num_layers]                               # (ROWS, KMAX*CMAX)

        act = x_ref[0]                                         # (ROWS, CMAX) f32
        for l in range(num_layers):
            for q in range(kmax):
                a_scr[:, q * cmax:(q + 1) * cmax] = jnp.dot(
                    s_ref[l, q], act, preferred_element_type=jnp.float32)
            y = jnp.dot(a_scr[...], t_ref[l],
                        preferred_element_type=jnp.float32)    # (ROWS, CMAX)
            y = y + b_ref[l]                                   # (1, CMAX) broadcast
            act = jnp.where(y >= 0.0, y, NEG_SLOPE * y)        # LeakyReLU(0.2)
            out_refs[l][0] = act
    return kernel


# ---------------------------------------------------------------------------
# Discriminator3 forward
# ---------------------------------------------------------------------------
@jax.jit
def discriminator3_forward(x_nchw, params):
    N, Cin0, H0, W0 = x_nchw.shape
    L = len(params)
    assert L == len(LAYER_CONF)

    # Per-layer geometry (static, from shapes).
    dims = []
    h, w, c = H0, W0, Cin0
    for (k, s, p), prm in zip(LAYER_CONF, params):
        cout = prm["w"].shape[0]
        ho = (h + 2 * p - k) // s + 1
        wo = (w + 2 * p - k) // s + 1
        dims.append((h, w, c, ho, wo, cout, k, s, p))
        h, w, c = ho, wo, cout

    # Uniform in-kernel activation layout: (ROWS, CMAX), lane-dense.
    width = max(max(d[1] * d[2] for d in dims), max(d[4] * d[5] for d in dims))
    CMAX = ((width + 127) // 128) * 128
    ROWS = ((max(d[0] for d in dims) + 7) // 8) * 8
    KMAX = max(d[6] for d in dims)

    t_layers, s_layers, b_rows = [], [], []
    for (hh, ww, cin, ho, wo, cout, k, s, p), prm in zip(dims, params):
        w_n = _spectral_normalize(prm["w"], prm["u"])          # (cout, cin, k, k)
        wt = jnp.transpose(w_n, (2, 3, 1, 0))                  # (kh, kw, cin, cout)

        # E[kw, w, wo] = 1 iff w == s*wo + kw - p  (folds W-stride & W-zero-padding).
        E = np.zeros((k, ww, wo), np.float32)
        for q in range(k):
            for v in range(wo):
                wsrc = s * v + q - p
                if 0 <= wsrc < ww:
                    E[q, wsrc, v] = 1.0
        # T[kh, w*cin+ci, wo*cout+co] = w_n[co, ci, kh, kw] for valid taps only.
        T = jnp.einsum("qwv,hqic->hwivc", jnp.asarray(E), wt)  # (k, ww, cin, wo, cout)
        T = T.reshape(k, ww * cin, wo * cout)
        T = jnp.pad(T, ((0, KMAX - k), (0, CMAX - ww * cin), (0, CMAX - wo * cout)))
        t_layers.append(T.reshape(KMAX * CMAX, CMAX))          # tap q -> row block q

        # S[kh, ho, h] = 1 iff h == s*ho + kh - p  (folds H-stride & H-zero-padding).
        S = np.zeros((KMAX, ROWS, ROWS), np.float32)
        for q in range(k):
            for o in range(ho):
                hsrc = s * o + q - p
                if 0 <= hsrc < hh:
                    S[q, o, hsrc] = 1.0
        s_layers.append(jnp.asarray(S))

        # Bias row in (wo, co) flattened order, padded to CMAX lanes.
        brow = jnp.tile(prm["b"].astype(jnp.float32), wo)
        brow = jnp.pad(brow, (0, CMAX - wo * cout)).reshape(1, CMAX)
        b_rows.append(brow)

    T_all = jnp.stack(t_layers, axis=0)                        # (L, KMAX*CMAX, CMAX)
    S_all = jnp.stack(s_layers, axis=0)                        # (L, KMAX, ROWS, ROWS)
    B_all = jnp.stack(b_rows, axis=0)                          # (L, 1, CMAX)

    # Input NCHW -> per-image row matrix (h, w*c), zero-padded to (ROWS, CMAX).
    x_rows = jnp.transpose(x_nchw, (0, 2, 3, 1)).reshape(N, H0, W0 * Cin0)
    x_rows = jnp.pad(x_rows.astype(jnp.float32),
                     ((0, 0), (0, ROWS - H0), (0, CMAX - W0 * Cin0)))

    kernel = _make_fused_kernel(L, KMAX, CMAX)
    outs = pl.pallas_call(
        kernel,
        out_shape=tuple(jax.ShapeDtypeStruct((N, ROWS, CMAX), jnp.float32)
                        for _ in range(L)),
        grid_spec=pltpu.PrefetchScalarGridSpec(
            num_scalar_prefetch=0,
            grid=(N,),
            in_specs=[
                pl.BlockSpec((1, ROWS, CMAX), lambda n: (n, 0, 0)),            # x rows
                pl.BlockSpec((L, KMAX * CMAX, CMAX), lambda n: (0, 0, 0)),     # T (weights)
                pl.BlockSpec((L, KMAX, ROWS, ROWS), lambda n: (0, 0, 0, 0)),   # S (H select)
                pl.BlockSpec((L, 1, CMAX), lambda n: (0, 0, 0)),               # bias rows
            ],
            out_specs=tuple(pl.BlockSpec((1, ROWS, CMAX), lambda n: (n, 0, 0))
                            for _ in range(L)),
            scratch_shapes=[pltpu.VMEM((ROWS, KMAX * CMAX), jnp.float32)],
        ),
        compiler_params=pltpu.CompilerParams(
            dimension_semantics=("parallel",),
        ),
    )(x_rows, T_all, S_all, B_all)

    # Un-flatten kernel outputs back to NCHW (PyTorch convention).
    feats = []
    final = None
    for l, (hh, ww, cin, ho, wo, cout, k, s, p) in enumerate(dims):
        y = outs[l][:, :ho, :wo * cout].reshape(N, ho, wo, cout)
        y = jnp.transpose(y, (0, 3, 1, 2))                     # NHWC -> NCHW
        if l < L - 1:
            feats.append(y)
        else:
            final = y
    flat = final.reshape(N, -1)                                # nn.Flatten()
    return flat, feats


# ---------------------------------------------------------------------------
# Parameter init (matches nn.Conv2d default init + trunc_normal u buffer)
# ---------------------------------------------------------------------------
def init_params(key, cnum_in, cnum):
    channels = [
        (cnum_in, cnum), (cnum, 2 * cnum), (2 * cnum, 4 * cnum),
        (4 * cnum, 4 * cnum), (4 * cnum, 4 * cnum), (4 * cnum, 1),
    ]
    params = []
    for (ci, co), (k, s, p) in zip(channels, LAYER_CONF):
        key, k1, k2, k3 = jax.random.split(key, 4)
        fan_in = ci * k * k
        bound = 1.0 / float(fan_in) ** 0.5
        w = jax.random.uniform(k1, (co, ci, k, k), jnp.float32, -bound, bound)
        b = jax.random.uniform(k2, (co,), jnp.float32, -bound, bound)
        u = jax.random.truncated_normal(k3, -2.0, 2.0, (co, 1), jnp.float32)
        params.append(dict(w=w, b=b, u=u))
    return params


# ---------------------------------------------------------------------------
# Pure-JAX reference (correctness check only)
# ---------------------------------------------------------------------------
def _ref_forward(x_nchw, params):
    x = x_nchw
    feats = []
    for i, ((k, s, p), prm) in enumerate(zip(LAYER_CONF, params)):
        w_n = _spectral_normalize(prm["w"], prm["u"])
        y = lax.conv_general_dilated(
            x, w_n, (s, s), [(p, p), (p, p)],
            dimension_numbers=("NCHW", "OIHW", "NCHW"),
            precision=lax.Precision.HIGHEST)
        y = y + prm["b"].reshape(1, -1, 1, 1)
        y = jnp.where(y >= 0.0, y, NEG_SLOPE * y)
        if i < len(params) - 1:
            feats.append(y)
        x = y
    return x.reshape(x.shape[0], -1), feats


if __name__ == "__main__":
    key = jax.random.PRNGKey(0)
    kx, kp = jax.random.split(key)
    cnum_in, cnum = 4, 8
    x = jax.random.normal(kx, (2, cnum_in, 16, 16), jnp.float32)
    params = init_params(kp, cnum_in, cnum)

    flat, feats = discriminator3_forward(x, params)
    flat, feats = jax.block_until_ready((flat, feats))

    ref_flat, ref_feats = _ref_forward(x, params)
    assert flat.shape == ref_flat.shape
    assert jnp.allclose(flat, ref_flat, atol=1e-3, rtol=1e-3)
    for got, ref in zip(feats, ref_feats):
        assert got.shape == ref.shape
        assert jnp.allclose(got, ref, atol=1e-3, rtol=1e-3)

    print("KERNEL_OK")
</pallas_src>

<mosaic_0001>
module attributes {stable_mosaic.version = 11 : i64} {
  func.func @kernel(%arg0: i32, %arg1: memref<1x16x128xf32, #tpu.memory_space<vmem>>, %arg2: memref<6x640x128xf32, #tpu.memory_space<vmem>>, %arg3: memref<6x5x16x16xf32, #tpu.memory_space<vmem>>, %arg4: memref<6x1x128xf32, #tpu.memory_space<vmem>>, %arg5: memref<1x16x128xf32, #tpu.memory_space<vmem>>, %arg6: memref<1x16x128xf32, #tpu.memory_space<vmem>>, %arg7: memref<1x16x128xf32, #tpu.memory_space<vmem>>, %arg8: memref<1x16x128xf32, #tpu.memory_space<vmem>>, %arg9: memref<1x16x128xf32, #tpu.memory_space<vmem>>, %arg10: memref<1x16x128xf32, #tpu.memory_space<vmem>>, %arg11: memref<16x640xf32, #tpu.memory_space<vmem>>) attributes {dimension_semantics = [#tpu.dimension_semantics<parallel>], iteration_bounds = array<i64: 2>, scalar_prefetch = 0 : i64, scratch_operands = 1 : i64, tpu.core_type = #tpu.core_type<tc>, window_params = [{transform_indices = @transform_0, window_bounds = array<i64: 1, 16, 128>}, {pipeline_mode = #tpu.pipeline_mode<synchronous>, transform_indices = @transform_1, window_bounds = array<i64: 6, 640, 128>}, {pipeline_mode = #tpu.pipeline_mode<synchronous>, transform_indices = @transform_2, window_bounds = array<i64: 6, 5, 16, 16>}, {pipeline_mode = #tpu.pipeline_mode<synchronous>, transform_indices = @transform_3, window_bounds = array<i64: 6, 1, 128>}, {transform_indices = @transform_4, window_bounds = array<i64: 1, 16, 128>}, {transform_indices = @transform_5, window_bounds = array<i64: 1, 16, 128>}, {transform_indices = @transform_6, window_bounds = array<i64: 1, 16, 128>}, {transform_indices = @transform_7, window_bounds = array<i64: 1, 16, 128>}, {transform_indices = @transform_8, window_bounds = array<i64: 1, 16, 128>}, {transform_indices = @transform_9, window_bounds = array<i64: 1, 16, 128>}]} {
    %c0 = arith.constant 0 : index
    %c0_0 = arith.constant 0 : index
    %c0_1 = arith.constant 0 : index
    %0 = vector.load %arg1[%c0, %c0_0, %c0_1] : memref<1x16x128xf32, #tpu.memory_space<vmem>>, vector<1x16x128xf32>
    %1 = vector.shape_cast %0 : vector<1x16x128xf32> to vector<16x128xf32>
    %c0_2 = arith.constant 0 : index
    %c0_3 = arith.constant 0 : index
    %c0_4 = arith.constant 0 : index
    %c0_5 = arith.constant 0 : index
    %2 = vector.load %arg3[%c0_2, %c0_3, %c0_4, %c0_5] : memref<6x5x16x16xf32, #tpu.memory_space<vmem>>, vector<1x1x16x16xf32>
    %3 = vector.shape_cast %2 : vector<1x1x16x16xf32> to vector<16x16xf32>
    %cst = arith.constant dense<0.000000e+00> : vector<16x128xf32>
    %4 = tpu.matmul %3, %1, %cst {dimension_numbers = #tpu.dot_dimension_numbers<[1], [0], [0], [1], [0, 0, 1, 1], [], []>} : vector<16x16xf32>, vector<16x128xf32>, vector<16x128xf32> -> vector<16x128xf32>
    %c0_6 = arith.constant 0 : index
    %c0_7 = arith.constant 0 : index
    %5 = vector.load %arg11[%c0_6, %c0_7] : memref<16x640xf32, #tpu.memory_space<vmem>>, vector<16x128xf32>
    tpu.vector_store %arg11[%c0_6, %c0_7], %4 {strides = array<i32>} : memref<16x640xf32, #tpu.memory_space<vmem>>, vector<16x128xf32>,
    %c0_8 = arith.constant 0 : index
    %c1 = arith.constant 1 : index
    %c0_9 = arith.constant 0 : index
    %c0_10 = arith.constant 0 : index
    %6 = vector.load %arg3[%c0_8, %c1, %c0_9, %c0_10] : memref<6x5x16x16xf32, #tpu.memory_space<vmem>>, vector<1x1x16x16xf32>
    %7 = vector.shape_cast %6 : vector<1x1x16x16xf32> to vector<16x16xf32>
    %cst_11 = arith.constant dense<0.000000e+00> : vector<16x128xf32>
    %8 = tpu.matmul %7, %1, %cst_11 {dimension_numbers = #tpu.dot_dimension_numbers<[1], [0], [0], [1], [0, 0, 1, 1], [], []>} : vector<16x16xf32>, vector<16x128xf32>, vector<16x128xf32> -> vector<16x128xf32>
    %c0_12 = arith.constant 0 : index
    %c128 = arith.constant 128 : index
    %9 = vector.load %arg11[%c0_12, %c128] : memref<16x640xf32, #tpu.memory_space<vmem>>, vector<16x128xf32>
    tpu.vector_store %arg11[%c0_12, %c128], %8 {strides = array<i32>} : memref<16x640xf32, #tpu.memory_space<vmem>>, vector<16x128xf32>,
    %c0_13 = arith.constant 0 : index
    %c2 = arith.constant 2 : index
    %c0_14 = arith.constant 0 : index
    %c0_15 = arith.constant 0 : index
    %10 = vector.load %arg3[%c0_13, %c2, %c0_14, %c0_15] : memref<6x5x16x16xf32, #tpu.memory_space<vmem>>, vector<1x1x16x16xf32>
    %11 = vector.shape_cast %10 : vector<1x1x16x16xf32> to vector<16x16xf32>
    %cst_16 = arith.constant dense<0.000000e+00> : vector<16x128xf32>
    %12 = tpu.matmul %11, %1, %cst_16 {dimension_numbers = #tpu.dot_dimension_numbers<[1], [0], [0], [1], [0, 0, 1, 1], [], []>} : vector<16x16xf32>, vector<16x128xf32>, vector<16x128xf32> -> vector<16x128xf32>
    %c0_17 = arith.constant 0 : index
    %c256 = arith.constant 256 : index
    %13 = vector.load %arg11[%c0_17, %c256] : memref<16x640xf32, #tpu.memory_space<vmem>>, vector<16x128xf32>
    tpu.vector_store %arg11[%c0_17, %c256], %12 {strides = array<i32>} : memref<16x640xf32, #tpu.memory_space<vmem>>, vector<16x128xf32>,
    %c0_18 = arith.constant 0 : index
    %c3 = arith.constant 3 : index
    %c0_19 = arith.constant 0 : index
    %c0_20 = arith.constant 0 : index
    %14 = vector.load %arg3[%c0_18, %c3, %c0_19, %c0_20] : memref<6x5x16x16xf32, #tpu.memory_space<vmem>>, vector<1x1x16x16xf32>
    %15 = vector.shape_cast %14 : vector<1x1x16x16xf32> to vector<16x16xf32>
    %cst_21 = arith.constant dense<0.000000e+00> : vector<16x128xf32>
    %16 = tpu.matmul %15, %1, %cst_21 {dimension_numbers = #tpu.dot_dimension_numbers<[1], [0], [0], [1], [0, 0, 1, 1], [], []>} : vector<16x16xf32>, vector<16x128xf32>, vector<16x128xf32> -> vector<16x128xf32>
    %c0_22 = arith.constant 0 : index
    %c384 = arith.constant 384 : index
    %17 = vector.load %arg11[%c0_22, %c384] : memref<16x640xf32, #tpu.memory_space<vmem>>, vector<16x128xf32>
    tpu.vector_store %arg11[%c0_22, %c384], %16 {strides = array<i32>} : memref<16x640xf32, #tpu.memory_space<vmem>>, vector<16x128xf32>,
    %c0_23 = arith.constant 0 : index
    %c4 = arith.constant 4 : index
    %c0_24 = arith.constant 0 : index
    %c0_25 = arith.constant 0 : index
    %18 = vector.load %arg3[%c0_23, %c4, %c0_24, %c0_25] : memref<6x5x16x16xf32, #tpu.memory_space<vmem>>, vector<1x1x16x16xf32>
    %19 = vector.shape_cast %18 : vector<1x1x16x16xf32> to vector<16x16xf32>
    %cst_26 = arith.constant dense<0.000000e+00> : vector<16x128xf32>
    %20 = tpu.matmul %19, %1, %cst_26 {dimension_numbers = #tpu.dot_dimension_numbers<[1], [0], [0], [1], [0, 0, 1, 1], [], []>} : vector<16x16xf32>, vector<16x128xf32>, vector<16x128xf32> -> vector<16x128xf32>
    %c0_27 = arith.constant 0 : index
    %c512 = arith.constant 512 : index
    %21 = vector.load %arg11[%c0_27, %c512] : memref<16x640xf32, #tpu.memory_space<vmem>>, vector<16x128xf32>
    tpu.vector_store %arg11[%c0_27, %c512], %20 {strides = array<i32>} : memref<16x640xf32, #tpu.memory_space<vmem>>, vector<16x128xf32>,
    %c0_28 = arith.constant 0 : index
    %c0_29 = arith.constant 0 : index
    %22 = vector.load %arg11[%c0_28, %c0_29] : memref<16x640xf32, #tpu.memory_space<vmem>>, vector<16x640xf32>
    %c0_30 = arith.constant 0 : index
    %c0_31 = arith.constant 0 : index
    %c0_32 = arith.constant 0 : index
    %23 = vector.load %arg2[%c0_30, %c0_31, %c0_32] : memref<6x640x128xf32, #tpu.memory_space<vmem>>, vector<1x640x128xf32>
    %24 = vector.shape_cast %23 : vector<1x640x128xf32> to vector<640x128xf32>
    %cst_33 = arith.constant dense<0.000000e+00> : vector<16x128xf32>
    %25 = tpu.matmul %22, %24, %cst_33 {dimension_numbers = #tpu.dot_dimension_numbers<[1], [0], [0], [1], [0, 0, 1, 1], [], []>} : vector<16x640xf32>, vector<640x128xf32>, vector<16x128xf32> -> vector<16x128xf32>
    %c0_34 = arith.constant 0 : index
    %c0_35 = arith.constant 0 : index
    %c0_36 = arith.constant 0 : index
    %26 = vector.load %arg4[%c0_34, %c0_35, %c0_36] : memref<6x1x128xf32, #tpu.memory_space<vmem>>, vector<1x1x128xf32>
    %27 = vector.shape_cast %26 : vector<1x1x128xf32> to vector<1x128xf32>
    %28 = vector.broadcast %27 : vector<1x128xf32> to vector<16x128xf32>
    %29 = arith.addf %25, %28 : vector<16x128xf32>
    %cst_37 = arith.constant 0.000000e+00 : f32
    %30 = vector.broadcast %cst_37 : f32 to vector<16x128xf32>
    %31 = arith.cmpf oge, %29, %30 : vector<16x128xf32>
    %cst_38 = arith.constant 2.000000e-01 : f32
    %32 = vector.broadcast %cst_38 : f32 to vector<16x128xf32>
    %33 = arith.mulf %32, %29 : vector<16x128xf32>
    %34 = arith.select %31, %29, %33 : vector<16x128xi1>, vector<16x128xf32>
    %c0_39 = arith.constant 0 : index
    %c0_40 = arith.constant 0 : index
    %c0_41 = arith.constant 0 : index
    %35 = vector.load %arg5[%c0_39, %c0_40, %c0_41] : memref<1x16x128xf32, #tpu.memory_space<vmem>>, vector<1x16x128xf32>
    %36 = vector.shape_cast %35 : vector<1x16x128xf32> to vector<16x128xf32>
    %37 = vector.shape_cast %34 : vector<16x128xf32> to vector<1x16x128xf32>
    tpu.vector_store %arg5[%c0_39, %c0_40, %c0_41], %37 {strides = array<i32>} : memref<1x16x128xf32, #tpu.memory_space<vmem>>, vector<1x16x128xf32>,
    %c1_42 = arith.constant 1 : index
    %c0_43 = arith.constant 0 : index
    %c0_44 = arith.constant 0 : index
    %c0_45 = arith.constant 0 : index
    %38 = vector.load %arg3[%c1_42, %c0_43, %c0_44, %c0_45] : memref<6x5x16x16xf32, #tpu.memory_space<vmem>>, vector<1x1x16x16xf32>
    %39 = vector.shape_cast %38 : vector<1x1x16x16xf32> to vector<16x16xf32>
    %cst_46 = arith.constant dense<0.000000e+00> : vector<16x128xf32>
    %40 = tpu.matmul %39, %34, %cst_46 {dimension_numbers = #tpu.dot_dimension_numbers<[1], [0], [0], [1], [0, 0, 1, 1], [], []>} : vector<16x16xf32>, vector<16x128xf32>, vector<16x128xf32> -> vector<16x128xf32>
    %c0_47 = arith.constant 0 : index
    %c0_48 = arith.constant 0 : index
    %41 = vector.load %arg11[%c0_47, %c0_48] : memref<16x640xf32, #tpu.memory_space<vmem>>, vector<16x128xf32>
    tpu.vector_store %arg11[%c0_47, %c0_48], %40 {strides = array<i32>} : memref<16x640xf32, #tpu.memory_space<vmem>>, vector<16x128xf32>,
    %c1_49 = arith.constant 1 : index
    %c1_50 = arith.constant 1 : index
    %c0_51 = arith.constant 0 : index
    %c0_52 = arith.constant 0 : index
    %42 = vector.load %arg3[%c1_49, %c1_50, %c0_51, %c0_52] : memref<6x5x16x16xf32, #tpu.memory_space<vmem>>, vector<1x1x16x16xf32>
    %43 = vector.shape_cast %42 : vector<1x1x16x16xf32> to vector<16x16xf32>
    %cst_53 = arith.constant dense<0.000000e+00> : vector<16x128xf32>
    %44 = tpu.matmul %43, %34, %cst_53 {dimension_numbers = #tpu.dot_dimension_numbers<[1], [0], [0], [1], [0, 0, 1, 1], [], []>} : vector<16x16xf32>, vector<16x128xf32>, vector<16x128xf32> -> vector<16x128xf32>
    %c0_54 = arith.constant 0 : index
    %c128_55 = arith.constant 128 : index
    %45 = vector.load %arg11[%c0_54, %c128_55] : memref<16x640xf32, #tpu.memory_space<vmem>>, vector<16x128xf32>
    tpu.vector_store %arg11[%c0_54, %c128_55], %44 {strides = array<i32>} : memref<16x640xf32, #tpu.memory_space<vmem>>, vector<16x128xf32>,
    %c1_56 = arith.constant 1 : index
    %c2_57 = arith.constant 2 : index
    %c0_58 = arith.constant 0 : index
    %c0_59 = arith.constant 0 : index
    %46 = vector.load %arg3[%c1_56, %c2_57, %c0_58, %c0_59] : memref<6x5x16x16xf32, #tpu.memory_space<vmem>>, vector<1x1x16x16xf32>
    %47 = vector.shape_cast %46 : vector<1x1x16x16xf32> to vector<16x16xf32>
    %cst_60 = arith.constant dense<0.000000e+00> : vector<16x128xf32>
    %48 = tpu.matmul %47, %34, %cst_60 {dimension_numbers = #tpu.dot_dimension_numbers<[1], [0], [0], [1], [0, 0, 1, 1], [], []>} : vector<16x16xf32>, vector<16x128xf32>, vector<16x128xf32> -> vector<16x128xf32>
    %c0_61 = arith.constant 0 : index
    %c256_62 = arith.constant 256 : index
    %49 = vector.load %arg11[%c0_61, %c256_62] : memref<16x640xf32, #tpu.memory_space<vmem>>, vector<16x128xf32>
    tpu.vector_store %arg11[%c0_61, %c256_62], %48 {strides = array<i32>} : memref<16x640xf32, #tpu.memory_space<vmem>>, vector<16x128xf32>,
    %c1_63 = arith.constant 1 : index
    %c3_64 = arith.constant 3 : index
    %c0_65 = arith.constant 0 : index
    %c0_66 = arith.constant 0 : index
    %50 = vector.load %arg3[%c1_63, %c3_64, %c0_65, %c0_66] : memref<6x5x16x16xf32, #tpu.memory_space<vmem>>, vector<1x1x16x16xf32>
    %51 = vector.shape_cast %50 : vector<1x1x16x16xf32> to vector<16x16xf32>
    %cst_67 = arith.constant dense<0.000000e+00> : vector<16x128xf32>
    %52 = tpu.matmul %51, %34, %cst_67 {dimension_numbers = #tpu.dot_dimension_numbers<[1], [0], [0], [1], [0, 0, 1, 1], [], []>} : vector<16x16xf32>, vector<16x128xf32>, vector<16x128xf32> -> vector<16x128xf32>
    %c0_68 = arith.constant 0 : index
    %c384_69 = arith.constant 384 : index
    %53 = vector.load %arg11[%c0_68, %c384_69] : memref<16x640xf32, #tpu.memory_space<vmem>>, vector<16x128xf32>
    tpu.vector_store %arg11[%c0_68, %c384_69], %52 {strides = array<i32>} : memref<16x640xf32, #tpu.memory_space<vmem>>, vector<16x128xf32>,
    %c1_70 = arith.constant 1 : index
    %c4_71 = arith.constant 4 : index
    %c0_72 = arith.constant 0 : index
    %c0_73 = arith.constant 0 : index
    %54 = vector.load %arg3[%c1_70, %c4_71, %c0_72, %c0_73] : memref<6x5x16x16xf32, #tpu.memory_space<vmem>>, vector<1x1x16x16xf32>
    %55 = vector.shape_cast %54 : vector<1x1x16x16xf32> to vector<16x16xf32>
    %cst_74 = arith.constant dense<0.000000e+00> : vector<16x128xf32>
    %56 = tpu.matmul %55, %34, %cst_74 {dimension_numbers = #tpu.dot_dimension_numbers<[1], [0], [0], [1], [0, 0, 1, 1], [], []>} : vector<16x16xf32>, vector<16x128xf32>, vector<16x128xf32> -> vector<16x128xf32>
    %c0_75 = arith.constant 0 : index
    %c512_76 = arith.constant 512 : index
    %57 = vector.load %arg11[%c0_75, %c512_76] : memref<16x640xf32, #tpu.memory_space<vmem>>, vector<16x128xf32>
    tpu.vector_store %arg11[%c0_75, %c512_76], %56 {strides = array<i32>} : memref<16x640xf32, #tpu.memory_space<vmem>>, vector<16x128xf32>,
    %c0_77 = arith.constant 0 : index
    %c0_78 = arith.constant 0 : index
    %58 = vector.load %arg11[%c0_77, %c0_78] : memref<16x640xf32, #tpu.memory_space<vmem>>, vector<16x640xf32>
    %c1_79 = arith.constant 1 : index
    %c0_80 = arith.constant 0 : index
    %c0_81 = arith.constant 0 : index
    %59 = vector.load %arg2[%c1_79, %c0_80, %c0_81] : memref<6x640x128xf32, #tpu.memory_space<vmem>>, vector<1x640x128xf32>
    %60 = vector.shape_cast %59 : vector<1x640x128xf32> to vector<640x128xf32>
    %cst_82 = arith.constant dense<0.000000e+00> : vector<16x128xf32>
    %61 = tpu.matmul %58, %60, %cst_82 {dimension_numbers = #tpu.dot_dimension_numbers<[1], [0], [0], [1], [0, 0, 1, 1], [], []>} : vector<16x640xf32>, vector<640x128xf32>, vector<16x128xf32> -> vector<16x128xf32>
    %c1_83 = arith.constant 1 : index
    %c0_84 = arith.constant 0 : index
    %c0_85 = arith.constant 0 : index
    %62 = vector.load %arg4[%c1_83, %c0_84, %c0_85] : memref<6x1x128xf32, #tpu.memory_space<vmem>>, vector<1x1x128xf32>
    %63 = vector.shape_cast %62 : vector<1x1x128xf32> to vector<1x128xf32>
    %64 = vector.broadcast %63 : vector<1x128xf32> to vector<16x128xf32>
    %65 = arith.addf %61, %64 : vector<16x128xf32>
    %cst_86 = arith.constant 0.000000e+00 : f32
    %66 = vector.broadcast %cst_86 : f32 to vector<16x128xf32>
    %67 = arith.cmpf oge, %65, %66 : vector<16x128xf32>
    %cst_87 = arith.constant 2.000000e-01 : f32
    %68 = vector.broadcast %cst_87 : f32 to vector<16x128xf32>
    %69 = arith.mulf %68, %65 : vector<16x128xf32>
    %70 = arith.select %67, %65, %69 : vector<16x128xi1>, vector<16x128xf32>
    %c0_88 = arith.constant 0 : index
    %c0_89 = arith.constant 0 : index
    %c0_90 = arith.constant 0 : index
    %71 = vector.load %arg6[%c0_88, %c0_89, %c0_90] : memref<1x16x128xf32, #tpu.memory_space<vmem>>, vector<1x16x128xf32>
    %72 = vector.shape_cast %71 : vector<1x16x128xf32> to vector<16x128xf32>
    %73 = vector.shape_cast %70 : vector<16x128xf32> to vector<1x16x128xf32>
    tpu.vector_store %arg6[%c0_88, %c0_89, %c0_90], %73 {strides = array<i32>} : memref<1x16x128xf32, #tpu.memory_space<vmem>>, vector<1x16x128xf32>,
    %c2_91 = arith.constant 2 : index
    %c0_92 = arith.constant 0 : index
    %c0_93 = arith.constant 0 : index
    %c0_94 = arith.constant 0 : index
    %74 = vector.load %arg3[%c2_91, %c0_92, %c0_93, %c0_94] : memref<6x5x16x16xf32, #tpu.memory_space<vmem>>, vector<1x1x16x16xf32>
    %75 = vector.shape_cast %74 : vector<1x1x16x16xf32> to vector<16x16xf32>
    %cst_95 = arith.constant dense<0.000000e+00> : vector<16x128xf32>
    %76 = tpu.matmul %75, %70, %cst_95 {dimension_numbers = #tpu.dot_dimension_numbers<[1], [0], [0], [1], [0, 0, 1, 1], [], []>} : vector<16x16xf32>, vector<16x128xf32>, vector<16x128xf32> -> vector<16x128xf32>
    %c0_96 = arith.constant 0 : index
    %c0_97 = arith.constant 0 : index
    %77 = vector.load %arg11[%c0_96, %c0_97] : memref<16x640xf32, #tpu.memory_space<vmem>>, vector<16x128xf32>
    tpu.vector_store %arg11[%c0_96, %c0_97], %76 {strides = array<i32>} : memref<16x640xf32, #tpu.memory_space<vmem>>, vector<16x128xf32>,
    %c2_98 = arith.constant 2 : index
    %c1_99 = arith.constant 1 : index
    %c0_100 = arith.constant 0 : index
    %c0_101 = arith.constant 0 : index
    %78 = vector.load %arg3[%c2_98, %c1_99, %c0_100, %c0_101] : memref<6x5x16x16xf32, #tpu.memory_space<vmem>>, vector<1x1x16x16xf32>
    %79 = vector.shape_cast %78 : vector<1x1x16x16xf32> to vector<16x16xf32>
    %cst_102 = arith.constant dense<0.000000e+00> : vector<16x128xf32>
    %80 = tpu.matmul %79, %70, %cst_102 {dimension_numbers = #tpu.dot_dimension_numbers<[1], [0], [0], [1], [0, 0, 1, 1], [], []>} : vector<16x16xf32>, vector<16x128xf32>, vector<16x128xf32> -> vector<16x128xf32>
    %c0_103 = arith.constant 0 : index
    %c128_104 = arith.constant 128 : index
    %81 = vector.load %arg11[%c0_103, %c128_104] : memref<16x640xf32, #tpu.memory_space<vmem>>, vector<16x128xf32>
    tpu.vector_store %arg11[%c0_103, %c128_104], %80 {strides = array<i32>} : memref<16x640xf32, #tpu.memory_space<vmem>>, vector<16x128xf32>,
    %c2_105 = arith.constant 2 : index
    %c2_106 = arith.constant 2 : index
    %c0_107 = arith.constant 0 : index
    %c0_108 = arith.constant 0 : index
    %82 = vector.load %arg3[%c2_105, %c2_106, %c0_107, %c0_108] : memref<6x5x16x16xf32, #tpu.memory_space<vmem>>, vector<1x1x16x16xf32>
    %83 = vector.shape_cast %82 : vector<1x1x16x16xf32> to vector<16x16xf32>
    %cst_109 = arith.constant dense<0.000000e+00> : vector<16x128xf32>
    %84 = tpu.matmul %83, %70, %cst_109 {dimension_numbers = #tpu.dot_dimension_numbers<[1], [0], [0], [1], [0, 0, 1, 1], [], []>} : vector<16x16xf32>, vector<16x128xf32>, vector<16x128xf32> -> vector<16x128xf32>
    %c0_110 = arith.constant 0 : index
    %c256_111 = arith.constant 256 : index
    %85 = vector.load %arg11[%c0_110, %c256_111] : memref<16x640xf32, #tpu.memory_space<vmem>>, vector<16x128xf32>
    tpu.vector_store %arg11[%c0_110, %c256_111], %84 {strides = array<i32>} : memref<16x640xf32, #tpu.memory_space<vmem>>, vector<16x128xf32>,
    %c2_112 = arith.constant 2 : index
    %c3_113 = arith.constant 3 : index
    %c0_114 = arith.constant 0 : index
    %c0_115 = arith.constant 0 : index
    %86 = vector.load %arg3[%c2_112, %c3_113, %c0_114, %c0_115] : memref<6x5x16x16xf32, #tpu.memory_space<vmem>>, vector<1x1x16x16xf32>
    %87 = vector.shape_cast %86 : vector<1x1x16x16xf32> to vector<16x16xf32>
    %cst_116 = arith.constant dense<0.000000e+00> : vector<16x128xf32>
    %88 = tpu.matmul %87, %70, %cst_116 {dimension_numbers = #tpu.dot_dimension_numbers<[1], [0], [0], [1], [0, 0, 1, 1], [], []>} : vector<16x16xf32>, vector<16x128xf32>, vector<16x128xf32> -> vector<16x128xf32>
    %c0_117 = arith.constant 0 : index
    %c384_118 = arith.constant 384 : index
    %89 = vector.load %arg11[%c0_117, %c384_118] : memref<16x640xf32, #tpu.memory_space<vmem>>, vector<16x128xf32>
    tpu.vector_store %arg11[%c0_117, %c384_118], %88 {strides = array<i32>} : memref<16x640xf32, #tpu.memory_space<vmem>>, vector<16x128xf32>,
    %c2_119 = arith.constant 2 : index
    %c4_120 = arith.constant 4 : index
    %c0_121 = arith.constant 0 : index
    %c0_122 = arith.constant 0 : index
    %90 = vector.load %arg3[%c2_119, %c4_120, %c0_121, %c0_122] : memref<6x5x16x16xf32, #tpu.memory_space<vmem>>, vector<1x1x16x16xf32>
    %91 = vector.shape_cast %90 : vector<1x1x16x16xf32> to vector<16x16xf32>
    %cst_123 = arith.constant dense<0.000000e+00> : vector<16x128xf32>
    %92 = tpu.matmul %91, %70, %cst_123 {dimension_numbers = #tpu.dot_dimension_numbers<[1], [0], [0], [1], [0, 0, 1, 1], [], []>} : vector<16x16xf32>, vector<16x128xf32>, vector<16x128xf32> -> vector<16x128xf32>
    %c0_124 = arith.constant 0 : index
    %c512_125 = arith.constant 512 : index
    %93 = vector.load %arg11[%c0_124, %c512_125] : memref<16x640xf32, #tpu.memory_space<vmem>>, vector<16x128xf32>
    tpu.vector_store %arg11[%c0_124, %c512_125], %92 {strides = array<i32>} : memref<16x640xf32, #tpu.memory_space<vmem>>, vector<16x128xf32>,
    %c0_126 = arith.constant 0 : index
    %c0_127 = arith.constant 0 : index
    %94 = vector.load %arg11[%c0_126, %c0_127] : memref<16x640xf32, #tpu.memory_space<vmem>>, vector<16x640xf32>
    %c2_128 = arith.constant 2 : index
    %c0_129 = arith.constant 0 : index
    %c0_130 = arith.constant 0 : index
    %95 = vector.load %arg2[%c2_128, %c0_129, %c0_130] : memref<6x640x128xf32, #tpu.memory_space<vmem>>, vector<1x640x128xf32>
    %96 = vector.shape_cast %95 : vector<1x640x128xf32> to vector<640x128xf32>
    %cst_131 = arith.constant dense<0.000000e+00> : vector<16x128xf32>
    %97 = tpu.matmul %94, %96, %cst_131 {dimension_numbers = #tpu.dot_dimension_numbers<[1], [0], [0], [1], [0, 0, 1, 1], [], []>} : vector<16x640xf32>, vector<640x128xf32>, vector<16x128xf32> -> vector<16x128xf32>
    %c2_132 = arith.constant 2 : index
    %c0_133 = arith.constant 0 : index
    %c0_134 = arith.constant 0 : index
    %98 = vector.load %arg4[%c2_132, %c0_133, %c0_134] : memref<6x1x128xf32, #tpu.memory_space<vmem>>, vector<1x1x128xf32>
    %99 = vector.shape_cast %98 : vector<1x1x128xf32> to vector<1x128xf32>
    %100 = vector.broadcast %99 : vector<1x128xf32> to vector<16x128xf32>
    %101 = arith.addf %97, %100 : vector<16x128xf32>
    %cst_135 = arith.constant 0.000000e+00 : f32
    %102 = vector.broadcast %cst_135 : f32 to vector<16x128xf32>
    %103 = arith.cmpf oge, %101, %102 : vector<16x128xf32>
    %cst_136 = arith.constant 2.000000e-01 : f32
    %104 = vector.broadcast %cst_136 : f32 to vector<16x128xf32>
    %105 = arith.mulf %104, %101 : vector<16x128xf32>
    %106 = arith.select %103, %101, %105 : vector<16x128xi1>, vector<16x128xf32>
    %c0_137 = arith.constant 0 : index
    %c0_138 = arith.constant 0 : index
    %c0_139 = arith.constant 0 : index
    %107 = vector.load %arg7[%c0_137, %c0_138, %c0_139] : memref<1x16x128xf32, #tpu.memory_space<vmem>>, vector<1x16x128xf32>
    %108 = vector.shape_cast %107 : vector<1x16x128xf32> to vector<16x128xf32>
    %109 = vector.shape_cast %106 : vector<16x128xf32> to vector<1x16x128xf32>
    tpu.vector_store %arg7[%c0_137, %c0_138, %c0_139], %109 {strides = array<i32>} : memref<1x16x128xf32, #tpu.memory_space<vmem>>, vector<1x16x128xf32>,
    %c3_140 = arith.constant 3 : index
    %c0_141 = arith.constant 0 : index
    %c0_142 = arith.constant 0 : index
    %c0_143 = arith.constant 0 : index
    %110 = vector.load %arg3[%c3_140, %c0_141, %c0_142, %c0_143] : memref<6x5x16x16xf32, #tpu.memory_space<vmem>>, vector<1x1x16x16xf32>
    %111 = vector.shape_cast %110 : vector<1x1x16x16xf32> to vector<16x16xf32>
    %cst_144 = arith.constant dense<0.000000e+00> : vector<16x128xf32>
    %112 = tpu.matmul %111, %106, %cst_144 {dimension_numbers = #tpu.dot_dimension_numbers<[1], [0], [0], [1], [0, 0, 1, 1], [], []>} : vector<16x16xf32>, vector<16x128xf32>, vector<16x128xf32> -> vector<16x128xf32>
    %c0_145 = arith.constant 0 : index
    %c0_146 = arith.constant 0 : index
    %113 = vector.load %arg11[%c0_145, %c0_146] : memref<16x640xf32, #tpu.memory_space<vmem>>, vector<16x128xf32>
    tpu.vector_store %arg11[%c0_145, %c0_146], %112 {strides = array<i32>} : memref<16x640xf32, #tpu.memory_space<vmem>>, vector<16x128xf32>,
    %c3_147 = arith.constant 3 : index
    %c1_148 = arith.constant 1 : index
    %c0_149 = arith.constant 0 : index
    %c0_150 = arith.constant 0 : index
    %114 = vector.load %arg3[%c3_147, %c1_148, %c0_149, %c0_150] : memref<6x5x16x16xf32, #tpu.memory_space<vmem>>, vector<1x1x16x16xf32>
    %115 = vector.shape_cast %114 : vector<1x1x16x16xf32> to vector<16x16xf32>
    %cst_151 = arith.constant dense<0.000000e+00> : vector<16x128xf32>
    %116 = tpu.matmul %115, %106, %cst_151 {dimension_numbers = #tpu.dot_dimension_numbers<[1], [0], [0], [1], [0, 0, 1, 1], [], []>} : vector<16x16xf32>, vector<16x128xf32>, vector<16x128xf32> -> vector<16x128xf32>
    %c0_152 = arith.constant 0 : index
    %c128_153 = arith.constant 128 : index
    %117 = vector.load %arg11[%c0_152, %c128_153] : memref<16x640xf32, #tpu.memory_space<vmem>>, vector<16x128xf32>
    tpu.vector_store %arg11[%c0_152, %c128_153], %116 {strides = array<i32>} : memref<16x640xf32, #tpu.memory_space<vmem>>, vector<16x128xf32>,
    %c3_154 = arith.constant 3 : index
    %c2_155 = arith.constant 2 : index
    %c0_156 = arith.constant 0 : index
    %c0_157 = arith.constant 0 : index
    %118 = vector.load %arg3[%c3_154, %c2_155, %c0_156, %c0_157] : memref<6x5x16x16xf32, #tpu.memory_space<vmem>>, vector<1x1x16x16xf32>
    %119 = vector.shape_cast %118 : vector<1x1x16x16xf32> to vector<16x16xf32>
    %cst_158 = arith.constant dense<0.000000e+00> : vector<16x128xf32>
    %120 = tpu.matmul %119, %106, %cst_158 {dimension_numbers = #tpu.dot_dimension_numbers<[1], [0], [0], [1], [0, 0, 1, 1], [], []>} : vector<16x16xf32>, vector<16x128xf32>, vector<16x128xf32> -> vector<16x128xf32>
    %c0_159 = arith.constant 0 : index
    %c256_160 = arith.constant 256 : index
    %121 = vector.load %arg11[%c0_159, %c256_160] : memref<16x640xf32, #tpu.memory_space<vmem>>, vector<16x128xf32>
    tpu.vector_store %arg11[%c0_159, %c256_160], %120 {strides = array<i32>} : memref<16x640xf32, #tpu.memory_space<vmem>>, vector<16x128xf32>,
    %c3_161 = arith.constant 3 : index
    %c3_162 = arith.constant 3 : index
    %c0_163 = arith.constant 0 : index
    %c0_164 = arith.constant 0 : index
    %122 = vector.load %arg3[%c3_161, %c3_162, %c0_163, %c0_164] : memref<6x5x16x16xf32, #tpu.memory_space<vmem>>, vector<1x1x16x16xf32>
    %123 = vector.shape_cast %122 : vector<1x1x16x16xf32> to vector<16x16xf32>
    %cst_165 = arith.constant dense<0.000000e+00> : vector<16x128xf32>
    %124 = tpu.matmul %123, %106, %cst_165 {dimension_numbers = #tpu.dot_dimension_numbers<[1], [0], [0], [1], [0, 0, 1, 1], [], []>} : vector<16x16xf32>, vector<16x128xf32>, vector<16x128xf32> -> vector<16x128xf32>
    %c0_166 = arith.constant 0 : index
    %c384_167 = arith.constant 384 : index
    %125 = vector.load %arg11[%c0_166, %c384_167] : memref<16x640xf32, #tpu.memory_space<vmem>>, vector<16x128xf32>
    tpu.vector_store %arg11[%c0_166, %c384_167], %124 {strides = array<i32>} : memref<16x640xf32, #tpu.memory_space<vmem>>, vector<16x128xf32>,
    %c3_168 = arith.constant 3 : index
    %c4_169 = arith.constant 4 : index
    %c0_170 = arith.constant 0 : index
    %c0_171 = arith.constant 0 : index
    %126 = vector.load %arg3[%c3_168, %c4_169, %c0_170, %c0_171] : memref<6x5x16x16xf32, #tpu.memory_space<vmem>>, vector<1x1x16x16xf32>
    %127 = vector.shape_cast %126 : vector<1x1x16x16xf32> to vector<16x16xf32>
    %cst_172 = arith.constant dense<0.000000e+00> : vector<16x128xf32>
    %128 = tpu.matmul %127, %106, %cst_172 {dimension_numbers = #tpu.dot_dimension_numbers<[1], [0], [0], [1], [0, 0, 1, 1], [], []>} : vector<16x16xf32>, vector<16x128xf32>, vector<16x128xf32> -> vector<16x128xf32>
    %c0_173 = arith.constant 0 : index
    %c512_174 = arith.constant 512 : index
    %129 = vector.load %arg11[%c0_173, %c512_174] : memref<16x640xf32, #tpu.memory_space<vmem>>, vector<16x128xf32>
    tpu.vector_store %arg11[%c0_173, %c512_174], %128 {strides = array<i32>} : memref<16x640xf32, #tpu.memory_space<vmem>>, vector<16x128xf32>,
    %c0_175 = arith.constant 0 : index
    %c0_176 = arith.constant 0 : index
    %130 = vector.load %arg11[%c0_175, %c0_176] : memref<16x640xf32, #tpu.memory_space<vmem>>, vector<16x640xf32>
    %c3_177 = arith.constant 3 : index
    %c0_178 = arith.constant 0 : index
    %c0_179 = arith.constant 0 : index
    %131 = vector.load %arg2[%c3_177, %c0_178, %c0_179] : memref<6x640x128xf32, #tpu.memory_space<vmem>>, vector<1x640x128xf32>
    %132 = vector.shape_cast %131 : vector<1x640x128xf32> to vector<640x128xf32>
    %cst_180 = arith.constant dense<0.000000e+00> : vector<16x128xf32>
    %133 = tpu.matmul %130, %132, %cst_180 {dimension_numbers = #tpu.dot_dimension_numbers<[1], [0], [0], [1], [0, 0, 1, 1], [], []>} : vector<16x640xf32>, vector<640x128xf32>, vector<16x128xf32> -> vector<16x128xf32>
    %c3_181 = arith.constant 3 : index
    %c0_182 = arith.constant 0 : index
    %c0_183 = arith.constant 0 : index
    %134 = vector.load %arg4[%c3_181, %c0_182, %c0_183] : memref<6x1x128xf32, #tpu.memory_space<vmem>>, vector<1x1x128xf32>
    %135 = vector.shape_cast %134 : vector<1x1x128xf32> to vector<1x128xf32>
    %136 = vector.broadcast %135 : vector<1x128xf32> to vector<16x128xf32>
    %137 = arith.addf %133, %136 : vector<16x128xf32>
    %cst_184 = arith.constant 0.000000e+00 : f32
    %138 = vector.broadcast %cst_184 : f32 to vector<16x128xf32>
    %139 = arith.cmpf oge, %137, %138 : vector<16x128xf32>
    %cst_185 = arith.constant 2.000000e-01 : f32
    %140 = vector.broadcast %cst_185 : f32 to vector<16x128xf32>
    %141 = arith.mulf %140, %137 : vector<16x128xf32>
    %142 = arith.select %139, %137, %141 : vector<16x128xi1>, vector<16x128xf32>
    %c0_186 = arith.constant 0 : index
    %c0_187 = arith.constant 0 : index
    %c0_188 = arith.constant 0 : index
    %143 = vector.load %arg8[%c0_186, %c0_187, %c0_188] : memref<1x16x128xf32, #tpu.memory_space<vmem>>, vector<1x16x128xf32>
    %144 = vector.shape_cast %143 : vector<1x16x128xf32> to vector<16x128xf32>
    %145 = vector.shape_cast %142 : vector<16x128xf32> to vector<1x16x128xf32>
    tpu.vector_store %arg8[%c0_186, %c0_187, %c0_188], %145 {strides = array<i32>} : memref<1x16x128xf32, #tpu.memory_space<vmem>>, vector<1x16x128xf32>,
    %c4_189 = arith.constant 4 : index
    %c0_190 = arith.constant 0 : index
    %c0_191 = arith.constant 0 : index
    %c0_192 = arith.constant 0 : index
    %146 = vector.load %arg3[%c4_189, %c0_190, %c0_191, %c0_192] : memref<6x5x16x16xf32, #tpu.memory_space<vmem>>, vector<1x1x16x16xf32>
    %147 = vector.shape_cast %146 : vector<1x1x16x16xf32> to vector<16x16xf32>
    %cst_193 = arith.constant dense<0.000000e+00> : vector<16x128xf32>
    %148 = tpu.matmul %147, %142, %cst_193 {dimension_numbers = #tpu.dot_dimension_numbers<[1], [0], [0], [1], [0, 0, 1, 1], [], []>} : vector<16x16xf32>, vector<16x128xf32>, vector<16x128xf32> -> vector<16x128xf32>
    %c0_194 = arith.constant 0 : index
    %c0_195 = arith.constant 0 : index
    %149 = vector.load %arg11[%c0_194, %c0_195] : memref<16x640xf32, #tpu.memory_space<vmem>>, vector<16x128xf32>
    tpu.vector_store %arg11[%c0_194, %c0_195], %148 {strides = array<i32>} : memref<16x640xf32, #tpu.memory_space<vmem>>, vector<16x128xf32>,
    %c4_196 = arith.constant 4 : index
    %c1_197 = arith.constant 1 : index
    %c0_198 = arith.constant 0 : index
    %c0_199 = arith.constant 0 : index
    %150 = vector.load %arg3[%c4_196, %c1_197, %c0_198, %c0_199] : memref<6x5x16x16xf32, #tpu.memory_space<vmem>>, vector<1x1x16x16xf32>
    %151 = vector.shape_cast %150 : vector<1x1x16x16xf32> to vector<16x16xf32>
    %cst_200 = arith.constant dense<0.000000e+00> : vector<16x128xf32>
    %152 = tpu.matmul %151, %142, %cst_200 {dimension_numbers = #tpu.dot_dimension_numbers<[1], [0], [0], [1], [0, 0, 1, 1], [], []>} : vector<16x16xf32>, vector<16x128xf32>, vector<16x128xf32> -> vector<16x128xf32>
    %c0_201 = arith.constant 0 : index
    %c128_202 = arith.constant 128 : index
    %153 = vector.load %arg11[%c0_201, %c128_202] : memref<16x640xf32, #tpu.memory_space<vmem>>, vector<16x128xf32>
    tpu.vector_store %arg11[%c0_201, %c128_202], %152 {strides = array<i32>} : memref<16x640xf32, #tpu.memory_space<vmem>>, vector<16x128xf32>,
    %c4_203 = arith.constant 4 : index
    %c2_204 = arith.constant 2 : index
    %c0_205 = arith.constant 0 : index
    %c0_206 = arith.constant 0 : index
    %154 = vector.load %arg3[%c4_203, %c2_204, %c0_205, %c0_206] : memref<6x5x16x16xf32, #tpu.memory_space<vmem>>, vector<1x1x16x16xf32>
    %155 = vector.shape_cast %154 : vector<1x1x16x16xf32> to vector<16x16xf32>
    %cst_207 = arith.constant dense<0.000000e+00> : vector<16x128xf32>
    %156 = tpu.matmul %155, %142, %cst_207 {dimension_numbers = #tpu.dot_dimension_numbers<[1], [0], [0], [1], [0, 0, 1, 1], [], []>} : vector<16x16xf32>, vector<16x128xf32>, vector<16x128xf32> -> vector<16x128xf32>
    %c0_208 = arith.constant 0 : index
    %c256_209 = arith.constant 256 : index
    %157 = vector.load %arg11[%c0_208, %c256_209] : memref<16x640xf32, #tpu.memory_space<vmem>>, vector<16x128xf32>
    tpu.vector_store %arg11[%c0_208, %c256_209], %156 {strides = array<i32>} : memref<16x640xf32, #tpu.memory_space<vmem>>, vector<16x128xf32>,
    %c4_210 = arith.constant 4 : index
    %c3_211 = arith.constant 3 : index
    %c0_212 = arith.constant 0 : index
    %c0_213 = arith.constant 0 : index
    %158 = vector.load %arg3[%c4_210, %c3_211, %c0_212, %c0_213] : memref<6x5x16x16xf32, #tpu.memory_space<vmem>>, vector<1x1x16x16xf32>
    %159 = vector.shape_cast %158 : vector<1x1x16x16xf32> to vector<16x16xf32>
    %cst_214 = arith.constant dense<0.000000e+00> : vector<16x128xf32>
    %160 = tpu.matmul %159, %142, %cst_214 {dimension_numbers = #tpu.dot_dimension_numbers<[1], [0], [0], [1], [0, 0, 1, 1], [], []>} : vector<16x16xf32>, vector<16x128xf32>, vector<16x128xf32> -> vector<16x128xf32>
    %c0_215 = arith.constant 0 : index
    %c384_216 = arith.constant 384 : index
    %161 = vector.load %arg11[%c0_215, %c384_216] : memref<16x640xf32, #tpu.memory_space<vmem>>, vector<16x128xf32>
    tpu.vector_store %arg11[%c0_215, %c384_216], %160 {strides = array<i32>} : memref<16x640xf32, #tpu.memory_space<vmem>>, vector<16x128xf32>,
    %c4_217 = arith.constant 4 : index
    %c4_218 = arith.constant 4 : index
    %c0_219 = arith.constant 0 : index
    %c0_220 = arith.constant 0 : index
    %162 = vector.load %arg3[%c4_217, %c4_218, %c0_219, %c0_220] : memref<6x5x16x16xf32, #tpu.memory_space<vmem>>, vector<1x1x16x16xf32>
    %163 = vector.shape_cast %162 : vector<1x1x16x16xf32> to vector<16x16xf32>
    %cst_221 = arith.constant dense<0.000000e+00> : vector<16x128xf32>
    %164 = tpu.matmul %163, %142, %cst_221 {dimension_numbers = #tpu.dot_dimension_numbers<[1], [0], [0], [1], [0, 0, 1, 1], [], []>} : vector<16x16xf32>, vector<16x128xf32>, vector<16x128xf32> -> vector<16x128xf32>
    %c0_222 = arith.constant 0 : index
    %c512_223 = arith.constant 512 : index
    %165 = vector.load %arg11[%c0_222, %c512_223] : memref<16x640xf32, #tpu.memory_space<vmem>>, vector<16x128xf32>
    tpu.vector_store %arg11[%c0_222, %c512_223], %164 {strides = array<i32>} : memref<16x640xf32, #tpu.memory_space<vmem>>, vector<16x128xf32>,
    %c0_224 = arith.constant 0 : index
    %c0_225 = arith.constant 0 : index
    %166 = vector.load %arg11[%c0_224, %c0_225] : memref<16x640xf32, #tpu.memory_space<vmem>>, vector<16x640xf32>
    %c4_226 = arith.constant 4 : index
    %c0_227 = arith.constant 0 : index
    %c0_228 = arith.constant 0 : index
    %167 = vector.load %arg2[%c4_226, %c0_227, %c0_228] : memref<6x640x128xf32, #tpu.memory_space<vmem>>, vector<1x640x128xf32>
    %168 = vector.shape_cast %167 : vector<1x640x128xf32> to vector<640x128xf32>
    %cst_229 = arith.constant dense<0.000000e+00> : vector<16x128xf32>
    %169 = tpu.matmul %166, %168, %cst_229 {dimension_numbers = #tpu.dot_dimension_numbers<[1], [0], [0], [1], [0, 0, 1, 1], [], []>} : vector<16x640xf32>, vector<640x128xf32>, vector<16x128xf32> -> vector<16x128xf32>
    %c4_230 = arith.constant 4 : index
    %c0_231 = arith.constant 0 : index
    %c0_232 = arith.constant 0 : index
    %170 = vector.load %arg4[%c4_230, %c0_231, %c0_232] : memref<6x1x128xf32, #tpu.memory_space<vmem>>, vector<1x1x128xf32>
    %171 = vector.shape_cast %170 : vector<1x1x128xf32> to vector<1x128xf32>
    %172 = vector.broadcast %171 : vector<1x128xf32> to vector<16x128xf32>
    %173 = arith.addf %169, %172 : vector<16x128xf32>
    %cst_233 = arith.constant 0.000000e+00 : f32
    %174 = vector.broadcast %cst_233 : f32 to vector<16x128xf32>
    %175 = arith.cmpf oge, %173, %174 : vector<16x128xf32>
    %cst_234 = arith.constant 2.000000e-01 : f32
    %176 = vector.broadcast %cst_234 : f32 to vector<16x128xf32>
    %177 = arith.mulf %176, %173 : vector<16x128xf32>
    %178 = arith.select %175, %173, %177 : vector<16x128xi1>, vector<16x128xf32>
    %c0_235 = arith.constant 0 : index
    %c0_236 = arith.constant 0 : index
    %c0_237 = arith.constant 0 : index
    %179 = vector.load %arg9[%c0_235, %c0_236, %c0_237] : memref<1x16x128xf32, #tpu.memory_space<vmem>>, vector<1x16x128xf32>
    %180 = vector.shape_cast %179 : vector<1x16x128xf32> to vector<16x128xf32>
    %181 = vector.shape_cast %178 : vector<16x128xf32> to vector<1x16x128xf32>
    tpu.vector_store %arg9[%c0_235, %c0_236, %c0_237], %181 {strides = array<i32>} : memref<1x16x128xf32, #tpu.memory_space<vmem>>, vector<1x16x128xf32>,
    %c5 = arith.constant 5 : index
    %c0_238 = arith.constant 0 : index
    %c0_239 = arith.constant 0 : index
    %c0_240 = arith.constant 0 : index
    %182 = vector.load %arg3[%c5, %c0_238, %c0_239, %c0_240] : memref<6x5x16x16xf32, #tpu.memory_space<vmem>>, vector<1x1x16x16xf32>
    %183 = vector.shape_cast %182 : vector<1x1x16x16xf32> to vector<16x16xf32>
    %cst_241 = arith.constant dense<0.000000e+00> : vector<16x128xf32>
    %184 = tpu.matmul %183, %178, %cst_241 {dimension_numbers = #tpu.dot_dimension_numbers<[1], [0], [0], [1], [0, 0, 1, 1], [], []>} : vector<16x16xf32>, vector<16x128xf32>, vector<16x128xf32> -> vector<16x128xf32>
    %c0_242 = arith.constant 0 : index
    %c0_243 = arith.constant 0 : index
    %185 = vector.load %arg11[%c0_242, %c0_243] : memref<16x640xf32, #tpu.memory_space<vmem>>, vector<16x128xf32>
    tpu.vector_store %arg11[%c0_242, %c0_243], %184 {strides = array<i32>} : memref<16x640xf32, #tpu.memory_space<vmem>>, vector<16x128xf32>,
    %c5_244 = arith.constant 5 : index
    %c1_245 = arith.constant 1 : index
    %c0_246 = arith.constant 0 : index
    %c0_247 = arith.constant 0 : index
    %186 = vector.load %arg3[%c5_244, %c1_245, %c0_246, %c0_247] : memref<6x5x16x16xf32, #tpu.memory_space<vmem>>, vector<1x1x16x16xf32>
    %187 = vector.shape_cast %186 : vector<1x1x16x16xf32> to vector<16x16xf32>
    %cst_248 = arith.constant dense<0.000000e+00> : vector<16x128xf32>
    %188 = tpu.matmul %187, %178, %cst_248 {dimension_numbers = #tpu.dot_dimension_numbers<[1], [0], [0], [1], [0, 0, 1, 1], [], []>} : vector<16x16xf32>, vector<16x128xf32>, vector<16x128xf32> -> vector<16x128xf32>
    %c0_249 = arith.constant 0 : index
    %c128_250 = arith.constant 128 : index
    %189 = vector.load %arg11[%c0_249, %c128_250] : memref<16x640xf32, #tpu.memory_space<vmem>>, vector<16x128xf32>
    tpu.vector_store %arg11[%c0_249, %c128_250], %188 {strides = array<i32>} : memref<16x640xf32, #tpu.memory_space<vmem>>, vector<16x128xf32>,
    %c5_251 = arith.constant 5 : index
    %c2_252 = arith.constant 2 : index
    %c0_253 = arith.constant 0 : index
    %c0_254 = arith.constant 0 : index
    %190 = vector.load %arg3[%c5_251, %c2_252, %c0_253, %c0_254] : memref<6x5x16x16xf32, #tpu.memory_space<vmem>>, vector<1x1x16x16xf32>
    %191 = vector.shape_cast %190 : vector<1x1x16x16xf32> to vector<16x16xf32>
    %cst_255 = arith.constant dense<0.000000e+00> : vector<16x128xf32>
    %192 = tpu.matmul %191, %178, %cst_255 {dimension_numbers = #tpu.dot_dimension_numbers<[1], [0], [0], [1], [0, 0, 1, 1], [], []>} : vector<16x16xf32>, vector<16x128xf32>, vector<16x128xf32> -> vector<16x128xf32>
    %c0_256 = arith.constant 0 : index
    %c256_257 = arith.constant 256 : index
    %193 = vector.load %arg11[%c0_256, %c256_257] : memref<16x640xf32, #tpu.memory_space<vmem>>, vector<16x128xf32>
    tpu.vector_store %arg11[%c0_256, %c256_257], %192 {strides = array<i32>} : memref<16x640xf32, #tpu.memory_space<vmem>>, vector<16x128xf32>,
    %c5_258 = arith.constant 5 : index
    %c3_259 = arith.constant 3 : index
    %c0_260 = arith.constant 0 : index
    %c0_261 = arith.constant 0 : index
    %194 = vector.load %arg3[%c5_258, %c3_259, %c0_260, %c0_261] : memref<6x5x16x16xf32, #tpu.memory_space<vmem>>, vector<1x1x16x16xf32>
    %195 = vector.shape_cast %194 : vector<1x1x16x16xf32> to vector<16x16xf32>
    %cst_262 = arith.constant dense<0.000000e+00> : vector<16x128xf32>
    %196 = tpu.matmul %195, %178, %cst_262 {dimension_numbers = #tpu.dot_dimension_numbers<[1], [0], [0], [1], [0, 0, 1, 1], [], []>} : vector<16x16xf32>, vector<16x128xf32>, vector<16x128xf32> -> vector<16x128xf32>
    %c0_263 = arith.constant 0 : index
    %c384_264 = arith.constant 384 : index
    %197 = vector.load %arg11[%c0_263, %c384_264] : memref<16x640xf32, #tpu.memory_space<vmem>>, vector<16x128xf32>
    tpu.vector_store %arg11[%c0_263, %c384_264], %196 {strides = array<i32>} : memref<16x640xf32, #tpu.memory_space<vmem>>, vector<16x128xf32>,
    %c5_265 = arith.constant 5 : index
    %c4_266 = arith.constant 4 : index
    %c0_267 = arith.constant 0 : index
    %c0_268 = arith.constant 0 : index
    %198 = vector.load %arg3[%c5_265, %c4_266, %c0_267, %c0_268] : memref<6x5x16x16xf32, #tpu.memory_space<vmem>>, vector<1x1x16x16xf32>
    %199 = vector.shape_cast %198 : vector<1x1x16x16xf32> to vector<16x16xf32>
    %cst_269 = arith.constant dense<0.000000e+00> : vector<16x128xf32>
    %200 = tpu.matmul %199, %178, %cst_269 {dimension_numbers = #tpu.dot_dimension_numbers<[1], [0], [0], [1], [0, 0, 1, 1], [], []>} : vector<16x16xf32>, vector<16x128xf32>, vector<16x128xf32> -> vector<16x128xf32>
    %c0_270 = arith.constant 0 : index
    %c512_271 = arith.constant 512 : index
    %201 = vector.load %arg11[%c0_270, %c512_271] : memref<16x640xf32, #tpu.memory_space<vmem>>, vector<16x128xf32>
    tpu.vector_store %arg11[%c0_270, %c512_271], %200 {strides = array<i32>} : memref<16x640xf32, #tpu.memory_space<vmem>>, vector<16x128xf32>,
    %c0_272 = arith.constant 0 : index
    %c0_273 = arith.constant 0 : index
    %202 = vector.load %arg11[%c0_272, %c0_273] : memref<16x640xf32, #tpu.memory_space<vmem>>, vector<16x640xf32>
    %c5_274 = arith.constant 5 : index
    %c0_275 = arith.constant 0 : index
    %c0_276 = arith.constant 0 : index
    %203 = vector.load %arg2[%c5_274, %c0_275, %c0_276] : memref<6x640x128xf32, #tpu.memory_space<vmem>>, vector<1x640x128xf32>
    %204 = vector.shape_cast %203 : vector<1x640x128xf32> to vector<640x128xf32>
    %cst_277 = arith.constant dense<0.000000e+00> : vector<16x128xf32>
    %205 = tpu.matmul %202, %204, %cst_277 {dimension_numbers = #tpu.dot_dimension_numbers<[1], [0], [0], [1], [0, 0, 1, 1], [], []>} : vector<16x640xf32>, vector<640x128xf32>, vector<16x128xf32> -> vector<16x128xf32>
    %c5_278 = arith.constant 5 : index
    %c0_279 = arith.constant 0 : index
    %c0_280 = arith.constant 0 : index
    %206 = vector.load %arg4[%c5_278, %c0_279, %c0_280] : memref<6x1x128xf32, #tpu.memory_space<vmem>>, vector<1x1x128xf32>
    %207 = vector.shape_cast %206 : vector<1x1x128xf32> to vector<1x128xf32>
    %208 = vector.broadcast %207 : vector<1x128xf32> to vector<16x128xf32>
    %209 = arith.addf %205, %208 : vector<16x128xf32>
    %cst_281 = arith.constant 0.000000e+00 : f32
    %210 = vector.broadcast %cst_281 : f32 to vector<16x128xf32>
    %211 = arith.cmpf oge, %209, %210 : vector<16x128xf32>
    %cst_282 = arith.constant 2.000000e-01 : f32
    %212 = vector.broadcast %cst_282 : f32 to vector<16x128xf32>
    %213 = arith.mulf %212, %209 : vector<16x128xf32>
    %214 = arith.select %211, %209, %213 : vector<16x128xi1>, vector<16x128xf32>
    %c0_283 = arith.constant 0 : index
    %c0_284 = arith.constant 0 : index
    %c0_285 = arith.constant 0 : index
    %215 = vector.load %arg10[%c0_283, %c0_284, %c0_285] : memref<1x16x128xf32, #tpu.memory_space<vmem>>, vector<1x16x128xf32>
    %216 = vector.shape_cast %215 : vector<1x16x128xf32> to vector<16x128xf32>
    %217 = vector.shape_cast %214 : vector<16x128xf32> to vector<1x16x128xf32>
    tpu.vector_store %arg10[%c0_283, %c0_284, %c0_285], %217 {strides = array<i32>} : memref<1x16x128xf32, #tpu.memory_space<vmem>>, vector<1x16x128xf32>,
    return
  }
  func.func @transform_0(%arg0: i32) -> (i32, i32, i32) {
    %c0_i32 = arith.constant 0 : i32
    %c0_i32_0 = arith.constant 0 : i32
    %c0_i32_1 = arith.constant 0 : i32
    return %arg0, %c0_i32, %c0_i32_0 : i32, i32, i32
  }
  func.func @transform_1(%arg0: i32) -> (i32, i32, i32) {
    %c0_i32 = arith.constant 0 : i32
    %c0_i32_0 = arith.constant 0 : i32
    %c0_i32_1 = arith.constant 0 : i32
    %c0_i32_2 = arith.constant 0 : i32
    return %c0_i32, %c0_i32_0, %c0_i32_1 : i32, i32, i32
  }
  func.func @transform_2(%arg0: i32) -> (i32, i32, i32, i32) {
    %c0_i32 = arith.constant 0 : i32
    %c0_i32_0 = arith.constant 0 : i32
    %c0_i32_1 = arith.constant 0 : i32
    %c0_i32_2 = arith.constant 0 : i32
    %c0_i32_3 = arith.constant 0 : i32
    return %c0_i32, %c0_i32_0, %c0_i32_1, %c0_i32_2 : i32, i32, i32, i32
  }
  func.func @transform_3(%arg0: i32) -> (i32, i32, i32) {
    %c0_i32 = arith.constant 0 : i32
    %c0_i32_0 = arith.constant 0 : i32
    %c0_i32_1 = arith.constant 0 : i32
    %c0_i32_2 = arith.constant 0 : i32
    return %c0_i32, %c0_i32_0, %c0_i32_1 : i32, i32, i32
  }
  func.func @transform_4(%arg0: i32) -> (i32, i32, i32) {
    %c0_i32 = arith.constant 0 : i32
    %c0_i32_0 = arith.constant 0 : i32
    %c0_i32_1 = arith.constant 0 : i32
    return %arg0, %c0_i32, %c0_i32_0 : i32, i32, i32
  }
  func.func @transform_5(%arg0: i32) -> (i32, i32, i32) {
    %c0_i32 = arith.constant 0 : i32
    %c0_i32_0 = arith.constant 0 : i32
    %c0_i32_1 = arith.constant 0 : i32
    return %arg0, %c0_i32, %c0_i32_0 : i32, i32, i32
  }
  func.func @transform_6(%arg0: i32) -> (i32, i32, i32) {
    %c0_i32 = arith.constant 0 : i32
    %c0_i32_0 = arith.constant 0 : i32
    %c0_i32_1 = arith.constant 0 : i32
    return %arg0, %c0_i32, %c0_i32_0 : i32, i32, i32
  }
  func.func @transform_7(%arg0: i32) -> (i32, i32, i32) {
    %c0_i32 = arith.constant 0 : i32
    %c0_i32_0 = arith.constant 0 : i32
    %c0_i32_1 = arith.constant 0 : i32
    return %arg0, %c0_i32, %c0_i32_0 : i32, i32, i32
  }
  func.func @transform_8(%arg0: i32) -> (i32, i32, i32) {
    %c0_i32 = arith.constant 0 : i32
    %c0_i32_0 = arith.constant 0 : i32
    %c0_i32_1 = arith.constant 0 : i32
    return %arg0, %c0_i32, %c0_i32_0 : i32, i32, i32
  }
  func.func @transform_9(%arg0: i32) -> (i32, i32, i32) {
    %c0_i32 = arith.constant 0 : i32
    %c0_i32_0 = arith.constant 0 : i32
    %c0_i32_1 = arith.constant 0 : i32
    return %arg0, %c0_i32, %c0_i32_0 : i32, i32, i32
  }
}

</mosaic_0001>

<llo_original>
// kernel: tile.18
$region0: #{tile.18}
  #allocation0 [shape = 's32[1]{0}', space=sflag, size = 0x4, scoped, tag = 'scoped memory for tile.18']
  %s0 = inlined_call_operand.vmem [shape: f32[8], index: 0, kind: input, shape index: {}]
  %s1 = inlined_call_operand.vmem [shape: f32[8,8], index: 1, kind: output, shape index: {}]
  // Predicated region
  $region2: #{tile.18} parent=0 // pred_check
    _
  $region3: #{tile.18} parent=0 // pred_check_branch
    %3 = sbr.rel (0) target = $region5
  $region4: #{tile.18} parent=0 // pred_region
    _
  $region5: #{tile.18} parent=0 // pred_fallthru
    _
  %v4 = vld [vmem:[%s0] ss:$0 sm:$0xff]
  %5 = vst [vmem:[%s1] sm:$0xff] %v4

// kernel: tile.19
$region0: #{tile.19}
  %s0 = inlined_call_operand.vmem [shape: f32[8,8], index: 0, kind: input, shape index: {}]
  %s1 = inlined_call_operand.vmem [shape: f32[64], index: 1, kind: output, shape index: {}]
  $region1: #{tile.19} parent=0
    #allocation0 [shape = 'u8[4096]{0}', space=vmem, size = 0x1000, scoped, tag = 'scoped mem for output reshape']
    %v2 = vld [vmem:[%s0] sm:$0x1]
    %vm3 = vcmask 64512
    %4 = vst.msk [vmem:[#allocation0] sm:$0x1] %vm3, %v2
    %s5 = scalar_lea.vmem %s0, 7
    %v6 = vld [vmem:[%s5] sm:$0x1]
    %7 = vrot.lane.b32.xlu0 %v6, 56
    %v8 = vpop.permute.xlu0 %7
    %vm9 = vcmask 523712
    %10 = vst.msk [vmem:[#allocation0] sm:$0x1] %vm9, %v8
    %s11 = scalar_lea.vmem %s0, 6
    %v12 = vld [vmem:[%s11] sm:$0x1]
    %13 = vrot.lane.b32.xlu0 %v12, 48
    %v14 = vpop.permute.xlu0 %13
    %vm15 = vcmask 458112
    %16 = vst.msk [vmem:[#allocation0] sm:$0x1] %vm15, %v14
    %s17 = scalar_lea.vmem %s0, 5
    %v18 = vld [vmem:[%s17] sm:$0x1]
    %19 = vrot.lane.b32.xlu0 %v18, 40
    %v20 = vpop.permute.xlu0 %19
    %vm21 = vcmask 392512
    %22 = vst.msk [vmem:[#allocation0] sm:$0x1] %vm21, %v20
    %s23 = scalar_lea.vmem %s0, 4
    %v24 = vld [vmem:[%s23] sm:$0x1]
    %25 = vrot.lane.b32.xlu0 %v24, 32
    %v26 = vpop.permute.xlu0 %25
    %vm27 = vcmask 326912
    %28 = vst.msk [vmem:[#allocation0] sm:$0x1] %vm27, %v26
    %s29 = scalar_lea.vmem %s0, 3
    %v30 = vld [vmem:[%s29] sm:$0x1]
    %31 = vrot.lane.b32.xlu0 %v30, 24
    %v32 = vpop.permute.xlu0 %31
    %vm33 = vcmask 261312
    %34 = vst.msk [vmem:[#allocation0] sm:$0x1] %vm33, %v32
    %s35 = scalar_lea.vmem %s0, 2
    %v36 = vld [vmem:[%s35] sm:$0x1]
    %37 = vrot.lane.b32.xlu0 %v36, 16
    %v38 = vpop.permute.xlu0 %37
    %vm39 = vcmask 195712
    %40 = vst.msk [vmem:[#allocation0] sm:$0x1] %vm39, %v38
    %s41 = scalar_lea.vmem %s0, 1
    %v42 = vld [vmem:[%s41] sm:$0x1]
    %43 = vrot.lane.b32.xlu0 %v42, 8
    %v44 = vpop.permute.xlu0 %43
    %vm45 = vcmask 130112
    %46 = vst.msk [vmem:[#allocation0] sm:$0x1] %vm45, %v44
    %s48 = ssub.s32 2, 1
    %v49 = vld [vmem:[#allocation0] sm:%s48]
    %s51 = ssub.s32 2, 1
    %52 = vst [vmem:[%s1] sm:%s51] %v49

// kernel: tile.23
$region0: #{tile.23}
  #allocation0 [shape = 's32[1]{0}', space=sflag, size = 0x4, scoped, tag = 'scoped memory for tile.23']
  %s0 = inlined_call_operand.vmem [shape: f32[16], index: 0, kind: input, shape index: {}]
  %s1 = inlined_call_operand.vmem [shape: f32[4,16], index: 1, kind: output, shape index: {}]
  // Predicated region
  $region2: #{tile.23} parent=0 // pred_check
    _
  $region3: #{tile.23} parent=0 // pred_check_branch
    %3 = sbr.rel (0) target = $region5
  $region4: #{tile.23} parent=0 // pred_region
    _
  $region5: #{tile.23} parent=0 // pred_fallthru
    _
  %v4 = vld [vmem:[%s0] ss:$0 sm:$0xff]
  %5 = vst [vmem:[%s1] sm:$0xf] %v4

// kernel: tile.24
$region0: #{tile.24}
  %s0 = inlined_call_operand.vmem [shape: f32[4,16], index: 0, kind: input, shape index: {}]
  %s1 = inlined_call_operand.vmem [shape: f32[64], index: 1, kind: output, shape index: {}]
  $region1: #{tile.24} parent=0
    #allocation0 [shape = 'u8[4096]{0}', space=vmem, size = 0x1000, scoped, tag = 'scoped mem for output reshape']
    #allocation1 [shape = 'u8[4096]{0}', space=vmem, size = 0x1000, scoped, tag = 'scoped mem for input reshape']
    %s3 = ssub.s32 16, 1
    %v4 = vld [vmem:[%s0] sm:%s3]
    %5 = vst [vmem:[#allocation1] sm:%s3] %v4
    %v6 = vld [vmem:[#allocation1] sm:$0x1]
    %vm7 = vcmask 130048
    %8 = vst.msk [vmem:[#allocation0] sm:$0x1] %vm7, %v6
    %s9 = scalar_lea.vmem [#allocation1], 3
    %v10 = vld [vmem:[%s9] sm:$0x1]
    %11 = vrot.lane.b32.xlu0 %v10, 48
    %v12 = vpop.permute.xlu0 %11
    %vm13 = vcmask 523648
    %14 = vst.msk [vmem:[#allocation0] sm:$0x1] %vm13, %v12
    %s15 = scalar_lea.vmem [#allocation1], 2
    %v16 = vld [vmem:[%s15] sm:$0x1]
    %17 = vrot.lane.b32.xlu0 %v16, 32
    %v18 = vpop.permute.xlu0 %17
    %vm19 = vcmask 392448
    %20 = vst.msk [vmem:[#allocation0] sm:$0x1] %vm19, %v18
    %s21 = scalar_lea.vmem [#allocation1], 1
    %v22 = vld [vmem:[%s21] sm:$0x1]
    %23 = vrot.lane.b32.xlu0 %v22, 16
    %v24 = vpop.permute.xlu0 %23
    %vm25 = vcmask 261248
    %26 = vst.msk [vmem:[#allocation0] sm:$0x1] %vm25, %v24
    %s28 = ssub.s32 2, 1
    %v29 = vld [vmem:[#allocation0] sm:%s28]
    %s31 = ssub.s32 2, 1
    %32 = vst [vmem:[%s1] sm:%s31] %v29

// kernel: tile.28
$region0: #{tile.28}
  #allocation0 [shape = 's32[1]{0}', space=sflag, size = 0x4, scoped, tag = 'scoped memory for tile.28']
  %s0 = inlined_call_operand.vmem [shape: f32[32], index: 0, kind: input, shape index: {}]
  %s1 = inlined_call_operand.vmem [shape: f32[2,32], index: 1, kind: output, shape index: {}]
  // Predicated region
  $region2: #{tile.28} parent=0 // pred_check
    _
  $region3: #{tile.28} parent=0 // pred_check_branch
    %3 = sbr.rel (0) target = $region5
  $region4: #{tile.28} parent=0 // pred_region
    _
  $region5: #{tile.28} parent=0 // pred_fallthru
    _
  %v4 = vld [vmem:[%s0] ss:$0 sm:$0xff]
  %5 = vst [vmem:[%s1] sm:$0x3] %v4

// kernel: tile.29
$region0: #{tile.29}
  %s0 = inlined_call_operand.vmem [shape: f32[2,32], index: 0, kind: input, shape index: {}]
  %s1 = inlined_call_operand.vmem [shape: f32[64], index: 1, kind: output, shape index: {}]
  $region1: #{tile.29} parent=0
    #allocation0 [shape = 'u8[4096]{0}', space=vmem, size = 0x1000, scoped, tag = 'scoped mem for output reshape']
    #allocation1 [shape = 'u8[4096]{0}', space=vmem, size = 0x1000, scoped, tag = 'scoped mem for input reshape']
    %s3 = ssub.s32 4, 1
    %v4 = vld [vmem:[%s0] sm:%s3]
    %5 = vst [vmem:[#allocation1] sm:%s3] %v4
    %v6 = vld [vmem:[#allocation1] sm:$0x1]
    %vm7 = vcmask 261120
    %8 = vst.msk [vmem:[#allocation0] sm:$0x1] %vm7, %v6
    %s9 = scalar_lea.vmem [#allocation1], 1
    %v10 = vld [vmem:[%s9] sm:$0x1]
    %11 = vrot.lane.b32.xlu0 %v10, 32
    %v12 = vpop.permute.xlu0 %11
    %vm13 = vcmask 523520
    %14 = vst.msk [vmem:[#allocation0] sm:$0x1] %vm13, %v12
    %s16 = ssub.s32 2, 1
    %v17 = vld [vmem:[#allocation0] sm:%s16]
    %s19 = ssub.s32 2, 1
    %20 = vst [vmem:[%s1] sm:%s19] %v17

// kernel: discriminator3_forward.1
$region0: #{discriminator3_forward.1}
  #allocation0 [shape = 'u32[]', space=smem, size = 0x4, offset = 0x4, fixed_abs, tag = 'smem constant byte address 0x4 - core index']
  #allocation1 [shape = 'u32[72,128]{1,0:T(1,128)}', space=vmem, size = 0x9000, scoped, tag = 'internal scratch']
  #allocation2 [shape = 'f32[16,640]{1,0:T(8,128)}', space=vmem, size = 0xa000, scoped, tag = 'scratch operand']
  %s0 = inlined_call_operand.vmem [shape: f32[2,16,128], index: 0, kind: input, shape index: {}]
  %s1 = inlined_call_operand.vmem [shape: f32[6,640,128], index: 1, kind: input, shape index: {}]
  %s2 = inlined_call_operand.vmem [shape: f32[6,5,16,16], index: 2, kind: input, shape index: {}]
  %s3 = inlined_call_operand.vmem [shape: f32[6,1,128], index: 3, kind: input, shape index: {}]
  %s4 = inlined_call_operand.vmem [shape: f32[2,16,128], index: 4, kind: output, shape index: {0}]
  %s5 = inlined_call_operand.vmem [shape: f32[2,16,128], index: 5, kind: output, shape index: {1}]
  %s6 = inlined_call_operand.vmem [shape: f32[2,16,128], index: 6, kind: output, shape index: {2}]
  %s7 = inlined_call_operand.vmem [shape: f32[2,16,128], index: 7, kind: output, shape index: {3}]
  %s8 = inlined_call_operand.vmem [shape: f32[2,16,128], index: 8, kind: output, shape index: {4}]
  %s9 = inlined_call_operand.vmem [shape: f32[2,16,128], index: 9, kind: output, shape index: {5}]
  %10 = xla_tuple %s4, %s5, %s6, %s7, %s8, %s9
  %s11 = sld [smem:[#allocation0]]
  $region89: #{discriminator3_forward.1} parent=0
    _
  %s13 = ssub.s32 1, %s11
  %s14 = scalar_select 0, %s13, %s11
  loop: start=0, step=1, limit=4
  $region2: #{discriminator3_forward.1} parent=0 // loop_pre_header
    _
  $region3: #{discriminator3_forward.1} parent=0 // loop_header
    %s16 = sphi 0, %s20
    %p17 = scmp.ge.s32.totalorder %s16, 4
    %s26 = sphi 0, %s28
    %s29 = sphi 0, %s26
    %s30 = sphi 0, %s29
    %s46 = sphi 0, %s30
    %s50 = sphi 0, %s50
    %s52 = sphi 0, %s50
    %s53 = sphi 0, %s52
    %s67 = sphi 0, %s53
    %s71 = sphi 0, %s71
    %s73 = sphi 0, %s71
    %s74 = sphi 0, %s73
    %s88 = sphi 0, %s74
    %s92 = sphi 0, %s92
    %s94 = sphi 0, %s92
    %s95 = sphi 0, %s94
    %s109 = sphi 0, %s95
    %s115 = sphi 0, %s117
    %s118 = sphi 0, %s115
    %s119 = sphi 0, %s118
    %s135 = sphi 0, %s119
    %s141 = sphi 0, %s143
    %s144 = sphi 0, %s141
    %s145 = sphi 0, %s144
    %s161 = sphi 0, %s145
    %s167 = sphi 0, %s169
    %s170 = sphi 0, %s167
    %s171 = sphi 0, %s170
    %s187 = sphi 0, %s171
    %s193 = sphi 0, %s195
    %s196 = sphi 0, %s193
    %s197 = sphi 0, %s196
    %s213 = sphi 0, %s197
    %s219 = sphi 0, %s221
    %s222 = sphi 0, %s219
    %s223 = sphi 0, %s222
    %s239 = sphi 0, %s223
    %s245 = sphi 0, %s247
    %s248 = sphi 0, %s245
    %s249 = sphi 0, %s248
    %s265 = sphi 0, %s249
  $region4: #{discriminator3_forward.1} parent=0 // loop_header_branch
    %19 = sbr.rel (%p17) target = $region8
  $region5: #{discriminator3_forward.1} parent=0 // loop_body
    %s21 = ssub.s32 %s16, 1
    %s22 = ssub.s32 %s16, 2
    %s23 = sadd.s32 %s16, 1
    %s24 = ssub.s32 %s16, %s23
    %p25 = scmp.eq.s32.totalorder %s24, 0
    %s27 = sadd.s32 %s26, 1
    %s28 = scalar_select %p25, %s26, %s27
    %p31 = pneg %p25
    %p32 = scmp.eq.s32.totalorder %s16, 1
    %p33 = por %p31, %p32
    %p34 = scmp.ne.s32.totalorder %s26, %s29
    %p35 = scmp.eq.s32.totalorder %s16, 0
    %p36 = por %p34, %p35
    %p37 = scmp.ne.s32.totalorder %s26, %s29
    %p38 = scmp.eq.s32.totalorder %s21, 1
    %p39 = por %p37, %p38
    %p40 = scmp.ne.s32.totalorder %s29, %s30
    %p41 = scmp.eq.s32.totalorder %s21, 0
    %p42 = por %p40, %p41
    %p43 = scmp.ne.s32.totalorder %s29, %s30
    %p44 = scmp.eq.s32.totalorder %s22, 1
    %p45 = por %p43, %p44
    %p47 = scmp.ne.s32.totalorder %s30, %s46
    %p48 = scmp.eq.s32.totalorder %s22, 0
    %p49 = por %p47, %p48
    %s51 = sadd.s32 %s50, 1
    %p54 = scmp.eq.s32.totalorder %s16, 1
    %p55 = scmp.ne.s32.totalorder %s50, %s52
    %p56 = scmp.eq.s32.totalorder %s16, 0
    %p57 = por %p55, %p56
    %p58 = scmp.ne.s32.totalorder %s50, %s52
    %p59 = scmp.eq.s32.totalorder %s21, 1
    %p60 = por %p58, %p59
    %p61 = scmp.ne.s32.totalorder %s52, %s53
    %p62 = scmp.eq.s32.totalorder %s21, 0
    %p63 = por %p61, %p62
    %p64 = scmp.ne.s32.totalorder %s52, %s53
    %p65 = scmp.eq.s32.totalorder %s22, 1
    %p66 = por %p64, %p65
    %p68 = scmp.ne.s32.totalorder %s53, %s67
    %p69 = scmp.eq.s32.totalorder %s22, 0
    %p70 = por %p68, %p69
    %s72 = sadd.s32 %s71, 1
    %p75 = scmp.eq.s32.totalorder %s16, 1
    %p76 = scmp.ne.s32.totalorder %s71, %s73
    %p77 = scmp.eq.s32.totalorder %s16, 0
    %p78 = por %p76, %p77
    %p79 = scmp.ne.s32.totalorder %s71, %s73
    %p80 = scmp.eq.s32.totalorder %s21, 1
    %p81 = por %p79, %p80
    %p82 = scmp.ne.s32.totalorder %s73, %s74
    %p83 = scmp.eq.s32.totalorder %s21, 0
    %p84 = por %p82, %p83
    %p85 = scmp.ne.s32.totalorder %s73, %s74
    %p86 = scmp.eq.s32.totalorder %s22, 1
    %p87 = por %p85, %p86
    %p89 = scmp.ne.s32.totalorder %s74, %s88
    %p90 = scmp.eq.s32.totalorder %s22, 0
    %p91 = por %p89, %p90
    %s93 = sadd.s32 %s92, 1
    %p96 = scmp.eq.s32.totalorder %s16, 1
    %p97 = scmp.ne.s32.totalorder %s92, %s94
    %p98 = scmp.eq.s32.totalorder %s16, 0
    %p99 = por %p97, %p98
    %p100 = scmp.ne.s32.totalorder %s92, %s94
    %p101 = scmp.eq.s32.totalorder %s21, 1
    %p102 = por %p100, %p101
    %p103 = scmp.ne.s32.totalorder %s94, %s95
    %p104 = scmp.eq.s32.totalorder %s21, 0
    %p105 = por %p103, %p104
    %p106 = scmp.ne.s32.totalorder %s94, %s95
    %p107 = scmp.eq.s32.totalorder %s22, 1
    %p108 = por %p106, %p107
    %p110 = scmp.ne.s32.totalorder %s95, %s109
    %p111 = scmp.eq.s32.totalorder %s22, 0
    %p112 = por %p110, %p111
    %s113 = ssub.s32 %s16, %s23
    %p114 = scmp.eq.s32.totalorder %s113, 0
    %s116 = sadd.s32 %s115, 1
    %s117 = scalar_select %p114, %s115, %s116
    %p120 = pneg %p114
    %p121 = scmp.eq.s32.totalorder %s16, 1
    %p122 = por %p120, %p121
    %p123 = scmp.ne.s32.totalorder %s115, %s118
    %p124 = scmp.eq.s32.totalorder %s16, 0
    %p125 = por %p123, %p124
    %p126 = scmp.ne.s32.totalorder %s115, %s118
    %p127 = scmp.eq.s32.totalorder %s21, 1
    %p128 = por %p126, %p127
    %p129 = scmp.ne.s32.totalorder %s118, %s119
    %p130 = scmp.eq.s32.totalorder %s21, 0
    %p131 = por %p129, %p130
    %p132 = scmp.ne.s32.totalorder %s118, %s119
    %p133 = scmp.eq.s32.totalorder %s22, 1
    %p134 = por %p132, %p133
    %p136 = scmp.ne.s32.totalorder %s119, %s135
    %p137 = scmp.eq.s32.totalorder %s22, 0
    %p138 = por %p136, %p137
    %s139 = ssub.s32 %s16, %s23
    %p140 = scmp.eq.s32.totalorder %s139, 0
    %s142 = sadd.s32 %s141, 1
    %s143 = scalar_select %p140, %s141, %s142
    %p146 = pneg %p140
    %p147 = scmp.eq.s32.totalorder %s16, 1
    %p148 = por %p146, %p147
    %p149 = scmp.ne.s32.totalorder %s141, %s144
    %p150 = scmp.eq.s32.totalorder %s16, 0
    %p151 = por %p149, %p150
    %p152 = scmp.ne.s32.totalorder %s141, %s144
    %p153 = scmp.eq.s32.totalorder %s21, 1
    %p154 = por %p152, %p153
    %p155 = scmp.ne.s32.totalorder %s144, %s145
    %p156 = scmp.eq.s32.totalorder %s21, 0
    %p157 = por %p155, %p156
    %p158 = scmp.ne.s32.totalorder %s144, %s145
    %p159 = scmp.eq.s32.totalorder %s22, 1
    %p160 = por %p158, %p159
    %p162 = scmp.ne.s32.totalorder %s145, %s161
    %p163 = scmp.eq.s32.totalorder %s22, 0
    %p164 = por %p162, %p163
    %s165 = ssub.s32 %s16, %s23
    %p166 = scmp.eq.s32.totalorder %s165, 0
    %s168 = sadd.s32 %s167, 1
    %s169 = scalar_select %p166, %s167, %s168
    %p172 = pneg %p166
    %p173 = scmp.eq.s32.totalorder %s16, 1
    %p174 = por %p172, %p173
    %p175 = scmp.ne.s32.totalorder %s167, %s170
    %p176 = scmp.eq.s32.totalorder %s16, 0
    %p177 = por %p175, %p176
    %p178 = scmp.ne.s32.totalorder %s167, %s170
    %p179 = scmp.eq.s32.totalorder %s21, 1
    %p180 = por %p178, %p179
    %p181 = scmp.ne.s32.totalorder %s170, %s171
    %p182 = scmp.eq.s32.totalorder %s21, 0
    %p183 = por %p181, %p182
    %p184 = scmp.ne.s32.totalorder %s170, %s171
    %p185 = scmp.eq.s32.totalorder %s22, 1
    %p186 = por %p184, %p185
    %p188 = scmp.ne.s32.totalorder %s171, %s187
    %p189 = scmp.eq.s32.totalorder %s22, 0
    %p190 = por %p188, %p189
    %s191 = ssub.s32 %s16, %s23
    %p192 = scmp.eq.s32.totalorder %s191, 0
    %s194 = sadd.s32 %s193, 1
    %s195 = scalar_select %p192, %s193, %s194
    %p198 = pneg %p192
    %p199 = scmp.eq.s32.totalorder %s16, 1
    %p200 = por %p198, %p199
    %p201 = scmp.ne.s32.totalorder %s193, %s196
    %p202 = scmp.eq.s32.totalorder %s16, 0
    %p203 = por %p201, %p202
    %p204 = scmp.ne.s32.totalorder %s193, %s196
    %p205 = scmp.eq.s32.totalorder %s21, 1
    %p206 = por %p204, %p205
    %p207 = scmp.ne.s32.totalorder %s196, %s197
    %p208 = scmp.eq.s32.totalorder %s21, 0
    %p209 = por %p207, %p208
    %p210 = scmp.ne.s32.totalorder %s196, %s197
    %p211 = scmp.eq.s32.totalorder %s22, 1
    %p212 = por %p210, %p211
    %p214 = scmp.ne.s32.totalorder %s197, %s213
    %p215 = scmp.eq.s32.totalorder %s22, 0
    %p216 = por %p214, %p215
    %s217 = ssub.s32 %s16, %s23
    %p218 = scmp.eq.s32.totalorder %s217, 0
    %s220 = sadd.s32 %s219, 1
    %s221 = scalar_select %p218, %s219, %s220
    %p224 = pneg %p218
    %p225 = scmp.eq.s32.totalorder %s16, 1
    %p226 = por %p224, %p225
    %p227 = scmp.ne.s32.totalorder %s219, %s222
    %p228 = scmp.eq.s32.totalorder %s16, 0
    %p229 = por %p227, %p228
    %p230 = scmp.ne.s32.totalorder %s219, %s222
    %p231 = scmp.eq.s32.totalorder %s21, 1
    %p232 = por %p230, %p231
    %p233 = scmp.ne.s32.totalorder %s222, %s223
    %p234 = scmp.eq.s32.totalorder %s21, 0
    %p235 = por %p233, %p234
    %p236 = scmp.ne.s32.totalorder %s222, %s223
    %p237 = scmp.eq.s32.totalorder %s22, 1
    %p238 = por %p236, %p237
    %p240 = scmp.ne.s32.totalorder %s223, %s239
    %p241 = scmp.eq.s32.totalorder %s22, 0
    %p242 = por %p240, %p241
    %s243 = ssub.s32 %s16, %s23
    %p244 = scmp.eq.s32.totalorder %s243, 0
    %s246 = sadd.s32 %s245, 1
    %s247 = scalar_select %p244, %s245, %s246
    %p250 = pneg %p244
    %p251 = scmp.eq.s32.totalorder %s16, 1
    %p252 = por %p250, %p251
    %p253 = scmp.ne.s32.totalorder %s245, %s248
    %p254 = scmp.eq.s32.totalorder %s16, 0
    %p255 = por %p253, %p254
    %p256 = scmp.ne.s32.totalorder %s245, %s248
    %p257 = scmp.eq.s32.totalorder %s21, 1
    %p258 = por %p256, %p257
    %p259 = scmp.ne.s32.totalorder %s248, %s249
    %p260 = scmp.eq.s32.totalorder %s21, 0
    %p261 = por %p259, %p260
    %p262 = scmp.ne.s32.totalorder %s248, %s249
    %p263 = scmp.eq.s32.totalorder %s22, 1
    %p264 = por %p262, %p263
    %p266 = scmp.ne.s32.totalorder %s249, %s265
    %p267 = scmp.eq.s32.totalorder %s22, 0
    %p268 = por %p266, %p267
    %p269 = scmp.le.s32.totalorder 1, %s16
    %p270 = scmp.lt.s32.totalorder %s16, 3
    %p271 = pnand %p269, %p270
    %p272 = pneg %p271
    // Predicated region
    $region9: #{discriminator3_forward.1} parent=5 // pred_check
      _
    $region10: #{discriminator3_forward.1} parent=5 // pred_check_branch
      %274 = sbr.rel (%p271) target = $region12
    $region11: #{discriminator3_forward.1} parent=5 // pred_region
      %s275 = ssub.s32 %s16, 1
      // Predicated region
      $region13: #{discriminator3_forward.1} parent=11 // pred_check
        %p276 = pneg %p63
      $region14: #{discriminator3_forward.1} parent=11 // pred_check_branch
        %278 = sbr.rel (%p276) target = $region16
      $region15: #{discriminator3_forward.1} parent=11 // pred_region
        _
      $region16: #{discriminator3_forward.1} parent=11 // pred_fallthru
        _
      // Predicated region
      $region17: #{discriminator3_forward.1} parent=11 // pred_check
        %p279 = pneg %p84
      $region18: #{discriminator3_forward.1} parent=11 // pred_check_branch
        %281 = sbr.rel (%p279) target = $region20
      $region19: #{discriminator3_forward.1} parent=11 // pred_region
        _
      $region20: #{discriminator3_forward.1} parent=11 // pred_fallthru
        _
      // Predicated region
      $region21: #{discriminator3_forward.1} parent=11 // pred_check
        %p282 = pneg %p105
      $region22: #{discriminator3_forward.1} parent=11 // pred_check_branch
        %284 = sbr.rel (%p282) target = $region24
      $region23: #{discriminator3_forward.1} parent=11 // pred_region
        _
      $region24: #{discriminator3_forward.1} parent=11 // pred_fallthru
        _
    $region12: #{discriminator3_forward.1} parent=5 // pred_fallthru
      _
    %p285 = scmp.lt.s32.totalorder %s16, 2
    // Predicated region
    $region25: #{discriminator3_forward.1} parent=5 // pred_check
      %p286 = pneg %p285
    $region26: #{discriminator3_forward.1} parent=5 // pred_check_branch
      %288 = sbr.rel (%p286) target = $region28
    $region27: #{discriminator3_forward.1} parent=5 // pred_region
      // Predicated region
      $region29: #{discriminator3_forward.1} parent=27 // pred_check
        %p289 = pneg %p36
      $region30: #{discriminator3_forward.1} parent=27 // pred_check_branch
        %291 = sbr.rel (%p289) target = $region32
      $region31: #{discriminator3_forward.1} parent=27 // pred_region
        %p292 = scmp.lt.s32.totalorder %s16, 1
        %s293 = scalar_select %p292, %s16, 1
        %s294 = smul.addr %s293, 2
        %s295 = smul.addr %s294, 8
        %s296 = scalar_lea.vmem %s0, %s295
      $region32: #{discriminator3_forward.1} parent=27 // pred_fallthru
        _
    $region28: #{discriminator3_forward.1} parent=5 // pred_fallthru
      _
    %p297 = scmp.le.s32.totalorder 1, %s16
    %p298 = scmp.lt.s32.totalorder %s16, 3
    %p299 = pnand %p297, %p298
    %p300 = pneg %p299
    // Predicated region
    $region33: #{discriminator3_forward.1} parent=5 // pred_check
      _
    $region34: #{discriminator3_forward.1} parent=5 // pred_check_branch
      %302 = sbr.rel (%p299) target = $region36
    $region35: #{discriminator3_forward.1} parent=5 // pred_region
      %s303 = ssub.s32 %s16, 1
      %p304 = scmp.lt.s32.totalorder %s21, 1
      %s305 = scalar_select %p304, %s21, 1
      %s306 = smul.addr %s305, 2
      %s307 = smul.addr %s306, 8
      %s308 = scalar_lea.vmem %s0, %s307
      %p309 = pneg %p42
      %p310 = pneg %p39
      %p311 = pneg %p63
      %p312 = pneg %p60
      %p313 = pneg %p84
      %p314 = pneg %p81
      %p315 = pneg %p105
      %p316 = pneg %p102
      %p317 = pneg %p131
      %p318 = pneg %p128
      %p319 = scmp.lt.s32.totalorder %s21, 1
      %s320 = scalar_select %p319, %s21, 1
      %s321 = smul.addr %s320, 2
      %s322 = smul.addr %s321, 8
      %s323 = scalar_lea.vmem %s4, %s322
      %p324 = pneg %p157
      %p325 = pneg %p154
      %p326 = scmp.lt.s32.totalorder %s21, 1
      %s327 = scalar_select %p326, %s21, 1
      %s328 = smul.addr %s327, 2
      %s329 = smul.addr %s328, 8
      %s330 = scalar_lea.vmem %s5, %s329
      %p331 = pneg %p183
      %p332 = pneg %p180
      %p333 = scmp.lt.s32.totalorder %s21, 1
      %s334 = scalar_select %p333, %s21, 1
      %s335 = smul.addr %s334, 2
      %s336 = smul.addr %s335, 8
      %s337 = scalar_lea.vmem %s6, %s336
      %p338 = pneg %p209
      %p339 = pneg %p206
      %p340 = scmp.lt.s32.totalorder %s21, 1
      %s341 = scalar_select %p340, %s21, 1
      %s342 = smul.addr %s341, 2
      %s343 = smul.addr %s342, 8
      %s344 = scalar_lea.vmem %s7, %s343
      %p345 = pneg %p235
      %p346 = pneg %p232
      %p347 = scmp.lt.s32.totalorder %s21, 1
      %s348 = scalar_select %p347, %s21, 1
      %s349 = smul.addr %s348, 2
      %s350 = smul.addr %s349, 8
      %s351 = scalar_lea.vmem %s8, %s350
      %p352 = pneg %p261
      %p353 = pneg %p258
      %p354 = scmp.lt.s32.totalorder %s21, 1
      %s355 = scalar_select %p354, %s21, 1
      %s356 = smul.addr %s355, 2
      %s357 = smul.addr %s356, 8
      %s358 = scalar_lea.vmem %s9, %s357
      %p359 = scmp.lt.s32.totalorder %s21, 1
      %s360 = scalar_select %p359, %s21, 1
      %s361 = smul.addr %s360, 2
      %s362 = smul.addr %s361, 8
      %s363 = scalar_lea.vmem %s0, %s362
      %p364 = scmp.lt.s32.totalorder %s21, 1
      %s365 = scalar_select %p364, %s21, 1
      %s366 = smul.addr %s365, 2
      %s367 = smul.addr %s366, 8
      %s368 = scalar_lea.vmem %s4, %s367
      %p369 = scmp.lt.s32.totalorder %s21, 1
      %s370 = scalar_select %p369, %s21, 1
      %s371 = smul.addr %s370, 2
      %s372 = smul.addr %s371, 8
      %s373 = scalar_lea.vmem %s5, %s372
      %p374 = scmp.lt.s32.totalorder %s21, 1
      %s375 = scalar_select %p374, %s21, 1
      %s376 = smul.addr %s375, 2
      %s377 = smul.addr %s376, 8
      %s378 = scalar_lea.vmem %s6, %s377
      %p379 = scmp.lt.s32.totalorder %s21, 1
      %s380 = scalar_select %p379, %s21, 1
      %s381 = smul.addr %s380, 2
      %s382 = smul.addr %s381, 8
      %s383 = scalar_lea.vmem %s7, %s382
      %p384 = scmp.lt.s32.totalorder %s21, 1
      %s385 = scalar_select %p384, %s21, 1
      %s386 = smul.addr %s385, 2
      %s387 = smul.addr %s386, 8
      %s388 = scalar_lea.vmem %s8, %s387
      %p389 = scmp.lt.s32.totalorder %s21, 1
      %s390 = scalar_select %p389, %s21, 1
      %s391 = smul.addr %s390, 2
      %s392 = smul.addr %s391, 8
      %s393 = scalar_lea.vmem %s9, %s392
      %v394 = vld [vmem:[%s363] sm:$0xff]
      %v395 = vld [vmem:[%s363 + $0x8] sm:$0xff]
      %v396 = vld [vmem:[%s2] sm:$0xff]
      %v397 = vld [vmem:[%s2 + $0x8] sm:$0xff]
      %vm398 = vcmask 130048
      %v400 = vsel %vm398, %v396, 0
      %v403 = vsel %vm398, %v397, 0
      %405 = vmatpush.msra.mxu0 0.0
      %406 = vmatpush.msra.mxu0 0.0
      %407 = vmatpush.msra.mxu0 0.0
      %408 = vmatpush.msra.mxu0 0.0
      %409 = vmatpush.msra.mxu0 0.0
      %410 = vmatpush.msra.mxu0 0.0
      %411 = vmatpush.msra.mxu0 0.0
      %412 = vmatpush.msra.mxu0 0.0
      %413 = vmatpush.msra.mxu0 0.0
      %414 = vmatpush.msra.mxu0 0.0
      %415 = vmatpush.msra.mxu0 0.0
      %416 = vmatpush.msra.mxu0 0.0
      %417 = vmatpush.msra.mxu0 0.0
      %418 = vmatpush.msra.mxu0 0.0
      %419 = vmatpush.msra.mxu0 %v395
      %420 = vmatpush.msra.mxu0 %v394
      %421 = vmatmul.f32.gmra.mxu0 %v400
      %v422 = vpop.f32.mrf.mxu0
      %v423 = vadd.f32 0.0, %v422
      %424 = vmatmul.f32.gmra.mxu0 %v403
      %v425 = vpop.f32.mrf.mxu0
      %v426 = vadd.f32 0.0, %v425
      %427 = vdwg.mxu0
      %428 = vst [vmem:[#allocation2] sm:$0xff] %v423
      %429 = vst [vmem:[#allocation2 + $0x28] sm:$0xff] %v426
      %s430 = scalar_lea.vmem %s2, 16
      %v431 = vld [vmem:[%s430] sm:$0xff]
      %v432 = vld [vmem:[%s430 + $0x8] sm:$0xff]
      %v434 = vsel %vm398, %v431, 0
      %v437 = vsel %vm398, %v432, 0
      %439 = vmatpush.msra.mxu0 0.0
      %440 = vmatpush.msra.mxu0 0.0
      %441 = vmatpush.msra.mxu0 0.0
      %442 = vmatpush.msra.mxu0 0.0
      %443 = vmatpush.msra.mxu0 0.0
      %444 = vmatpush.msra.mxu0 0.0
      %445 = vmatpush.msra.mxu0 0.0
      %446 = vmatpush.msra.mxu0 0.0
      %447 = vmatpush.msra.mxu0 0.0
      %448 = vmatpush.msra.mxu0 0.0
      %449 = vmatpush.msra.mxu0 0.0
      %450 = vmatpush.msra.mxu0 0.0
      %451 = vmatpush.msra.mxu0 0.0
      %452 = vmatpush.msra.mxu0 0.0
      %453 = vmatpush.msra.mxu0 %v395
      %454 = vmatpush.msra.mxu0 %v394
      %455 = vmatmul.f32.gmra.mxu0 %v434
      %v456 = vpop.f32.mrf.mxu0
      %v457 = vadd.f32 0.0, %v456
      %458 = vmatmul.f32.gmra.mxu0 %v437
      %v459 = vpop.f32.mrf.mxu0
      %v460 = vadd.f32 0.0, %v459
      %461 = vdwg.mxu0
      %462 = vst [vmem:[#allocation2 + $0x8] sm:$0xff] %v457
      %463 = vst [vmem:[#allocation2 + $0x30] sm:$0xff] %v460
      %s464 = scalar_lea.vmem %s2, 32
      %v465 = vld [vmem:[%s464] sm:$0xff]
      %v466 = vld [vmem:[%s464 + $0x8] sm:$0xff]
      %v468 = vsel %vm398, %v465, 0
      %v471 = vsel %vm398, %v466, 0
      %473 = vmatpush.msra.mxu0 0.0
      %474 = vmatpush.msra.mxu0 0.0
      %475 = vmatpush.msra.mxu0 0.0
      %476 = vmatpush.msra.mxu0 0.0
      %477 = vmatpush.msra.mxu0 0.0
      %478 = vmatpush.msra.mxu0 0.0
      %479 = vmatpush.msra.mxu0 0.0
      %480 = vmatpush.msra.mxu0 0.0
      %481 = vmatpush.msra.mxu0 0.0
      %482 = vmatpush.msra.mxu0 0.0
      %483 = vmatpush.msra.mxu0 0.0
      %484 = vmatpush.msra.mxu0 0.0
      %485 = vmatpush.msra.mxu0 0.0
      %486 = vmatpush.msra.mxu0 0.0
      %487 = vmatpush.msra.mxu0 %v395
      %488 = vmatpush.msra.mxu0 %v394
      %489 = vmatmul.f32.gmra.mxu0 %v468
      %v490 = vpop.f32.mrf.mxu0
      %v491 = vadd.f32 0.0, %v490
      %492 = vmatmul.f32.gmra.mxu0 %v471
      %v493 = vpop.f32.mrf.mxu0
      %v494 = vadd.f32 0.0, %v493
      %495 = vdwg.mxu0
      %496 = vst [vmem:[#allocation2 + $0x10] sm:$0xff] %v491
      %497 = vst [vmem:[#allocation2 + $0x38] sm:$0xff] %v494
      %s498 = scalar_lea.vmem %s2, 48
      %v499 = vld [vmem:[%s498] sm:$0xff]
      %v500 = vld [vmem:[%s498 + $0x8] sm:$0xff]
      %v502 = vsel %vm398, %v499, 0
      %v505 = vsel %vm398, %v500, 0
      %507 = vmatpush.msra.mxu0 0.0
      %508 = vmatpush.msra.mxu0 0.0
      %509 = vmatpush.msra.mxu0 0.0
      %510 = vmatpush.msra.mxu0 0.0
      %511 = vmatpush.msra.mxu0 0.0
      %512 = vmatpush.msra.mxu0 0.0
      %513 = vmatpush.msra.mxu0 0.0
      %514 = vmatpush.msra.mxu0 0.0
      %515 = vmatpush.msra.mxu0 0.0
      %516 = vmatpush.msra.mxu0 0.0
      %517 = vmatpush.msra.mxu0 0.0
      %518 = vmatpush.msra.mxu0 0.0
      %519 = vmatpush.msra.mxu0 0.0
      %520 = vmatpush.msra.mxu0 0.0
      %521 = vmatpush.msra.mxu0 %v395
      %522 = vmatpush.msra.mxu0 %v394
      %523 = vmatmul.f32.gmra.mxu0 %v502
      %v524 = vpop.f32.mrf.mxu0
      %v525 = vadd.f32 0.0, %v524
      %526 = vmatmul.f32.gmra.mxu0 %v505
      %v527 = vpop.f32.mrf.mxu0
      %v528 = vadd.f32 0.0, %v527
      %529 = vdwg.mxu0
      %530 = vst [vmem:[#allocation2 + $0x18] sm:$0xff] %v525
      %531 = vst [vmem:[#allocation2 + $0x40] sm:$0xff] %v528
      %s532 = scalar_lea.vmem %s2, 64
      %v533 = vld [vmem:[%s532] sm:$0xff]
      %v534 = vld [vmem:[%s532 + $0x8] sm:$0xff]
      %v536 = vsel %vm398, %v533, 0
      %v539 = vsel %vm398, %v534, 0
      %541 = vmatpush.msra.mxu0 0.0
      %542 = vmatpush.msra.mxu0 0.0
      %543 = vmatpush.msra.mxu0 0.0
      %544 = vmatpush.msra.mxu0 0.0
      %545 = vmatpush.msra.mxu0 0.0
      %546 = vmatpush.msra.mxu0 0.0
      %547 = vmatpush.msra.mxu0 0.0
      %548 = vmatpush.msra.mxu0 0.0
      %549 = vmatpush.msra.mxu0 0.0
      %550 = vmatpush.msra.mxu0 0.0
      %551 = vmatpush.msra.mxu0 0.0
      %552 = vmatpush.msra.mxu0 0.0
      %553 = vmatpush.msra.mxu0 0.0
      %554 = vmatpush.msra.mxu0 0.0
      %555 = vmatpush.msra.mxu0 %v395
      %556 = vmatpush.msra.mxu0 %v394
      %557 = vmatmul.f32.gmra.mxu0 %v536
      %v558 = vpop.f32.mrf.mxu0
      %v559 = vadd.f32 0.0, %v558
      %560 = vmatmul.f32.gmra.mxu0 %v539
      %v561 = vpop.f32.mrf.mxu0
      %v562 = vadd.f32 0.0, %v561
      %563 = vdwg.mxu0
      %564 = vst [vmem:[#allocation2 + $0x20] sm:$0xff] %v559
      %565 = vst [vmem:[#allocation2 + $0x48] sm:$0xff] %v562
      %v566 = vld [vmem:[#allocation2] sm:$0xff]
      %v567 = vld [vmem:[#allocation2 + $0x8] sm:$0xff]
      %v568 = vld [vmem:[#allocation2 + $0x10] sm:$0xff]
      %v569 = vld [vmem:[#allocation2 + $0x18] sm:$0xff]
      %v570 = vld [vmem:[#allocation2 + $0x20] sm:$0xff]
      %v571 = vld [vmem:[#allocation2 + $0x28] sm:$0xff]
      %v572 = vld [vmem:[#allocation2 + $0x30] sm:$0xff]
      %v573 = vld [vmem:[#allocation2 + $0x38] sm:$0xff]
      %v574 = vld [vmem:[#allocation2 + $0x40] sm:$0xff]
      %v575 = vld [vmem:[#allocation2 + $0x48] sm:$0xff]
      %v576 = vld [vmem:[%s1] sm:$0xff]
      %v577 = vld [vmem:[%s1 + $0x8] sm:$0xff]
      %v578 = vld [vmem:[%s1 + $0x10] sm:$0xff]
      %v579 = vld [vmem:[%s1 + $0x18] sm:$0xff]
      %v580 = vld [vmem:[%s1 + $0x20] sm:$0xff]
      %v581 = vld [vmem:[%s1 + $0x28] sm:$0xff]
      %v582 = vld [vmem:[%s1 + $0x30] sm:$0xff]
      %v583 = vld [vmem:[%s1 + $0x38] sm:$0xff]
      %v584 = vld [vmem:[%s1 + $0x40] sm:$0xff]
      %v585 = vld [vmem:[%s1 + $0x48] sm:$0xff]
      %v586 = vld [vmem:[%s1 + $0x50] sm:$0xff]
      %v587 = vld [vmem:[%s1 + $0x58] sm:$0xff]
      %v588 = vld [vmem:[%s1 + $0x60] sm:$0xff]
      %v589 = vld [vmem:[%s1 + $0x68] sm:$0xff]
      %v590 = vld [vmem:[%s1 + $0x70] sm:$0xff]
      %v591 = vld [vmem:[%s1 + $0x78] sm:$0xff]
      %v592 = vld [vmem:[%s1 + $0x80] sm:$0xff]
      %v593 = vld [vmem:[%s1 + $0x88] sm:$0xff]
      %v594 = vld [vmem:[%s1 + $0x90] sm:$0xff]
      %v595 = vld [vmem:[%s1 + $0x98] sm:$0xff]
      %v596 = vld [vmem:[%s1 + $0xa0] sm:$0xff]
      %v597 = vld [vmem:[%s1 + $0xa8] sm:$0xff]
      %v598 = vld [vmem:[%s1 + $0xb0] sm:$0xff]
      %v599 = vld [vmem:[%s1 + $0xb8] sm:$0xff]
      %v600 = vld [vmem:[%s1 + $0xc0] sm:$0xff]
      %v601 = vld [vmem:[%s1 + $0xc8] sm:$0xff]
      %v602 = vld [vmem:[%s1 + $0xd0] sm:$0xff]
      %v603 = vld [vmem:[%s1 + $0xd8] sm:$0xff]
      %v604 = vld [vmem:[%s1 + $0xe0] sm:$0xff]
      %v605 = vld [vmem:[%s1 + $0xe8] sm:$0xff]
      %v606 = vld [vmem:[%s1 + $0xf0] sm:$0xff]
      %v607 = vld [vmem:[%s1 + $0xf8] sm:$0xff]
      %v608 = vld [vmem:[%s1 + $0x100] sm:$0xff]
      %v609 = vld [vmem:[%s1 + $0x108] sm:$0xff]
      %v610 = vld [vmem:[%s1 + $0x110] sm:$0xff]
      %v611 = vld [vmem:[%s1 + $0x118] sm:$0xff]
      %v612 = vld [vmem:[%s1 + $0x120] sm:$0xff]
      %v613 = vld [vmem:[%s1 + $0x128] sm:$0xff]
      %v614 = vld [vmem:[%s1 + $0x130] sm:$0xff]
      %v615 = vld [vmem:[%s1 + $0x138] sm:$0xff]
      %v616 = vld [vmem:[%s1 + $0x140] sm:$0xff]
      %v617 = vld [vmem:[%s1 + $0x148] sm:$0xff]
      %v618 = vld [vmem:[%s1 + $0x150] sm:$0xff]
      %v619 = vld [vmem:[%s1 + $0x158] sm:$0xff]
      %v620 = vld [vmem:[%s1 + $0x160] sm:$0xff]
      %v621 = vld [vmem:[%s1 + $0x168] sm:$0xff]
      %v622 = vld [vmem:[%s1 + $0x170] sm:$0xff]
      %v623 = vld [vmem:[%s1 + $0x178] sm:$0xff]
      %v624 = vld [vmem:[%s1 + $0x180] sm:$0xff]
      %v625 = vld [vmem:[%s1 + $0x188] sm:$0xff]
      %v626 = vld [vmem:[%s1 + $0x190] sm:$0xff]
      %v627 = vld [vmem:[%s1 + $0x198] sm:$0xff]
      %v628 = vld [vmem:[%s1 + $0x1a0] sm:$0xff]
      %v629 = vld [vmem:[%s1 + $0x1a8] sm:$0xff]
      %v630 = vld [vmem:[%s1 + $0x1b0] sm:$0xff]
      %v631 = vld [vmem:[%s1 + $0x1b8] sm:$0xff]
      %v632 = vld [vmem:[%s1 + $0x1c0] sm:$0xff]
      %v633 = vld [vmem:[%s1 + $0x1c8] sm:$0xff]
      %v634 = vld [vmem:[%s1 + $0x1d0] sm:$0xff]
      %v635 = vld [vmem:[%s1 + $0x1d8] sm:$0xff]
      %v636 = vld [vmem:[%s1 + $0x1e0] sm:$0xff]
      %v637 = vld [vmem:[%s1 + $0x1e8] sm:$0xff]
      %v638 = vld [vmem:[%s1 + $0x1f0] sm:$0xff]
      %v639 = vld [vmem:[%s1 + $0x1f8] sm:$0xff]
      %v640 = vld [vmem:[%s1 + $0x200] sm:$0xff]
      %v641 = vld [vmem:[%s1 + $0x208] sm:$0xff]
      %v642 = vld [vmem:[%s1 + $0x210] sm:$0xff]
      %v643 = vld [vmem:[%s1 + $0x218] sm:$0xff]
      %v644 = vld [vmem:[%s1 + $0x220] sm:$0xff]
      %v645 = vld [vmem:[%s1 + $0x228] sm:$0xff]
      %v646 = vld [vmem:[%s1 + $0x230] sm:$0xff]
      %v647 = vld [vmem:[%s1 + $0x238] sm:$0xff]
      %v648 = vld [vmem:[%s1 + $0x240] sm:$0xff]
      %v649 = vld [vmem:[%s1 + $0x248] sm:$0xff]
      %v650 = vld [vmem:[%s1 + $0x250] sm:$0xff]
      %v651 = vld [vmem:[%s1 + $0x258] sm:$0xff]
      %v652 = vld [vmem:[%s1 + $0x260] sm:$0xff]
      %v653 = vld [vmem:[%s1 + $0x268] sm:$0xff]
      %v654 = vld [vmem:[%s1 + $0x270] sm:$0xff]
      %v655 = vld [vmem:[%s1 + $0x278] sm:$0xff]
      %v656 = vld [vmem:[%s3] sm:$0x1]
      %v658 = vperm.slane %v656, 0
      %660 = vmatpush.msra.mxu0 %v591
      %661 = vmatpush.msra.mxu0 %v590
      %662 = vmatpush.msra.mxu0 %v589
      %663 = vmatpush.msra.mxu0 %v588
      %664 = vmatpush.msra.mxu0 %v587
      %665 = vmatpush.msra.mxu0 %v586
      %666 = vmatpush.msra.mxu0 %v585
      %667 = vmatpush.msra.mxu0 %v584
      %668 = vmatpush.msra.mxu0 %v583
      %669 = vmatpush.msra.mxu0 %v582
      %670 = vmatpush.msra.mxu0 %v581
      %671 = vmatpush.msra.mxu0 %v580
      %672 = vmatpush.msra.mxu0 %v579
      %673 = vmatpush.msra.mxu0 %v578
      %674 = vmatpush.msra.mxu0 %v577
      %675 = vmatpush.msra.mxu0 %v576
      %676 = vmatmul.f32.gmra.mxu0 %v566
      %v677 = vpop.f32.mrf.mxu0
      %v678 = vadd.f32 %v658, %v677
      %679 = vmatmul.f32.gmra.mxu0 %v571
      %v680 = vpop.f32.mrf.mxu0
      %v681 = vadd.f32 %v658, %v680
      %682 = vdwg.mxu0
      %683 = vmatpush.msra.mxu0 %v607
      %684 = vmatpush.msra.mxu0 %v606
      %685 = vmatpush.msra.mxu0 %v605
      %686 = vmatpush.msra.mxu0 %v604
      %687 = vmatpush.msra.mxu0 %v603
      %688 = vmatpush.msra.mxu0 %v602
      %689 = vmatpush.msra.mxu0 %v601
      %690 = vmatpush.msra.mxu0 %v600
      %691 = vmatpush.msra.mxu0 %v599
      %692 = vmatpush.msra.mxu0 %v598
      %693 = vmatpush.msra.mxu0 %v597
      %694 = vmatpush.msra.mxu0 %v596
      %695 = vmatpush.msra.mxu0 %v595
      %696 = vmatpush.msra.mxu0 %v594
      %697 = vmatpush.msra.mxu0 %v593
      %698 = vmatpush.msra.mxu0 %v592
      %699 = vmatmul.f32.gmra.mxu0 %v567
      %v700 = vpop.f32.mrf.mxu0
      %v701 = vadd.f32 %v678, %v700
      %702 = vmatmul.f32.gmra.mxu0 %v572
      %v703 = vpop.f32.mrf.mxu0
      %v704 = vadd.f32 %v681, %v703
      %705 = vdwg.mxu0
      %706 = vmatpush.msra.mxu0 %v623
      %707 = vmatpush.msra.mxu0 %v622
      %708 = vmatpush.msra.mxu0 %v621
      %709 = vmatpush.msra.mxu0 %v620
      %710 = vmatpush.msra.mxu0 %v619
      %711 = vmatpush.msra.mxu0 %v618
      %712 = vmatpush.msra.mxu0 %v617
      %713 = vmatpush.msra.mxu0 %v616
      %714 = vmatpush.msra.mxu0 %v615
      %715 = vmatpush.msra.mxu0 %v614
      %716 = vmatpush.msra.mxu0 %v613
      %717 = vmatpush.msra.mxu0 %v612
      %718 = vmatpush.msra.mxu0 %v611
      %719 = vmatpush.msra.mxu0 %v610
      %720 = vmatpush.msra.mxu0 %v609
      %721 = vmatpush.msra.mxu0 %v608
      %722 = vmatmul.f32.gmra.mxu0 %v568
      %v723 = vpop.f32.mrf.mxu0
      %v724 = vadd.f32 %v701, %v723
      %725 = vmatmul.f32.gmra.mxu0 %v573
      %v726 = vpop.f32.mrf.mxu0
      %v727 = vadd.f32 %v704, %v726
      %728 = vdwg.mxu0
      %729 = vmatpush.msra.mxu0 %v639
      %730 = vmatpush.msra.mxu0 %v638
      %731 = vmatpush.msra.mxu0 %v637
      %732 = vmatpush.msra.mxu0 %v636
      %733 = vmatpush.msra.mxu0 %v635
      %734 = vmatpush.msra.mxu0 %v634
      %735 = vmatpush.msra.mxu0 %v633
      %736 = vmatpush.msra.mxu0 %v632
      %737 = vmatpush.msra.mxu0 %v631
      %738 = vmatpush.msra.mxu0 %v630
      %739 = vmatpush.msra.mxu0 %v629
      %740 = vmatpush.msra.mxu0 %v628
      %741 = vmatpush.msra.mxu0 %v627
      %742 = vmatpush.msra.mxu0 %v626
      %743 = vmatpush.msra.mxu0 %v625
      %744 = vmatpush.msra.mxu0 %v624
      %745 = vmatmul.f32.gmra.mxu0 %v569
      %v746 = vpop.f32.mrf.mxu0
      %v747 = vadd.f32 %v724, %v746
      %748 = vmatmul.f32.gmra.mxu0 %v574
      %v749 = vpop.f32.mrf.mxu0
      %v750 = vadd.f32 %v727, %v749
      %751 = vdwg.mxu0
      %752 = vmatpush.msra.mxu0 %v655
      %753 = vmatpush.msra.mxu0 %v654
      %754 = vmatpush.msra.mxu0 %v653
      %755 = vmatpush.msra.mxu0 %v652
      %756 = vmatpush.msra.mxu0 %v651
      %757 = vmatpush.msra.mxu0 %v650
      %758 = vmatpush.msra.mxu0 %v649
      %759 = vmatpush.msra.mxu0 %v648
      %760 = vmatpush.msra.mxu0 %v647
      %761 = vmatpush.msra.mxu0 %v646
      %762 = vmatpush.msra.mxu0 %v645
      %763 = vmatpush.msra.mxu0 %v644
      %764 = vmatpush.msra.mxu0 %v643
      %765 = vmatpush.msra.mxu0 %v642
      %766 = vmatpush.msra.mxu0 %v641
      %767 = vmatpush.msra.mxu0 %v640
      %768 = vmatmul.f32.gmra.mxu0 %v570
      %v769 = vpop.f32.mrf.mxu0
      %v770 = vadd.f32 %v747, %v769
      %771 = vmatmul.f32.gmra.mxu0 %v575
      %v772 = vpop.f32.mrf.mxu0
      %v773 = vadd.f32 %v750, %v772
      %774 = vdwg.mxu0
      %vm775 = vcmp.ge.f32.partialorder %v770, 0.0
      %vm776 = vcmp.ge.f32.partialorder %v773, 0.0
      %v777 = vmul.f32 %v770, 0.2
      %v778 = vmul.f32 %v773, 0.2
      %v779 = vsel %vm775, %v770, %v777
      %v780 = vsel %vm776, %v773, %v778
      %781 = vst [vmem:[%s368] sm:$0xff] %v779
      %782 = vst [vmem:[%s368 + $0x8] sm:$0xff] %v780
      %s783 = scalar_lea.vmem %s2, 80
      %v784 = vld [vmem:[%s783] sm:$0xff]
      %v785 = vld [vmem:[%s783 + $0x8] sm:$0xff]
      %v787 = vsel %vm398, %v784, 0
      %v790 = vsel %vm398, %v785, 0
      %792 = vmatpush.msra.mxu0 0.0
      %793 = vmatpush.msra.mxu0 0.0
      %794 = vmatpush.msra.mxu0 0.0
      %795 = vmatpush.msra.mxu0 0.0
      %796 = vmatpush.msra.mxu0 0.0
      %797 = vmatpush.msra.mxu0 0.0
      %798 = vmatpush.msra.mxu0 0.0
      %799 = vmatpush.msra.mxu0 0.0
      %800 = vmatpush.msra.mxu0 0.0
      %801 = vmatpush.msra.mxu0 0.0
      %802 = vmatpush.msra.mxu0 0.0
      %803 = vmatpush.msra.mxu0 0.0
      %804 = vmatpush.msra.mxu0 0.0
      %805 = vmatpush.msra.mxu0 0.0
      %806 = vmatpush.msra.mxu0 %v780
      %807 = vmatpush.msra.mxu0 %v779
      %808 = vmatmul.f32.gmra.mxu0 %v787
      %v809 = vpop.f32.mrf.mxu0
      %v810 = vadd.f32 0.0, %v809
      %811 = vmatmul.f32.gmra.mxu0 %v790
      %v812 = vpop.f32.mrf.mxu0
      %v813 = vadd.f32 0.0, %v812
      %814 = vdwg.mxu0
      %815 = vst [vmem:[#allocation2] sm:$0xff] %v810
      %816 = vst [vmem:[#allocation2 + $0x28] sm:$0xff] %v813
      %s817 = scalar_lea.vmem %s2, 96
      %v818 = vld [vmem:[%s817] sm:$0xff]
      %v819 = vld [vmem:[%s817 + $0x8] sm:$0xff]
      %v821 = vsel %vm398, %v818, 0
      %v824 = vsel %vm398, %v819, 0
      %826 = vmatpush.msra.mxu0 0.0
      %827 = vmatpush.msra.mxu0 0.0
      %828 = vmatpush.msra.mxu0 0.0
      %829 = vmatpush.msra.mxu0 0.0
      %830 = vmatpush.msra.mxu0 0.0
      %831 = vmatpush.msra.mxu0 0.0
      %832 = vmatpush.msra.mxu0 0.0
      %833 = vmatpush.msra.mxu0 0.0
      %834 = vmatpush.msra.mxu0 0.0
      %835 = vmatpush.msra.mxu0 0.0
      %836 = vmatpush.msra.mxu0 0.0
      %837 = vmatpush.msra.mxu0 0.0
      %838 = vmatpush.msra.mxu0 0.0
      %839 = vmatpush.msra.mxu0 0.0
      %840 = vmatpush.msra.mxu0 %v780
      %841 = vmatpush.msra.mxu0 %v779
      %842 = vmatmul.f32.gmra.mxu0 %v821
      %v843 = vpop.f32.mrf.mxu0
      %v844 = vadd.f32 0.0, %v843
      %845 = vmatmul.f32.gmra.mxu0 %v824
      %v846 = vpop.f32.mrf.mxu0
      %v847 = vadd.f32 0.0, %v846
      %848 = vdwg.mxu0
      %849 = vst [vmem:[#allocation2 + $0x8] sm:$0xff] %v844
      %850 = vst [vmem:[#allocation2 + $0x30] sm:$0xff] %v847
      %s851 = scalar_lea.vmem %s2, 112
      %v852 = vld [vmem:[%s851] sm:$0xff]
      %v853 = vld [vmem:[%s851 + $0x8] sm:$0xff]
      %v855 = vsel %vm398, %v852, 0
      %v858 = vsel %vm398, %v853, 0
      %860 = vmatpush.msra.mxu0 0.0
      %861 = vmatpush.msra.mxu0 0.0
      %862 = vmatpush.msra.mxu0 0.0
      %863 = vmatpush.msra.mxu0 0.0
      %864 = vmatpush.msra.mxu0 0.0
      %865 = vmatpush.msra.mxu0 0.0
      %866 = vmatpush.msra.mxu0 0.0
      %867 = vmatpush.msra.mxu0 0.0
      %868 = vmatpush.msra.mxu0 0.0
      %869 = vmatpush.msra.mxu0 0.0
      %870 = vmatpush.msra.mxu0 0.0
      %871 = vmatpush.msra.mxu0 0.0
      %872 = vmatpush.msra.mxu0 0.0
      %873 = vmatpush.msra.mxu0 0.0
      %874 = vmatpush.msra.mxu0 %v780
      %875 = vmatpush.msra.mxu0 %v779
      %876 = vmatmul.f32.gmra.mxu0 %v855
      %v877 = vpop.f32.mrf.mxu0
      %v878 = vadd.f32 0.0, %v877
      %879 = vmatmul.f32.gmra.mxu0 %v858
      %v880 = vpop.f32.mrf.mxu0
      %v881 = vadd.f32 0.0, %v880
      %882 = vdwg.mxu0
      %883 = vst [vmem:[#allocation2 + $0x10] sm:$0xff] %v878
      %884 = vst [vmem:[#allocation2 + $0x38] sm:$0xff] %v881
      %s885 = scalar_lea.vmem %s2, 128
      %v886 = vld [vmem:[%s885] sm:$0xff]
      %v887 = vld [vmem:[%s885 + $0x8] sm:$0xff]
      %v889 = vsel %vm398, %v886, 0
      %v892 = vsel %vm398, %v887, 0
      %894 = vmatpush.msra.mxu0 0.0
      %895 = vmatpush.msra.mxu0 0.0
      %896 = vmatpush.msra.mxu0 0.0
      %897 = vmatpush.msra.mxu0 0.0
      %898 = vmatpush.msra.mxu0 0.0
      %899 = vmatpush.msra.mxu0 0.0
      %900 = vmatpush.msra.mxu0 0.0
      %901 = vmatpush.msra.mxu0 0.0
      %902 = vmatpush.msra.mxu0 0.0
      %903 = vmatpush.msra.mxu0 0.0
      %904 = vmatpush.msra.mxu0 0.0
      %905 = vmatpush.msra.mxu0 0.0
      %906 = vmatpush.msra.mxu0 0.0
      %907 = vmatpush.msra.mxu0 0.0
      %908 = vmatpush.msra.mxu0 %v780
      %909 = vmatpush.msra.mxu0 %v779
      %910 = vmatmul.f32.gmra.mxu0 %v889
      %v911 = vpop.f32.mrf.mxu0
      %v912 = vadd.f32 0.0, %v911
      %913 = vmatmul.f32.gmra.mxu0 %v892
      %v914 = vpop.f32.mrf.mxu0
      %v915 = vadd.f32 0.0, %v914
      %916 = vdwg.mxu0
      %917 = vst [vmem:[#allocation2 + $0x18] sm:$0xff] %v912
      %918 = vst [vmem:[#allocation2 + $0x40] sm:$0xff] %v915
      %s919 = scalar_lea.vmem %s2, 144
      %v920 = vld [vmem:[%s919] sm:$0xff]
      %v921 = vld [vmem:[%s919 + $0x8] sm:$0xff]
      %v923 = vsel %vm398, %v920, 0
      %v926 = vsel %vm398, %v921, 0
      %928 = vmatpush.msra.mxu0 0.0
      %929 = vmatpush.msra.mxu0 0.0
      %930 = vmatpush.msra.mxu0 0.0
      %931 = vmatpush.msra.mxu0 0.0
      %932 = vmatpush.msra.mxu0 0.0
      %933 = vmatpush.msra.mxu0 0.0
      %934 = vmatpush.msra.mxu0 0.0
      %935 = vmatpush.msra.mxu0 0.0
      %936 = vmatpush.msra.mxu0 0.0
      %937 = vmatpush.msra.mxu0 0.0
      %938 = vmatpush.msra.mxu0 0.0
      %939 = vmatpush.msra.mxu0 0.0
      %940 = vmatpush.msra.mxu0 0.0
      %941 = vmatpush.msra.mxu0 0.0
      %942 = vmatpush.msra.mxu0 %v780
      %943 = vmatpush.msra.mxu0 %v779
      %944 = vmatmul.f32.gmra.mxu0 %v923
      %v945 = vpop.f32.mrf.mxu0
      %v946 = vadd.f32 0.0, %v945
      %947 = vmatmul.f32.gmra.mxu0 %v926
      %v948 = vpop.f32.mrf.mxu0
      %v949 = vadd.f32 0.0, %v948
      %950 = vdwg.mxu0
      %951 = vst [vmem:[#allocation2 + $0x20] sm:$0xff] %v946
      %952 = vst [vmem:[#allocation2 + $0x48] sm:$0xff] %v949
      %v953 = vld [vmem:[#allocation2] sm:$0xff]
      %v954 = vld [vmem:[#allocation2 + $0x8] sm:$0xff]
      %v955 = vld [vmem:[#allocation2 + $0x10] sm:$0xff]
      %v956 = vld [vmem:[#allocation2 + $0x18] sm:$0xff]
      %v957 = vld [vmem:[#allocation2 + $0x20] sm:$0xff]
      %v958 = vld [vmem:[#allocation2 + $0x28] sm:$0xff]
      %v959 = vld [vmem:[#allocation2 + $0x30] sm:$0xff]
      %v960 = vld [vmem:[#allocation2 + $0x38] sm:$0xff]
      %v961 = vld [vmem:[#allocation2 + $0x40] sm:$0xff]
      %v962 = vld [vmem:[#allocation2 + $0x48] sm:$0xff]
      %s963 = scalar_lea.vmem %s1, 640
      %v964 = vld [vmem:[%s963] sm:$0xff]
      %v965 = vld [vmem:[%s963 + $0x8] sm:$0xff]
      %v966 = vld [vmem:[%s963 + $0x10] sm:$0xff]
      %v967 = vld [vmem:[%s963 + $0x18] sm:$0xff]
      %v968 = vld [vmem:[%s963 + $0x20] sm:$0xff]
      %v969 = vld [vmem:[%s963 + $0x28] sm:$0xff]
      %v970 = vld [vmem:[%s963 + $0x30] sm:$0xff]
      %v971 = vld [vmem:[%s963 + $0x38] sm:$0xff]
      %v972 = vld [vmem:[%s963 + $0x40] sm:$0xff]
      %v973 = vld [vmem:[%s963 + $0x48] sm:$0xff]
      %v974 = vld [vmem:[%s963 + $0x50] sm:$0xff]
      %v975 = vld [vmem:[%s963 + $0x58] sm:$0xff]
      %v976 = vld [vmem:[%s963 + $0x60] sm:$0xff]
      %v977 = vld [vmem:[%s963 + $0x68] sm:$0xff]
      %v978 = vld [vmem:[%s963 + $0x70] sm:$0xff]
      %v979 = vld [vmem:[%s963 + $0x78] sm:$0xff]
      %v980 = vld [vmem:[%s963 + $0x80] sm:$0xff]
      %v981 = vld [vmem:[%s963 + $0x88] sm:$0xff]
      %v982 = vld [vmem:[%s963 + $0x90] sm:$0xff]
      %v983 = vld [vmem:[%s963 + $0x98] sm:$0xff]
      %v984 = vld [vmem:[%s963 + $0xa0] sm:$0xff]
      %v985 = vld [vmem:[%s963 + $0xa8] sm:$0xff]
      %v986 = vld [vmem:[%s963 + $0xb0] sm:$0xff]
      %v987 = vld [vmem:[%s963 + $0xb8] sm:$0xff]
      %v988 = vld [vmem:[%s963 + $0xc0] sm:$0xff]
      %v989 = vld [vmem:[%s963 + $0xc8] sm:$0xff]
      %v990 = vld [vmem:[%s963 + $0xd0] sm:$0xff]
      %v991 = vld [vmem:[%s963 + $0xd8] sm:$0xff]
      %v992 = vld [vmem:[%s963 + $0xe0] sm:$0xff]
      %v993 = vld [vmem:[%s963 + $0xe8] sm:$0xff]
      %v994 = vld [vmem:[%s963 + $0xf0] sm:$0xff]
      %v995 = vld [vmem:[%s963 + $0xf8] sm:$0xff]
      %v996 = vld [vmem:[%s963 + $0x100] sm:$0xff]
      %v997 = vld [vmem:[%s963 + $0x108] sm:$0xff]
      %v998 = vld [vmem:[%s963 + $0x110] sm:$0xff]
      %v999 = vld [vmem:[%s963 + $0x118] sm:$0xff]
      %v1000 = vld [vmem:[%s963 + $0x120] sm:$0xff]
      %v1001 = vld [vmem:[%s963 + $0x128] sm:$0xff]
      %v1002 = vld [vmem:[%s963 + $0x130] sm:$0xff]
      %v1003 = vld [vmem:[%s963 + $0x138] sm:$0xff]
      %v1004 = vld [vmem:[%s963 + $0x140] sm:$0xff]
      %v1005 = vld [vmem:[%s963 + $0x148] sm:$0xff]
      %v1006 = vld [vmem:[%s963 + $0x150] sm:$0xff]
      %v1007 = vld [vmem:[%s963 + $0x158] sm:$0xff]
      %v1008 = vld [vmem:[%s963 + $0x160] sm:$0xff]
      %v1009 = vld [vmem:[%s963 + $0x168] sm:$0xff]
      %v1010 = vld [vmem:[%s963 + $0x170] sm:$0xff]
      %v1011 = vld [vmem:[%s963 + $0x178] sm:$0xff]
      %v1012 = vld [vmem:[%s963 + $0x180] sm:$0xff]
      %v1013 = vld [vmem:[%s963 + $0x188] sm:$0xff]
      %v1014 = vld [vmem:[%s963 + $0x190] sm:$0xff]
      %v1015 = vld [vmem:[%s963 + $0x198] sm:$0xff]
      %v1016 = vld [vmem:[%s963 + $0x1a0] sm:$0xff]
      %v1017 = vld [vmem:[%s963 + $0x1a8] sm:$0xff]
      %v1018 = vld [vmem:[%s963 + $0x1b0] sm:$0xff]
      %v1019 = vld [vmem:[%s963 + $0x1b8] sm:$0xff]
      %v1020 = vld [vmem:[%s963 + $0x1c0] sm:$0xff]
      %v1021 = vld [vmem:[%s963 + $0x1c8] sm:$0xff]
      %v1022 = vld [vmem:[%s963 + $0x1d0] sm:$0xff]
      %v1023 = vld [vmem:[%s963 + $0x1d8] sm:$0xff]
      %v1024 = vld [vmem:[%s963 + $0x1e0] sm:$0xff]
      %v1025 = vld [vmem:[%s963 + $0x1e8] sm:$0xff]
      %v1026 = vld [vmem:[%s963 + $0x1f0] sm:$0xff]
      %v1027 = vld [vmem:[%s963 + $0x1f8] sm:$0xff]
      %v1028 = vld [vmem:[%s963 + $0x200] sm:$0xff]
      %v1029 = vld [vmem:[%s963 + $0x208] sm:$0xff]
      %v1030 = vld [vmem:[%s963 + $0x210] sm:$0xff]
      %v1031 = vld [vmem:[%s963 + $0x218] sm:$0xff]
      %v1032 = vld [vmem:[%s963 + $0x220] sm:$0xff]
      %v1033 = vld [vmem:[%s963 + $0x228] sm:$0xff]
      %v1034 = vld [vmem:[%s963 + $0x230] sm:$0xff]
      %v1035 = vld [vmem:[%s963 + $0x238] sm:$0xff]
      %v1036 = vld [vmem:[%s963 + $0x240] sm:$0xff]
      %v1037 = vld [vmem:[%s963 + $0x248] sm:$0xff]
      %v1038 = vld [vmem:[%s963 + $0x250] sm:$0xff]
      %v1039 = vld [vmem:[%s963 + $0x258] sm:$0xff]
      %v1040 = vld [vmem:[%s963 + $0x260] sm:$0xff]
      %v1041 = vld [vmem:[%s963 + $0x268] sm:$0xff]
      %v1042 = vld [vmem:[%s963 + $0x270] sm:$0xff]
      %v1043 = vld [vmem:[%s963 + $0x278] sm:$0xff]
      %s1044 = scalar_lea.vmem %s3, 1
      %v1045 = vld [vmem:[%s1044] sm:$0x1]
      %v1047 = vperm.slane %v1045, 0
      %1049 = vmatpush.msra.mxu0 %v979
      %1050 = vmatpush.msra.mxu0 %v978
      %1051 = vmatpush.msra.mxu0 %v977
      %1052 = vmatpush.msra.mxu0 %v976
      %1053 = vmatpush.msra.mxu0 %v975
      %1054 = vmatpush.msra.mxu0 %v974
      %1055 = vmatpush.msra.mxu0 %v973
      %1056 = vmatpush.msra.mxu0 %v972
      %1057 = vmatpush.msra.mxu0 %v971
      %1058 = vmatpush.msra.mxu0 %v970
      %1059 = vmatpush.msra.mxu0 %v969
      %1060 = vmatpush.msra.mxu0 %v968
      %1061 = vmatpush.msra.mxu0 %v967
      %1062 = vmatpush.msra.mxu0 %v966
      %1063 = vmatpush.msra.mxu0 %v965
      %1064 = vmatpush.msra.mxu0 %v964
      %1065 = vmatmul.f32.gmra.mxu0 %v953
      %v1066 = vpop.f32.mrf.mxu0
      %v1067 = vadd.f32 %v1047, %v1066
      %1068 = vmatmul.f32.gmra.mxu0 %v958
      %v1069 = vpop.f32.mrf.mxu0
      %v1070 = vadd.f32 %v1047, %v1069
      %1071 = vdwg.mxu0
      %1072 = vmatpush.msra.mxu0 %v995
      %1073 = vmatpush.msra.mxu0 %v994
      %1074 = vmatpush.msra.mxu0 %v993
      %1075 = vmatpush.msra.mxu0 %v992
      %1076 = vmatpush.msra.mxu0 %v991
      %1077 = vmatpush.msra.mxu0 %v990
      %1078 = vmatpush.msra.mxu0 %v989
      %1079 = vmatpush.msra.mxu0 %v988
      %1080 = vmatpush.msra.mxu0 %v987
      %1081 = vmatpush.msra.mxu0 %v986
      %1082 = vmatpush.msra.mxu0 %v985
      %1083 = vmatpush.msra.mxu0 %v984
      %1084 = vmatpush.msra.mxu0 %v983
      %1085 = vmatpush.msra.mxu0 %v982
      %1086 = vmatpush.msra.mxu0 %v981
      %1087 = vmatpush.msra.mxu0 %v980
      %1088 = vmatmul.f32.gmra.mxu0 %v954
      %v1089 = vpop.f32.mrf.mxu0
      %v1090 = vadd.f32 %v1067, %v1089
      %1091 = vmatmul.f32.gmra.mxu0 %v959
      %v1092 = vpop.f32.mrf.mxu0
      %v1093 = vadd.f32 %v1070, %v1092
      %1094 = vdwg.mxu0
      %1095 = vmatpush.msra.mxu0 %v1011
      %1096 = vmatpush.msra.mxu0 %v1010
      %1097 = vmatpush.msra.mxu0 %v1009
      %1098 = vmatpush.msra.mxu0 %v1008
      %1099 = vmatpush.msra.mxu0 %v1007
      %1100 = vmatpush.msra.mxu0 %v1006
      %1101 = vmatpush.msra.mxu0 %v1005
      %1102 = vmatpush.msra.mxu0 %v1004
      %1103 = vmatpush.msra.mxu0 %v1003
      %1104 = vmatpush.msra.mxu0 %v1002
      %1105 = vmatpush.msra.mxu0 %v1001
      %1106 = vmatpush.msra.mxu0 %v1000
      %1107 = vmatpush.msra.mxu0 %v999
      %1108 = vmatpush.msra.mxu0 %v998
      %1109 = vmatpush.msra.mxu0 %v997
      %1110 = vmatpush.msra.mxu0 %v996
      %1111 = vmatmul.f32.gmra.mxu0 %v955
      %v1112 = vpop.f32.mrf.mxu0
      %v1113 = vadd.f32 %v1090, %v1112
      %1114 = vmatmul.f32.gmra.mxu0 %v960
      %v1115 = vpop.f32.mrf.mxu0
      %v1116 = vadd.f32 %v1093, %v1115
      %1117 = vdwg.mxu0
      %1118 = vmatpush.msra.mxu0 %v1027
      %1119 = vmatpush.msra.mxu0 %v1026
      %1120 = vmatpush.msra.mxu0 %v1025
      %1121 = vmatpush.msra.mxu0 %v1024
      %1122 = vmatpush.msra.mxu0 %v1023
      %1123 = vmatpush.msra.mxu0 %v1022
      %1124 = vmatpush.msra.mxu0 %v1021
      %1125 = vmatpush.msra.mxu0 %v1020
      %1126 = vmatpush.msra.mxu0 %v1019
      %1127 = vmatpush.msra.mxu0 %v1018
      %1128 = vmatpush.msra.mxu0 %v1017
      %1129 = vmatpush.msra.mxu0 %v1016
      %1130 = vmatpush.msra.mxu0 %v1015
      %1131 = vmatpush.msra.mxu0 %v1014
      %1132 = vmatpush.msra.mxu0 %v1013
      %1133 = vmatpush.msra.mxu0 %v1012
      %1134 = vmatmul.f32.gmra.mxu0 %v956
      %v1135 = vpop.f32.mrf.mxu0
      %v1136 = vadd.f32 %v1113, %v1135
      %1137 = vmatmul.f32.gmra.mxu0 %v961
      %v1138 = vpop.f32.mrf.mxu0
      %v1139 = vadd.f32 %v1116, %v1138
      %1140 = vdwg.mxu0
      %1141 = vmatpush.msra.mxu0 %v1043
      %1142 = vmatpush.msra.mxu0 %v1042
      %1143 = vmatpush.msra.mxu0 %v1041
      %1144 = vmatpush.msra.mxu0 %v1040
      %1145 = vmatpush.msra.mxu0 %v1039
      %1146 = vmatpush.msra.mxu0 %v1038
      %1147 = vmatpush.msra.mxu0 %v1037
      %1148 = vmatpush.msra.mxu0 %v1036
      %1149 = vmatpush.msra.mxu0 %v1035
      %1150 = vmatpush.msra.mxu0 %v1034
      %1151 = vmatpush.msra.mxu0 %v1033
      %1152 = vmatpush.msra.mxu0 %v1032
      %1153 = vmatpush.msra.mxu0 %v1031
      %1154 = vmatpush.msra.mxu0 %v1030
      %1155 = vmatpush.msra.mxu0 %v1029
      %1156 = vmatpush.msra.mxu0 %v1028
      %1157 = vmatmul.f32.gmra.mxu0 %v957
      %v1158 = vpop.f32.mrf.mxu0
      %v1159 = vadd.f32 %v1136, %v1158
      %1160 = vmatmul.f32.gmra.mxu0 %v962
      %v1161 = vpop.f32.mrf.mxu0
      %v1162 = vadd.f32 %v1139, %v1161
      %1163 = vdwg.mxu0
      %vm1164 = vcmp.ge.f32.partialorder %v1159, 0.0
      %vm1165 = vcmp.ge.f32.partialorder %v1162, 0.0
      %v1166 = vmul.f32 %v1159, 0.2
      %v1167 = vmul.f32 %v1162, 0.2
      %v1168 = vsel %vm1164, %v1159, %v1166
      %v1169 = vsel %vm1165, %v1162, %v1167
      %1170 = vst [vmem:[%s373] sm:$0xff] %v1168
      %1171 = vst [vmem:[%s373 + $0x8] sm:$0xff] %v1169
      %s1172 = scalar_lea.vmem %s2, 160
      %v1173 = vld [vmem:[%s1172] sm:$0xff]
      %v1174 = vld [vmem:[%s1172 + $0x8] sm:$0xff]
      %v1176 = vsel %vm398, %v1173, 0
      %v1179 = vsel %vm398, %v1174, 0
      %1181 = vmatpush.msra.mxu0 0.0
      %1182 = vmatpush.msra.mxu0 0.0
      %1183 = vmatpush.msra.mxu0 0.0
      %1184 = vmatpush.msra.mxu0 0.0
      %1185 = vmatpush.msra.mxu0 0.0
      %1186 = vmatpush.msra.mxu0 0.0
      %1187 = vmatpush.msra.mxu0 0.0
      %1188 = vmatpush.msra.mxu0 0.0
      %1189 = vmatpush.msra.mxu0 0.0
      %1190 = vmatpush.msra.mxu0 0.0
      %1191 = vmatpush.msra.mxu0 0.0
      %1192 = vmatpush.msra.mxu0 0.0
      %1193 = vmatpush.msra.mxu0 0.0
      %1194 = vmatpush.msra.mxu0 0.0
      %1195 = vmatpush.msra.mxu0 %v1169
      %1196 = vmatpush.msra.mxu0 %v1168
      %1197 = vmatmul.f32.gmra.mxu0 %v1176
      %v1198 = vpop.f32.mrf.mxu0
      %v1199 = vadd.f32 0.0, %v1198
      %1200 = vmatmul.f32.gmra.mxu0 %v1179
      %v1201 = vpop.f32.mrf.mxu0
      %v1202 = vadd.f32 0.0, %v1201
      %1203 = vdwg.mxu0
      %1204 = vst [vmem:[#allocation2] sm:$0xff] %v1199
      %1205 = vst [vmem:[#allocation2 + $0x28] sm:$0xff] %v1202
      %s1206 = scalar_lea.vmem %s2, 176
      %v1207 = vld [vmem:[%s1206] sm:$0xff]
      %v1208 = vld [vmem:[%s1206 + $0x8] sm:$0xff]
      %v1210 = vsel %vm398, %v1207, 0
      %v1213 = vsel %vm398, %v1208, 0
      %1215 = vmatpush.msra.mxu0 0.0
      %1216 = vmatpush.msra.mxu0 0.0
      %1217 = vmatpush.msra.mxu0 0.0
      %1218 = vmatpush.msra.mxu0 0.0
      %1219 = vmatpush.msra.mxu0 0.0
      %1220 = vmatpush.msra.mxu0 0.0
      %1221 = vmatpush.msra.mxu0 0.0
      %1222 = vmatpush.msra.mxu0 0.0
      %1223 = vmatpush.msra.mxu0 0.0
      %1224 = vmatpush.msra.mxu0 0.0
      %1225 = vmatpush.msra.mxu0 0.0
      %1226 = vmatpush.msra.mxu0 0.0
      %1227 = vmatpush.msra.mxu0 0.0
      %1228 = vmatpush.msra.mxu0 0.0
      %1229 = vmatpush.msra.mxu0 %v1169
      %1230 = vmatpush.msra.mxu0 %v1168
      %1231 = vmatmul.f32.gmra.mxu0 %v1210
      %v1232 = vpop.f32.mrf.mxu0
      %v1233 = vadd.f32 0.0, %v1232
      %1234 = vmatmul.f32.gmra.mxu0 %v1213
      %v1235 = vpop.f32.mrf.mxu0
      %v1236 = vadd.f32 0.0, %v1235
      %1237 = vdwg.mxu0
      %1238 = vst [vmem:[#allocation2 + $0x8] sm:$0xff] %v1233
      %1239 = vst [vmem:[#allocation2 + $0x30] sm:$0xff] %v1236
      %s1240 = scalar_lea.vmem %s2, 192
      %v1241 = vld [vmem:[%s1240] sm:$0xff]
      %v1242 = vld [vmem:[%s1240 + $0x8] sm:$0xff]
      %v1244 = vsel %vm398, %v1241, 0
      %v1247 = vsel %vm398, %v1242, 0
      %1249 = vmatpush.msra.mxu0 0.0
      %1250 = vmatpush.msra.mxu0 0.0
      %1251 = vmatpush.msra.mxu0 0.0
      %1252 = vmatpush.msra.mxu0 0.0
      %1253 = vmatpush.msra.mxu0 0.0
      %1254 = vmatpush.msra.mxu0 0.0
      %1255 = vmatpush.msra.mxu0 0.0
      %1256 = vmatpush.msra.mxu0 0.0
      %1257 = vmatpush.msra.mxu0 0.0
      %1258 = vmatpush.msra.mxu0 0.0
      %1259 = vmatpush.msra.mxu0 0.0
      %1260 = vmatpush.msra.mxu0 0.0
      %1261 = vmatpush.msra.mxu0 0.0
      %1262 = vmatpush.msra.mxu0 0.0
      %1263 = vmatpush.msra.mxu0 %v1169
      %1264 = vmatpush.msra.mxu0 %v1168
      %1265 = vmatmul.f32.gmra.mxu0 %v1244
      %v1266 = vpop.f32.mrf.mxu0
      %v1267 = vadd.f32 0.0, %v1266
      %1268 = vmatmul.f32.gmra.mxu0 %v1247
      %v1269 = vpop.f32.mrf.mxu0
      %v1270 = vadd.f32 0.0, %v1269
      %1271 = vdwg.mxu0
      %1272 = vst [vmem:[#allocation2 + $0x10] sm:$0xff] %v1267
      %1273 = vst [vmem:[#allocation2 + $0x38] sm:$0xff] %v1270
      %s1274 = scalar_lea.vmem %s2, 208
      %v1275 = vld [vmem:[%s1274] sm:$0xff]
      %v1276 = vld [vmem:[%s1274 + $0x8] sm:$0xff]
      %v1278 = vsel %vm398, %v1275, 0
      %v1281 = vsel %vm398, %v1276, 0
      %1283 = vmatpush.msra.mxu0 0.0
      %1284 = vmatpush.msra.mxu0 0.0
      %1285 = vmatpush.msra.mxu0 0.0
      %1286 = vmatpush.msra.mxu0 0.0
      %1287 = vmatpush.msra.mxu0 0.0
      %1288 = vmatpush.msra.mxu0 0.0
      %1289 = vmatpush.msra.mxu0 0.0
      %1290 = vmatpush.msra.mxu0 0.0
      %1291 = vmatpush.msra.mxu0 0.0
      %1292 = vmatpush.msra.mxu0 0.0
      %1293 = vmatpush.msra.mxu0 0.0
      %1294 = vmatpush.msra.mxu0 0.0
      %1295 = vmatpush.msra.mxu0 0.0
      %1296 = vmatpush.msra.mxu0 0.0
      %1297 = vmatpush.msra.mxu0 %v1169
      %1298 = vmatpush.msra.mxu0 %v1168
      %1299 = vmatmul.f32.gmra.mxu0 %v1278
      %v1300 = vpop.f32.mrf.mxu0
      %v1301 = vadd.f32 0.0, %v1300
      %1302 = vmatmul.f32.gmra.mxu0 %v1281
      %v1303 = vpop.f32.mrf.mxu0
      %v1304 = vadd.f32 0.0, %v1303
      %1305 = vdwg.mxu0
      %1306 = vst [vmem:[#allocation2 + $0x18] sm:$0xff] %v1301
      %1307 = vst [vmem:[#allocation2 + $0x40] sm:$0xff] %v1304
      %s1308 = scalar_lea.vmem %s2, 224
      %v1309 = vld [vmem:[%s1308] sm:$0xff]
      %v1310 = vld [vmem:[%s1308 + $0x8] sm:$0xff]
      %v1312 = vsel %vm398, %v1309, 0
      %v1315 = vsel %vm398, %v1310, 0
      %1317 = vmatpush.msra.mxu0 0.0
      %1318 = vmatpush.msra.mxu0 0.0
      %1319 = vmatpush.msra.mxu0 0.0
      %1320 = vmatpush.msra.mxu0 0.0
      %1321 = vmatpush.msra.mxu0 0.0
      %1322 = vmatpush.msra.mxu0 0.0
      %1323 = vmatpush.msra.mxu0 0.0
      %1324 = vmatpush.msra.mxu0 0.0
      %1325 = vmatpush.msra.mxu0 0.0
      %1326 = vmatpush.msra.mxu0 0.0
      %1327 = vmatpush.msra.mxu0 0.0
      %1328 = vmatpush.msra.mxu0 0.0
      %1329 = vmatpush.msra.mxu0 0.0
      %1330 = vmatpush.msra.mxu0 0.0
      %1331 = vmatpush.msra.mxu0 %v1169
      %1332 = vmatpush.msra.mxu0 %v1168
      %1333 = vmatmul.f32.gmra.mxu0 %v1312
      %v1334 = vpop.f32.mrf.mxu0
      %v1335 = vadd.f32 0.0, %v1334
      %1336 = vmatmul.f32.gmra.mxu0 %v1315
      %v1337 = vpop.f32.mrf.mxu0
      %v1338 = vadd.f32 0.0, %v1337
      %1339 = vdwg.mxu0
      %1340 = vst [vmem:[#allocation2 + $0x20] sm:$0xff] %v1335
      %1341 = vst [vmem:[#allocation2 + $0x48] sm:$0xff] %v1338
      %v1342 = vld [vmem:[#allocation2] sm:$0xff]
      %v1343 = vld [vmem:[#allocation2 + $0x8] sm:$0xff]
      %v1344 = vld [vmem:[#allocation2 + $0x10] sm:$0xff]
      %v1345 = vld [vmem:[#allocation2 + $0x18] sm:$0xff]
      %v1346 = vld [vmem:[#allocation2 + $0x20] sm:$0xff]
      %v1347 = vld [vmem:[#allocation2 + $0x28] sm:$0xff]
      %v1348 = vld [vmem:[#allocation2 + $0x30] sm:$0xff]
      %v1349 = vld [vmem:[#allocation2 + $0x38] sm:$0xff]
      %v1350 = vld [vmem:[#allocation2 + $0x40] sm:$0xff]
      %v1351 = vld [vmem:[#allocation2 + $0x48] sm:$0xff]
      %s1352 = scalar_lea.vmem %s1, 1280
      %v1353 = vld [vmem:[%s1352] sm:$0xff]
      %v1354 = vld [vmem:[%s1352 + $0x8] sm:$0xff]
      %v1355 = vld [vmem:[%s1352 + $0x10] sm:$0xff]
      %v1356 = vld [vmem:[%s1352 + $0x18] sm:$0xff]
      %v1357 = vld [vmem:[%s1352 + $0x20] sm:$0xff]
      %v1358 = vld [vmem:[%s1352 + $0x28] sm:$0xff]
      %v1359 = vld [vmem:[%s1352 + $0x30] sm:$0xff]
      %v1360 = vld [vmem:[%s1352 + $0x38] sm:$0xff]
      %v1361 = vld [vmem:[%s1352 + $0x40] sm:$0xff]
      %v1362 = vld [vmem:[%s1352 + $0x48] sm:$0xff]
      %v1363 = vld [vmem:[%s1352 + $0x50] sm:$0xff]
      %v1364 = vld [vmem:[%s1352 + $0x58] sm:$0xff]
      %v1365 = vld [vmem:[%s1352 + $0x60] sm:$0xff]
      %v1366 = vld [vmem:[%s1352 + $0x68] sm:$0xff]
      %v1367 = vld [vmem:[%s1352 + $0x70] sm:$0xff]
      %v1368 = vld [vmem:[%s1352 + $0x78] sm:$0xff]
      %v1369 = vld [vmem:[%s1352 + $0x80] sm:$0xff]
      %v1370 = vld [vmem:[%s1352 + $0x88] sm:$0xff]
      %v1371 = vld [vmem:[%s1352 + $0x90] sm:$0xff]
      %v1372 = vld [vmem:[%s1352 + $0x98] sm:$0xff]
      %v1373 = vld [vmem:[%s1352 + $0xa0] sm:$0xff]
      %v1374 = vld [vmem:[%s1352 + $0xa8] sm:$0xff]
      %v1375 = vld [vmem:[%s1352 + $0xb0] sm:$0xff]
      %v1376 = vld [vmem:[%s1352 + $0xb8] sm:$0xff]
      %v1377 = vld [vmem:[%s1352 + $0xc0] sm:$0xff]
      %v1378 = vld [vmem:[%s1352 + $0xc8] sm:$0xff]
      %v1379 = vld [vmem:[%s1352 + $0xd0] sm:$0xff]
      %v1380 = vld [vmem:[%s1352 + $0xd8] sm:$0xff]
      %v1381 = vld [vmem:[%s1352 + $0xe0] sm:$0xff]
      %v1382 = vld [vmem:[%s1352 + $0xe8] sm:$0xff]
      %v1383 = vld [vmem:[%s1352 + $0xf0] sm:$0xff]
      %v1384 = vld [vmem:[%s1352 + $0xf8] sm:$0xff]
      %v1385 = vld [vmem:[%s1352 + $0x100] sm:$0xff]
      %v1386 = vld [vmem:[%s1352 + $0x108] sm:$0xff]
      %v1387 = vld [vmem:[%s1352 + $0x110] sm:$0xff]
      %v1388 = vld [vmem:[%s1352 + $0x118] sm:$0xff]
      %v1389 = vld [vmem:[%s1352 + $0x120] sm:$0xff]
      %v1390 = vld [vmem:[%s1352 + $0x128] sm:$0xff]
      %v1391 = vld [vmem:[%s1352 + $0x130] sm:$0xff]
      %v1392 = vld [vmem:[%s1352 + $0x138] sm:$0xff]
      %v1393 = vld [vmem:[%s1352 + $0x140] sm:$0xff]
      %v1394 = vld [vmem:[%s1352 + $0x148] sm:$0xff]
      %v1395 = vld [vmem:[%s1352 + $0x150] sm:$0xff]
      %v1396 = vld [vmem:[%s1352 + $0x158] sm:$0xff]
      %v1397 = vld [vmem:[%s1352 + $0x160] sm:$0xff]
      %v1398 = vld [vmem:[%s1352 + $0x168] sm:$0xff]
      %v1399 = vld [vmem:[%s1352 + $0x170] sm:$0xff]
      %v1400 = vld [vmem:[%s1352 + $0x178] sm:$0xff]
      %v1401 = vld [vmem:[%s1352 + $0x180] sm:$0xff]
      %v1402 = vld [vmem:[%s1352 + $0x188] sm:$0xff]
      %v1403 = vld [vmem:[%s1352 + $0x190] sm:$0xff]
      %v1404 = vld [vmem:[%s1352 + $0x198] sm:$0xff]
      %v1405 = vld [vmem:[%s1352 + $0x1a0] sm:$0xff]
      %v1406 = vld [vmem:[%s1352 + $0x1a8] sm:$0xff]
      %v1407 = vld [vmem:[%s1352 + $0x1b0] sm:$0xff]
      %v1408 = vld [vmem:[%s1352 + $0x1b8] sm:$0xff]
      %v1409 = vld [vmem:[%s1352 + $0x1c0] sm:$0xff]
      %v1410 = vld [vmem:[%s1352 + $0x1c8] sm:$0xff]
      %v1411 = vld [vmem:[%s1352 + $0x1d0] sm:$0xff]
      %v1412 = vld [vmem:[%s1352 + $0x1d8] sm:$0xff]
      %v1413 = vld [vmem:[%s1352 + $0x1e0] sm:$0xff]
      %v1414 = vld [vmem:[%s1352 + $0x1e8] sm:$0xff]
      %v1415 = vld [vmem:[%s1352 + $0x1f0] sm:$0xff]
      %v1416 = vld [vmem:[%s1352 + $0x1f8] sm:$0xff]
      %v1417 = vld [vmem:[%s1352 + $0x200] sm:$0xff]
      %v1418 = vld [vmem:[%s1352 + $0x208] sm:$0xff]
      %v1419 = vld [vmem:[%s1352 + $0x210] sm:$0xff]
      %v1420 = vld [vmem:[%s1352 + $0x218] sm:$0xff]
      %v1421 = vld [vmem:[%s1352 + $0x220] sm:$0xff]
      %v1422 = vld [vmem:[%s1352 + $0x228] sm:$0xff]
      %v1423 = vld [vmem:[%s1352 + $0x230] sm:$0xff]
      %v1424 = vld [vmem:[%s1352 + $0x238] sm:$0xff]
      %v1425 = vld [vmem:[%s1352 + $0x240] sm:$0xff]
      %v1426 = vld [vmem:[%s1352 + $0x248] sm:$0xff]
      %v1427 = vld [vmem:[%s1352 + $0x250] sm:$0xff]
      %v1428 = vld [vmem:[%s1352 + $0x258] sm:$0xff]
      %v1429 = vld [vmem:[%s1352 + $0x260] sm:$0xff]
      %v1430 = vld [vmem:[%s1352 + $0x268] sm:$0xff]
      %v1431 = vld [vmem:[%s1352 + $0x270] sm:$0xff]
      %v1432 = vld [vmem:[%s1352 + $0x278] sm:$0xff]
      %s1433 = scalar_lea.vmem %s3, 2
      %v1434 = vld [vmem:[%s1433] sm:$0x1]
      %v1436 = vperm.slane %v1434, 0
      %1438 = vmatpush.msra.mxu0 %v1368
      %1439 = vmatpush.msra.mxu0 %v1367
      %1440 = vmatpush.msra.mxu0 %v1366
      %1441 = vmatpush.msra.mxu0 %v1365
      %1442 = vmatpush.msra.mxu0 %v1364
      %1443 = vmatpush.msra.mxu0 %v1363
      %1444 = vmatpush.msra.mxu0 %v1362
      %1445 = vmatpush.msra.mxu0 %v1361
      %1446 = vmatpush.msra.mxu0 %v1360
      %1447 = vmatpush.msra.mxu0 %v1359
      %1448 = vmatpush.msra.mxu0 %v1358
      %1449 = vmatpush.msra.mxu0 %v1357
      %1450 = vmatpush.msra.mxu0 %v1356
      %1451 = vmatpush.msra.mxu0 %v1355
      %1452 = vmatpush.msra.mxu0 %v1354
      %1453 = vmatpush.msra.mxu0 %v1353
      %1454 = vmatmul.f32.gmra.mxu0 %v1342
      %v1455 = vpop.f32.mrf.mxu0
      %v1456 = vadd.f32 %v1436, %v1455
      %1457 = vmatmul.f32.gmra.mxu0 %v1347
      %v1458 = vpop.f32.mrf.mxu0
      %v1459 = vadd.f32 %v1436, %v1458
      %1460 = vdwg.mxu0
      %1461 = vmatpush.msra.mxu0 %v1384
      %1462 = vmatpush.msra.mxu0 %v1383
      %1463 = vmatpush.msra.mxu0 %v1382
      %1464 = vmatpush.msra.mxu0 %v1381
      %1465 = vmatpush.msra.mxu0 %v1380
      %1466 = vmatpush.msra.mxu0 %v1379
      %1467 = vmatpush.msra.mxu0 %v1378
      %1468 = vmatpush.msra.mxu0 %v1377
      %1469 = vmatpush.msra.mxu0 %v1376
      %1470 = vmatpush.msra.mxu0 %v1375
      %1471 = vmatpush.msra.mxu0 %v1374
      %1472 = vmatpush.msra.mxu0 %v1373
      %1473 = vmatpush.msra.mxu0 %v1372
      %1474 = vmatpush.msra.mxu0 %v1371
      %1475 = vmatpush.msra.mxu0 %v1370
      %1476 = vmatpush.msra.mxu0 %v1369
      %1477 = vmatmul.f32.gmra.mxu0 %v1343
      %v1478 = vpop.f32.mrf.mxu0
      %v1479 = vadd.f32 %v1456, %v1478
      %1480 = vmatmul.f32.gmra.mxu0 %v1348
      %v1481 = vpop.f32.mrf.mxu0
      %v1482 = vadd.f32 %v1459, %v1481
      %1483 = vdwg.mxu0
      %1484 = vmatpush.msra.mxu0 %v1400
      %1485 = vmatpush.msra.mxu0 %v1399
      %1486 = vmatpush.msra.mxu0 %v1398
      %1487 = vmatpush.msra.mxu0 %v1397
      %1488 = vmatpush.msra.mxu0 %v1396
      %1489 = vmatpush.msra.mxu0 %v1395
      %1490 = vmatpush.msra.mxu0 %v1394
      %1491 = vmatpush.msra.mxu0 %v1393
      %1492 = vmatpush.msra.mxu0 %v1392
      %1493 = vmatpush.msra.mxu0 %v1391
      %1494 = vmatpush.msra.mxu0 %v1390
      %1495 = vmatpush.msra.mxu0 %v1389
      %1496 = vmatpush.msra.mxu0 %v1388
      %1497 = vmatpush.msra.mxu0 %v1387
      %1498 = vmatpush.msra.mxu0 %v1386
      %1499 = vmatpush.msra.mxu0 %v1385
      %1500 = vmatmul.f32.gmra.mxu0 %v1344
      %v1501 = vpop.f32.mrf.mxu0
      %v1502 = vadd.f32 %v1479, %v1501
      %1503 = vmatmul.f32.gmra.mxu0 %v1349
      %v1504 = vpop.f32.mrf.mxu0
      %v1505 = vadd.f32 %v1482, %v1504
      %1506 = vdwg.mxu0
      %1507 = vmatpush.msra.mxu0 %v1416
      %1508 = vmatpush.msra.mxu0 %v1415
      %1509 = vmatpush.msra.mxu0 %v1414
      %1510 = vmatpush.msra.mxu0 %v1413
      %1511 = vmatpush.msra.mxu0 %v1412
      %1512 = vmatpush.msra.mxu0 %v1411
      %1513 = vmatpush.msra.mxu0 %v1410
      %1514 = vmatpush.msra.mxu0 %v1409
      %1515 = vmatpush.msra.mxu0 %v1408
      %1516 = vmatpush.msra.mxu0 %v1407
      %1517 = vmatpush.msra.mxu0 %v1406
      %1518 = vmatpush.msra.mxu0 %v1405
      %1519 = vmatpush.msra.mxu0 %v1404
      %1520 = vmatpush.msra.mxu0 %v1403
      %1521 = vmatpush.msra.mxu0 %v1402
      %1522 = vmatpush.msra.mxu0 %v1401
      %1523 = vmatmul.f32.gmra.mxu0 %v1345
      %v1524 = vpop.f32.mrf.mxu0
      %v1525 = vadd.f32 %v1502, %v1524
      %1526 = vmatmul.f32.gmra.mxu0 %v1350
      %v1527 = vpop.f32.mrf.mxu0
      %v1528 = vadd.f32 %v1505, %v1527
      %1529 = vdwg.mxu0
      %1530 = vmatpush.msra.mxu0 %v1432
      %1531 = vmatpush.msra.mxu0 %v1431
      %1532 = vmatpush.msra.mxu0 %v1430
      %1533 = vmatpush.msra.mxu0 %v1429
      %1534 = vmatpush.msra.mxu0 %v1428
      %1535 = vmatpush.msra.mxu0 %v1427
      %1536 = vmatpush.msra.mxu0 %v1426
      %1537 = vmatpush.msra.mxu0 %v1425
      %1538 = vmatpush.msra.mxu0 %v1424
      %1539 = vmatpush.msra.mxu0 %v1423
      %1540 = vmatpush.msra.mxu0 %v1422
      %1541 = vmatpush.msra.mxu0 %v1421
      %1542 = vmatpush.msra.mxu0 %v1420
      %1543 = vmatpush.msra.mxu0 %v1419
      %1544 = vmatpush.msra.mxu0 %v1418
      %1545 = vmatpush.msra.mxu0 %v1417
      %1546 = vmatmul.f32.gmra.mxu0 %v1346
      %v1547 = vpop.f32.mrf.mxu0
      %v1548 = vadd.f32 %v1525, %v1547
      %1549 = vmatmul.f32.gmra.mxu0 %v1351
      %v1550 = vpop.f32.mrf.mxu0
      %v1551 = vadd.f32 %v1528, %v1550
      %1552 = vdwg.mxu0
      %vm1553 = vcmp.ge.f32.partialorder %v1548, 0.0
      %vm1554 = vcmp.ge.f32.partialorder %v1551, 0.0
      %v1555 = vmul.f32 %v1548, 0.2
      %v1556 = vmul.f32 %v1551, 0.2
      %v1557 = vsel %vm1553, %v1548, %v1555
      %v1558 = vsel %vm1554, %v1551, %v1556
      %1559 = vst [vmem:[%s378] sm:$0xff] %v1557
      %1560 = vst [vmem:[%s378 + $0x8] sm:$0xff] %v1558
      %s1561 = scalar_lea.vmem %s2, 240
      %v1562 = vld [vmem:[%s1561] sm:$0xff]
      %v1563 = vld [vmem:[%s1561 + $0x8] sm:$0xff]
      %v1565 = vsel %vm398, %v1562, 0
      %v1568 = vsel %vm398, %v1563, 0
      %1570 = vmatpush.msra.mxu0 0.0
      %1571 = vmatpush.msra.mxu0 0.0
      %1572 = vmatpush.msra.mxu0 0.0
      %1573 = vmatpush.msra.mxu0 0.0
      %1574 = vmatpush.msra.mxu0 0.0
      %1575 = vmatpush.msra.mxu0 0.0
      %1576 = vmatpush.msra.mxu0 0.0
      %1577 = vmatpush.msra.mxu0 0.0
      %1578 = vmatpush.msra.mxu0 0.0
      %1579 = vmatpush.msra.mxu0 0.0
      %1580 = vmatpush.msra.mxu0 0.0
      %1581 = vmatpush.msra.mxu0 0.0
      %1582 = vmatpush.msra.mxu0 0.0
      %1583 = vmatpush.msra.mxu0 0.0
      %1584 = vmatpush.msra.mxu0 %v1558
      %1585 = vmatpush.msra.mxu0 %v1557
      %1586 = vmatmul.f32.gmra.mxu0 %v1565
      %v1587 = vpop.f32.mrf.mxu0
      %v1588 = vadd.f32 0.0, %v1587
      %1589 = vmatmul.f32.gmra.mxu0 %v1568
      %v1590 = vpop.f32.mrf.mxu0
      %v1591 = vadd.f32 0.0, %v1590
      %1592 = vdwg.mxu0
      %1593 = vst [vmem:[#allocation2] sm:$0xff] %v1588
      %1594 = vst [vmem:[#allocation2 + $0x28] sm:$0xff] %v1591
      %s1595 = scalar_lea.vmem %s2, 256
      %v1596 = vld [vmem:[%s1595] sm:$0xff]
      %v1597 = vld [vmem:[%s1595 + $0x8] sm:$0xff]
      %v1599 = vsel %vm398, %v1596, 0
      %v1602 = vsel %vm398, %v1597, 0
      %1604 = vmatpush.msra.mxu0 0.0
      %1605 = vmatpush.msra.mxu0 0.0
      %1606 = vmatpush.msra.mxu0 0.0
      %1607 = vmatpush.msra.mxu0 0.0
      %1608 = vmatpush.msra.mxu0 0.0
      %1609 = vmatpush.msra.mxu0 0.0
      %1610 = vmatpush.msra.mxu0 0.0
      %1611 = vmatpush.msra.mxu0 0.0
      %1612 = vmatpush.msra.mxu0 0.0
      %1613 = vmatpush.msra.mxu0 0.0
      %1614 = vmatpush.msra.mxu0 0.0
      %1615 = vmatpush.msra.mxu0 0.0
      %1616 = vmatpush.msra.mxu0 0.0
      %1617 = vmatpush.msra.mxu0 0.0
      %1618 = vmatpush.msra.mxu0 %v1558
      %1619 = vmatpush.msra.mxu0 %v1557
      %1620 = vmatmul.f32.gmra.mxu0 %v1599
      %v1621 = vpop.f32.mrf.mxu0
      %v1622 = vadd.f32 0.0, %v1621
      %1623 = vmatmul.f32.gmra.mxu0 %v1602
      %v1624 = vpop.f32.mrf.mxu0
      %v1625 = vadd.f32 0.0, %v1624
      %1626 = vdwg.mxu0
      %1627 = vst [vmem:[#allocation2 + $0x8] sm:$0xff] %v1622
      %1628 = vst [vmem:[#allocation2 + $0x30] sm:$0xff] %v1625
      %s1629 = scalar_lea.vmem %s2, 272
      %v1630 = vld [vmem:[%s1629] sm:$0xff]
      %v1631 = vld [vmem:[%s1629 + $0x8] sm:$0xff]
      %v1633 = vsel %vm398, %v1630, 0
      %v1636 = vsel %vm398, %v1631, 0
      %1638 = vmatpush.msra.mxu0 0.0
      %1639 = vmatpush.msra.mxu0 0.0
      %1640 = vmatpush.msra.mxu0 0.0
      %1641 = vmatpush.msra.mxu0 0.0
      %1642 = vmatpush.msra.mxu0 0.0
      %1643 = vmatpush.msra.mxu0 0.0
      %1644 = vmatpush.msra.mxu0 0.0
      %1645 = vmatpush.msra.mxu0 0.0
      %1646 = vmatpush.msra.mxu0 0.0
      %1647 = vmatpush.msra.mxu0 0.0
      %1648 = vmatpush.msra.mxu0 0.0
      %1649 = vmatpush.msra.mxu0 0.0
      %1650 = vmatpush.msra.mxu0 0.0
      %1651 = vmatpush.msra.mxu0 0.0
      %1652 = vmatpush.msra.mxu0 %v1558
      %1653 = vmatpush.msra.mxu0 %v1557
      %1654 = vmatmul.f32.gmra.mxu0 %v1633
      %v1655 = vpop.f32.mrf.mxu0
      %v1656 = vadd.f32 0.0, %v1655
      %1657 = vmatmul.f32.gmra.mxu0 %v1636
      %v1658 = vpop.f32.mrf.mxu0
      %v1659 = vadd.f32 0.0, %v1658
      %1660 = vdwg.mxu0
      %1661 = vst [vmem:[#allocation2 + $0x10] sm:$0xff] %v1656
      %1662 = vst [vmem:[#allocation2 + $0x38] sm:$0xff] %v1659
      %s1663 = scalar_lea.vmem %s2, 288
      %v1664 = vld [vmem:[%s1663] sm:$0xff]
      %v1665 = vld [vmem:[%s1663 + $0x8] sm:$0xff]
      %v1667 = vsel %vm398, %v1664, 0
      %v1670 = vsel %vm398, %v1665, 0
      %1672 = vmatpush.msra.mxu0 0.0
      %1673 = vmatpush.msra.mxu0 0.0
      %1674 = vmatpush.msra.mxu0 0.0
      %1675 = vmatpush.msra.mxu0 0.0
      %1676 = vmatpush.msra.mxu0 0.0
      %1677 = vmatpush.msra.mxu0 0.0
      %1678 = vmatpush.msra.mxu0 0.0
      %1679 = vmatpush.msra.mxu0 0.0
      %1680 = vmatpush.msra.mxu0 0.0
      %1681 = vmatpush.msra.mxu0 0.0
      %1682 = vmatpush.msra.mxu0 0.0
      %1683 = vmatpush.msra.mxu0 0.0
      %1684 = vmatpush.msra.mxu0 0.0
      %1685 = vmatpush.msra.mxu0 0.0
      %1686 = vmatpush.msra.mxu0 %v1558
      %1687 = vmatpush.msra.mxu0 %v1557
      %1688 = vmatmul.f32.gmra.mxu0 %v1667
      %v1689 = vpop.f32.mrf.mxu0
      %v1690 = vadd.f32 0.0, %v1689
      %1691 = vmatmul.f32.gmra.mxu0 %v1670
      %v1692 = vpop.f32.mrf.mxu0
      %v1693 = vadd.f32 0.0, %v1692
      %1694 = vdwg.mxu0
      %1695 = vst [vmem:[#allocation2 + $0x18] sm:$0xff] %v1690
      %1696 = vst [vmem:[#allocation2 + $0x40] sm:$0xff] %v1693
      %s1697 = scalar_lea.vmem %s2, 304
      %v1698 = vld [vmem:[%s1697] sm:$0xff]
      %v1699 = vld [vmem:[%s1697 + $0x8] sm:$0xff]
      %v1701 = vsel %vm398, %v1698, 0
      %v1704 = vsel %vm398, %v1699, 0
      %1706 = vmatpush.msra.mxu0 0.0
      %1707 = vmatpush.msra.mxu0 0.0
      %1708 = vmatpush.msra.mxu0 0.0
      %1709 = vmatpush.msra.mxu0 0.0
      %1710 = vmatpush.msra.mxu0 0.0
      %1711 = vmatpush.msra.mxu0 0.0
      %1712 = vmatpush.msra.mxu0 0.0
      %1713 = vmatpush.msra.mxu0 0.0
      %1714 = vmatpush.msra.mxu0 0.0
      %1715 = vmatpush.msra.mxu0 0.0
      %1716 = vmatpush.msra.mxu0 0.0
      %1717 = vmatpush.msra.mxu0 0.0
      %1718 = vmatpush.msra.mxu0 0.0
      %1719 = vmatpush.msra.mxu0 0.0
      %1720 = vmatpush.msra.mxu0 %v1558
      %1721 = vmatpush.msra.mxu0 %v1557
      %1722 = vmatmul.f32.gmra.mxu0 %v1701
      %v1723 = vpop.f32.mrf.mxu0
      %v1724 = vadd.f32 0.0, %v1723
      %1725 = vmatmul.f32.gmra.mxu0 %v1704
      %v1726 = vpop.f32.mrf.mxu0
      %v1727 = vadd.f32 0.0, %v1726
      %1728 = vdwg.mxu0
      %1729 = vst [vmem:[#allocation2 + $0x20] sm:$0xff] %v1724
      %1730 = vst [vmem:[#allocation2 + $0x48] sm:$0xff] %v1727
      %v1731 = vld [vmem:[#allocation2] sm:$0xff]
      %v1732 = vld [vmem:[#allocation2 + $0x8] sm:$0xff]
      %v1733 = vld [vmem:[#allocation2 + $0x10] sm:$0xff]
      %v1734 = vld [vmem:[#allocation2 + $0x18] sm:$0xff]
      %v1735 = vld [vmem:[#allocation2 + $0x20] sm:$0xff]
      %v1736 = vld [vmem:[#allocation2 + $0x28] sm:$0xff]
      %v1737 = vld [vmem:[#allocation2 + $0x30] sm:$0xff]
      %v1738 = vld [vmem:[#allocation2 + $0x38] sm:$0xff]
      %v1739 = vld [vmem:[#allocation2 + $0x40] sm:$0xff]
      %v1740 = vld [vmem:[#allocation2 + $0x48] sm:$0xff]
      %s1741 = scalar_lea.vmem %s1, 1920
      %v1742 = vld [vmem:[%s1741] sm:$0xff]
      %v1743 = vld [vmem:[%s1741 + $0x8] sm:$0xff]
      %v1744 = vld [vmem:[%s1741 + $0x10] sm:$0xff]
      %v1745 = vld [vmem:[%s1741 + $0x18] sm:$0xff]
      %v1746 = vld [vmem:[%s1741 + $0x20] sm:$0xff]
      %v1747 = vld [vmem:[%s1741 + $0x28] sm:$0xff]
      %v1748 = vld [vmem:[%s1741 + $0x30] sm:$0xff]
      %v1749 = vld [vmem:[%s1741 + $0x38] sm:$0xff]
      %v1750 = vld [vmem:[%s1741 + $0x40] sm:$0xff]
      %v1751 = vld [vmem:[%s1741 + $0x48] sm:$0xff]
      %v1752 = vld [vmem:[%s1741 + $0x50] sm:$0xff]
      %v1753 = vld [vmem:[%s1741 + $0x58] sm:$0xff]
      %v1754 = vld [vmem:[%s1741 + $0x60] sm:$0xff]
      %v1755 = vld [vmem:[%s1741 + $0x68] sm:$0xff]
      %v1756 = vld [vmem:[%s1741 + $0x70] sm:$0xff]
      %v1757 = vld [vmem:[%s1741 + $0x78] sm:$0xff]
      %v1758 = vld [vmem:[%s1741 + $0x80] sm:$0xff]
      %v1759 = vld [vmem:[%s1741 + $0x88] sm:$0xff]
      %v1760 = vld [vmem:[%s1741 + $0x90] sm:$0xff]
      %v1761 = vld [vmem:[%s1741 + $0x98] sm:$0xff]
      %v1762 = vld [vmem:[%s1741 + $0xa0] sm:$0xff]
      %v1763 = vld [vmem:[%s1741 + $0xa8] sm:$0xff]
      %v1764 = vld [vmem:[%s1741 + $0xb0] sm:$0xff]
      %v1765 = vld [vmem:[%s1741 + $0xb8] sm:$0xff]
      %v1766 = vld [vmem:[%s1741 + $0xc0] sm:$0xff]
      %v1767 = vld [vmem:[%s1741 + $0xc8] sm:$0xff]
      %v1768 = vld [vmem:[%s1741 + $0xd0] sm:$0xff]
      %v1769 = vld [vmem:[%s1741 + $0xd8] sm:$0xff]
      %v1770 = vld [vmem:[%s1741 + $0xe0] sm:$0xff]
      %v1771 = vld [vmem:[%s1741 + $0xe8] sm:$0xff]
      %v1772 = vld [vmem:[%s1741 + $0xf0] sm:$0xff]
      %v1773 = vld [vmem:[%s1741 + $0xf8] sm:$0xff]
      %v1774 = vld [vmem:[%s1741 + $0x100] sm:$0xff]
      %v1775 = vld [vmem:[%s1741 + $0x108] sm:$0xff]
      %v1776 = vld [vmem:[%s1741 + $0x110] sm:$0xff]
      %v1777 = vld [vmem:[%s1741 + $0x118] sm:$0xff]
      %v1778 = vld [vmem:[%s1741 + $0x120] sm:$0xff]
      %v1779 = vld [vmem:[%s1741 + $0x128] sm:$0xff]
      %v1780 = vld [vmem:[%s1741 + $0x130] sm:$0xff]
      %v1781 = vld [vmem:[%s1741 + $0x138] sm:$0xff]
      %v1782 = vld [vmem:[%s1741 + $0x140] sm:$0xff]
      %v1783 = vld [vmem:[%s1741 + $0x148] sm:$0xff]
      %v1784 = vld [vmem:[%s1741 + $0x150] sm:$0xff]
      %v1785 = vld [vmem:[%s1741 + $0x158] sm:$0xff]
      %v1786 = vld [vmem:[%s1741 + $0x160] sm:$0xff]
      %v1787 = vld [vmem:[%s1741 + $0x168] sm:$0xff]
      %v1788 = vld [vmem:[%s1741 + $0x170] sm:$0xff]
      %v1789 = vld [vmem:[%s1741 + $0x178] sm:$0xff]
      %v1790 = vld [vmem:[%s1741 + $0x180] sm:$0xff]
      %v1791 = vld [vmem:[%s1741 + $0x188] sm:$0xff]
      %v1792 = vld [vmem:[%s1741 + $0x190] sm:$0xff]
      %v1793 = vld [vmem:[%s1741 + $0x198] sm:$0xff]
      %v1794 = vld [vmem:[%s1741 + $0x1a0] sm:$0xff]
      %v1795 = vld [vmem:[%s1741 + $0x1a8] sm:$0xff]
      %v1796 = vld [vmem:[%s1741 + $0x1b0] sm:$0xff]
      %v1797 = vld [vmem:[%s1741 + $0x1b8] sm:$0xff]
      %v1798 = vld [vmem:[%s1741 + $0x1c0] sm:$0xff]
      %v1799 = vld [vmem:[%s1741 + $0x1c8] sm:$0xff]
      %v1800 = vld [vmem:[%s1741 + $0x1d0] sm:$0xff]
      %v1801 = vld [vmem:[%s1741 + $0x1d8] sm:$0xff]
      %v1802 = vld [vmem:[%s1741 + $0x1e0] sm:$0xff]
      %v1803 = vld [vmem:[%s1741 + $0x1e8] sm:$0xff]
      %v1804 = vld [vmem:[%s1741 + $0x1f0] sm:$0xff]
      %v1805 = vld [vmem:[%s1741 + $0x1f8] sm:$0xff]
      %v1806 = vld [vmem:[%s1741 + $0x200] sm:$0xff]
      %v1807 = vld [vmem:[%s1741 + $0x208] sm:$0xff]
      %v1808 = vld [vmem:[%s1741 + $0x210] sm:$0xff]
      %v1809 = vld [vmem:[%s1741 + $0x218] sm:$0xff]
      %v1810 = vld [vmem:[%s1741 + $0x220] sm:$0xff]
      %v1811 = vld [vmem:[%s1741 + $0x228] sm:$0xff]
      %v1812 = vld [vmem:[%s1741 + $0x230] sm:$0xff]
      %v1813 = vld [vmem:[%s1741 + $0x238] sm:$0xff]
      %v1814 = vld [vmem:[%s1741 + $0x240] sm:$0xff]
      %v1815 = vld [vmem:[%s1741 + $0x248] sm:$0xff]
      %v1816 = vld [vmem:[%s1741 + $0x250] sm:$0xff]
      %v1817 = vld [vmem:[%s1741 + $0x258] sm:$0xff]
      %v1818 = vld [vmem:[%s1741 + $0x260] sm:$0xff]
      %v1819 = vld [vmem:[%s1741 + $0x268] sm:$0xff]
      %v1820 = vld [vmem:[%s1741 + $0x270] sm:$0xff]
      %v1821 = vld [vmem:[%s1741 + $0x278] sm:$0xff]
      %s1822 = scalar_lea.vmem %s3, 3
      %v1823 = vld [vmem:[%s1822] sm:$0x1]
      %v1825 = vperm.slane %v1823, 0
      %1827 = vmatpush.msra.mxu0 %v1757
      %1828 = vmatpush.msra.mxu0 %v1756
      %1829 = vmatpush.msra.mxu0 %v1755
      %1830 = vmatpush.msra.mxu0 %v1754
      %1831 = vmatpush.msra.mxu0 %v1753
      %1832 = vmatpush.msra.mxu0 %v1752
      %1833 = vmatpush.msra.mxu0 %v1751
      %1834 = vmatpush.msra.mxu0 %v1750
      %1835 = vmatpush.msra.mxu0 %v1749
      %1836 = vmatpush.msra.mxu0 %v1748
      %1837 = vmatpush.msra.mxu0 %v1747
      %1838 = vmatpush.msra.mxu0 %v1746
      %1839 = vmatpush.msra.mxu0 %v1745
      %1840 = vmatpush.msra.mxu0 %v1744
      %1841 = vmatpush.msra.mxu0 %v1743
      %1842 = vmatpush.msra.mxu0 %v1742
      %1843 = vmatmul.f32.gmra.mxu0 %v1731
      %v1844 = vpop.f32.mrf.mxu0
      %v1845 = vadd.f32 %v1825, %v1844
      %1846 = vmatmul.f32.gmra.mxu0 %v1736
      %v1847 = vpop.f32.mrf.mxu0
      %v1848 = vadd.f32 %v1825, %v1847
      %1849 = vdwg.mxu0
      %1850 = vmatpush.msra.mxu0 %v1773
      %1851 = vmatpush.msra.mxu0 %v1772
      %1852 = vmatpush.msra.mxu0 %v1771
      %1853 = vmatpush.msra.mxu0 %v1770
      %1854 = vmatpush.msra.mxu0 %v1769
      %1855 = vmatpush.msra.mxu0 %v1768
      %1856 = vmatpush.msra.mxu0 %v1767
      %1857 = vmatpush.msra.mxu0 %v1766
      %1858 = vmatpush.msra.mxu0 %v1765
      %1859 = vmatpush.msra.mxu0 %v1764
      %1860 = vmatpush.msra.mxu0 %v1763
      %1861 = vmatpush.msra.mxu0 %v1762
      %1862 = vmatpush.msra.mxu0 %v1761
      %1863 = vmatpush.msra.mxu0 %v1760
      %1864 = vmatpush.msra.mxu0 %v1759
      %1865 = vmatpush.msra.mxu0 %v1758
      %1866 = vmatmul.f32.gmra.mxu0 %v1732
      %v1867 = vpop.f32.mrf.mxu0
      %v1868 = vadd.f32 %v1845, %v1867
      %1869 = vmatmul.f32.gmra.mxu0 %v1737
      %v1870 = vpop.f32.mrf.mxu0
      %v1871 = vadd.f32 %v1848, %v1870
      %1872 = vdwg.mxu0
      %1873 = vmatpush.msra.mxu0 %v1789
      %1874 = vmatpush.msra.mxu0 %v1788
      %1875 = vmatpush.msra.mxu0 %v1787
      %1876 = vmatpush.msra.mxu0 %v1786
      %1877 = vmatpush.msra.mxu0 %v1785
      %1878 = vmatpush.msra.mxu0 %v1784
      %1879 = vmatpush.msra.mxu0 %v1783
      %1880 = vmatpush.msra.mxu0 %v1782
      %1881 = vmatpush.msra.mxu0 %v1781
      %1882 = vmatpush.msra.mxu0 %v1780
      %1883 = vmatpush.msra.mxu0 %v1779
      %1884 = vmatpush.msra.mxu0 %v1778
      %1885 = vmatpush.msra.mxu0 %v1777
      %1886 = vmatpush.msra.mxu0 %v1776
      %1887 = vmatpush.msra.mxu0 %v1775
      %1888 = vmatpush.msra.mxu0 %v1774
      %1889 = vmatmul.f32.gmra.mxu0 %v1733
      %v1890 = vpop.f32.mrf.mxu0
      %v1891 = vadd.f32 %v1868, %v1890
      %1892 = vmatmul.f32.gmra.mxu0 %v1738
      %v1893 = vpop.f32.mrf.mxu0
      %v1894 = vadd.f32 %v1871, %v1893
      %1895 = vdwg.mxu0
      %1896 = vmatpush.msra.mxu0 %v1805
      %1897 = vmatpush.msra.mxu0 %v1804
      %1898 = vmatpush.msra.mxu0 %v1803
      %1899 = vmatpush.msra.mxu0 %v1802
      %1900 = vmatpush.msra.mxu0 %v1801
      %1901 = vmatpush.msra.mxu0 %v1800
      %1902 = vmatpush.msra.mxu0 %v1799
      %1903 = vmatpush.msra.mxu0 %v1798
      %1904 = vmatpush.msra.mxu0 %v1797
      %1905 = vmatpush.msra.mxu0 %v1796
      %1906 = vmatpush.msra.mxu0 %v1795
      %1907 = vmatpush.msra.mxu0 %v1794
      %1908 = vmatpush.msra.mxu0 %v1793
      %1909 = vmatpush.msra.mxu0 %v1792
      %1910 = vmatpush.msra.mxu0 %v1791
      %1911 = vmatpush.msra.mxu0 %v1790
      %1912 = vmatmul.f32.gmra.mxu0 %v1734
      %v1913 = vpop.f32.mrf.mxu0
      %v1914 = vadd.f32 %v1891, %v1913
      %1915 = vmatmul.f32.gmra.mxu0 %v1739
      %v1916 = vpop.f32.mrf.mxu0
      %v1917 = vadd.f32 %v1894, %v1916
      %1918 = vdwg.mxu0
      %1919 = vmatpush.msra.mxu0 %v1821
      %1920 = vmatpush.msra.mxu0 %v1820
      %1921 = vmatpush.msra.mxu0 %v1819
      %1922 = vmatpush.msra.mxu0 %v1818
      %1923 = vmatpush.msra.mxu0 %v1817
      %1924 = vmatpush.msra.mxu0 %v1816
      %1925 = vmatpush.msra.mxu0 %v1815
      %1926 = vmatpush.msra.mxu0 %v1814
      %1927 = vmatpush.msra.mxu0 %v1813
      %1928 = vmatpush.msra.mxu0 %v1812
      %1929 = vmatpush.msra.mxu0 %v1811
      %1930 = vmatpush.msra.mxu0 %v1810
      %1931 = vmatpush.msra.mxu0 %v1809
      %1932 = vmatpush.msra.mxu0 %v1808
      %1933 = vmatpush.msra.mxu0 %v1807
      %1934 = vmatpush.msra.mxu0 %v1806
      %1935 = vmatmul.f32.gmra.mxu0 %v1735
      %v1936 = vpop.f32.mrf.mxu0
      %v1937 = vadd.f32 %v1914, %v1936
      %1938 = vmatmul.f32.gmra.mxu0 %v1740
      %v1939 = vpop.f32.mrf.mxu0
      %v1940 = vadd.f32 %v1917, %v1939
      %1941 = vdwg.mxu0
      %vm1942 = vcmp.ge.f32.partialorder %v1937, 0.0
      %vm1943 = vcmp.ge.f32.partialorder %v1940, 0.0
      %v1944 = vmul.f32 %v1937, 0.2
      %v1945 = vmul.f32 %v1940, 0.2
      %v1946 = vsel %vm1942, %v1937, %v1944
      %v1947 = vsel %vm1943, %v1940, %v1945
      %1948 = vst [vmem:[%s383] sm:$0xff] %v1946
      %1949 = vst [vmem:[%s383 + $0x8] sm:$0xff] %v1947
      %s1950 = scalar_lea.vmem %s2, 320
      %v1951 = vld [vmem:[%s1950] sm:$0xff]
      %v1952 = vld [vmem:[%s1950 + $0x8] sm:$0xff]
      %v1954 = vsel %vm398, %v1951, 0
      %v1957 = vsel %vm398, %v1952, 0
      %1959 = vmatpush.msra.mxu0 0.0
      %1960 = vmatpush.msra.mxu0 0.0
      %1961 = vmatpush.msra.mxu0 0.0
      %1962 = vmatpush.msra.mxu0 0.0
      %1963 = vmatpush.msra.mxu0 0.0
      %1964 = vmatpush.msra.mxu0 0.0
      %1965 = vmatpush.msra.mxu0 0.0
      %1966 = vmatpush.msra.mxu0 0.0
      %1967 = vmatpush.msra.mxu0 0.0
      %1968 = vmatpush.msra.mxu0 0.0
      %1969 = vmatpush.msra.mxu0 0.0
      %1970 = vmatpush.msra.mxu0 0.0
      %1971 = vmatpush.msra.mxu0 0.0
      %1972 = vmatpush.msra.mxu0 0.0
      %1973 = vmatpush.msra.mxu0 %v1947
      %1974 = vmatpush.msra.mxu0 %v1946
      %1975 = vmatmul.f32.gmra.mxu0 %v1954
      %v1976 = vpop.f32.mrf.mxu0
      %v1977 = vadd.f32 0.0, %v1976
      %1978 = vmatmul.f32.gmra.mxu0 %v1957
      %v1979 = vpop.f32.mrf.mxu0
      %v1980 = vadd.f32 0.0, %v1979
      %1981 = vdwg.mxu0
      %1982 = vst [vmem:[#allocation2] sm:$0xff] %v1977
      %1983 = vst [vmem:[#allocation2 + $0x28] sm:$0xff] %v1980
      %s1984 = scalar_lea.vmem %s2, 336
      %v1985 = vld [vmem:[%s1984] sm:$0xff]
      %v1986 = vld [vmem:[%s1984 + $0x8] sm:$0xff]
      %v1988 = vsel %vm398, %v1985, 0
      %v1991 = vsel %vm398, %v1986, 0
      %1993 = vmatpush.msra.mxu0 0.0
      %1994 = vmatpush.msra.mxu0 0.0
      %1995 = vmatpush.msra.mxu0 0.0
      %1996 = vmatpush.msra.mxu0 0.0
      %1997 = vmatpush.msra.mxu0 0.0
      %1998 = vmatpush.msra.mxu0 0.0
      %1999 = vmatpush.msra.mxu0 0.0
      %2000 = vmatpush.msra.mxu0 0.0
      %2001 = vmatpush.msra.mxu0 0.0
      %2002 = vmatpush.msra.mxu0 0.0
      %2003 = vmatpush.msra.mxu0 0.0
      %2004 = vmatpush.msra.mxu0 0.0
      %2005 = vmatpush.msra.mxu0 0.0
      %2006 = vmatpush.msra.mxu0 0.0
      %2007 = vmatpush.msra.mxu0 %v1947
      %2008 = vmatpush.msra.mxu0 %v1946
      %2009 = vmatmul.f32.gmra.mxu0 %v1988
      %v2010 = vpop.f32.mrf.mxu0
      %v2011 = vadd.f32 0.0, %v2010
      %2012 = vmatmul.f32.gmra.mxu0 %v1991
      %v2013 = vpop.f32.mrf.mxu0
      %v2014 = vadd.f32 0.0, %v2013
      %2015 = vdwg.mxu0
      %2016 = vst [vmem:[#allocation2 + $0x8] sm:$0xff] %v2011
      %2017 = vst [vmem:[#allocation2 + $0x30] sm:$0xff] %v2014
      %s2018 = scalar_lea.vmem %s2, 352
      %v2019 = vld [vmem:[%s2018] sm:$0xff]
      %v2020 = vld [vmem:[%s2018 + $0x8] sm:$0xff]
      %v2022 = vsel %vm398, %v2019, 0
      %v2025 = vsel %vm398, %v2020, 0
      %2027 = vmatpush.msra.mxu0 0.0
      %2028 = vmatpush.msra.mxu0 0.0
      %2029 = vmatpush.msra.mxu0 0.0
      %2030 = vmatpush.msra.mxu0 0.0
      %2031 = vmatpush.msra.mxu0 0.0
      %2032 = vmatpush.msra.mxu0 0.0
      %2033 = vmatpush.msra.mxu0 0.0
      %2034 = vmatpush.msra.mxu0 0.0
      %2035 = vmatpush.msra.mxu0 0.0
      %2036 = vmatpush.msra.mxu0 0.0
      %2037 = vmatpush.msra.mxu0 0.0
      %2038 = vmatpush.msra.mxu0 0.0
      %2039 = vmatpush.msra.mxu0 0.0
      %2040 = vmatpush.msra.mxu0 0.0
      %2041 = vmatpush.msra.mxu0 %v1947
      %2042 = vmatpush.msra.mxu0 %v1946
      %2043 = vmatmul.f32.gmra.mxu0 %v2022
      %v2044 = vpop.f32.mrf.mxu0
      %v2045 = vadd.f32 0.0, %v2044
      %2046 = vmatmul.f32.gmra.mxu0 %v2025
      %v2047 = vpop.f32.mrf.mxu0
      %v2048 = vadd.f32 0.0, %v2047
      %2049 = vdwg.mxu0
      %2050 = vst [vmem:[#allocation2 + $0x10] sm:$0xff] %v2045
      %2051 = vst [vmem:[#allocation2 + $0x38] sm:$0xff] %v2048
      %s2052 = scalar_lea.vmem %s2, 368
      %v2053 = vld [vmem:[%s2052] sm:$0xff]
      %v2054 = vld [vmem:[%s2052 + $0x8] sm:$0xff]
      %v2056 = vsel %vm398, %v2053, 0
      %v2059 = vsel %vm398, %v2054, 0
      %2061 = vmatpush.msra.mxu0 0.0
      %2062 = vmatpush.msra.mxu0 0.0
      %2063 = vmatpush.msra.mxu0 0.0
      %2064 = vmatpush.msra.mxu0 0.0
      %2065 = vmatpush.msra.mxu0 0.0
      %2066 = vmatpush.msra.mxu0 0.0
      %2067 = vmatpush.msra.mxu0 0.0
      %2068 = vmatpush.msra.mxu0 0.0
      %2069 = vmatpush.msra.mxu0 0.0
      %2070 = vmatpush.msra.mxu0 0.0
      %2071 = vmatpush.msra.mxu0 0.0
      %2072 = vmatpush.msra.mxu0 0.0
      %2073 = vmatpush.msra.mxu0 0.0
      %2074 = vmatpush.msra.mxu0 0.0
      %2075 = vmatpush.msra.mxu0 %v1947
      %2076 = vmatpush.msra.mxu0 %v1946
      %2077 = vmatmul.f32.gmra.mxu0 %v2056
      %v2078 = vpop.f32.mrf.mxu0
      %v2079 = vadd.f32 0.0, %v2078
      %2080 = vmatmul.f32.gmra.mxu0 %v2059
      %v2081 = vpop.f32.mrf.mxu0
      %v2082 = vadd.f32 0.0, %v2081
      %2083 = vdwg.mxu0
      %2084 = vst [vmem:[#allocation2 + $0x18] sm:$0xff] %v2079
      %2085 = vst [vmem:[#allocation2 + $0x40] sm:$0xff] %v2082
      %s2086 = scalar_lea.vmem %s2, 384
      %v2087 = vld [vmem:[%s2086] sm:$0xff]
      %v2088 = vld [vmem:[%s2086 + $0x8] sm:$0xff]
      %v2090 = vsel %vm398, %v2087, 0
      %v2093 = vsel %vm398, %v2088, 0
      %2095 = vmatpush.msra.mxu0 0.0
      %2096 = vmatpush.msra.mxu0 0.0
      %2097 = vmatpush.msra.mxu0 0.0
      %2098 = vmatpush.msra.mxu0 0.0
      %2099 = vmatpush.msra.mxu0 0.0
      %2100 = vmatpush.msra.mxu0 0.0
      %2101 = vmatpush.msra.mxu0 0.0
      %2102 = vmatpush.msra.mxu0 0.0
      %2103 = vmatpush.msra.mxu0 0.0
      %2104 = vmatpush.msra.mxu0 0.0
      %2105 = vmatpush.msra.mxu0 0.0
      %2106 = vmatpush.msra.mxu0 0.0
      %2107 = vmatpush.msra.mxu0 0.0
      %2108 = vmatpush.msra.mxu0 0.0
      %2109 = vmatpush.msra.mxu0 %v1947
      %2110 = vmatpush.msra.mxu0 %v1946
      %2111 = vmatmul.f32.gmra.mxu0 %v2090
      %v2112 = vpop.f32.mrf.mxu0
      %v2113 = vadd.f32 0.0, %v2112
      %2114 = vmatmul.f32.gmra.mxu0 %v2093
      %v2115 = vpop.f32.mrf.mxu0
      %v2116 = vadd.f32 0.0, %v2115
      %2117 = vdwg.mxu0
      %2118 = vst [vmem:[#allocation2 + $0x20] sm:$0xff] %v2113
      %2119 = vst [vmem:[#allocation2 + $0x48] sm:$0xff] %v2116
      %v2120 = vld [vmem:[#allocation2] sm:$0xff]
      %v2121 = vld [vmem:[#allocation2 + $0x8] sm:$0xff]
      %v2122 = vld [vmem:[#allocation2 + $0x10] sm:$0xff]
      %v2123 = vld [vmem:[#allocation2 + $0x18] sm:$0xff]
      %v2124 = vld [vmem:[#allocation2 + $0x20] sm:$0xff]
      %v2125 = vld [vmem:[#allocation2 + $0x28] sm:$0xff]
      %v2126 = vld [vmem:[#allocation2 + $0x30] sm:$0xff]
      %v2127 = vld [vmem:[#allocation2 + $0x38] sm:$0xff]
      %v2128 = vld [vmem:[#allocation2 + $0x40] sm:$0xff]
      %v2129 = vld [vmem:[#allocation2 + $0x48] sm:$0xff]
      %s2130 = scalar_lea.vmem %s1, 2560
      %v2131 = vld [vmem:[%s2130] sm:$0xff]
      %v2132 = vld [vmem:[%s2130 + $0x8] sm:$0xff]
      %v2133 = vld [vmem:[%s2130 + $0x10] sm:$0xff]
      %v2134 = vld [vmem:[%s2130 + $0x18] sm:$0xff]
      %v2135 = vld [vmem:[%s2130 + $0x20] sm:$0xff]
      %v2136 = vld [vmem:[%s2130 + $0x28] sm:$0xff]
      %v2137 = vld [vmem:[%s2130 + $0x30] sm:$0xff]
      %v2138 = vld [vmem:[%s2130 + $0x38] sm:$0xff]
      %v2139 = vld [vmem:[%s2130 + $0x40] sm:$0xff]
      %v2140 = vld [vmem:[%s2130 + $0x48] sm:$0xff]
      %v2141 = vld [vmem:[%s2130 + $0x50] sm:$0xff]
      %v2142 = vld [vmem:[%s2130 + $0x58] sm:$0xff]
      %v2143 = vld [vmem:[%s2130 + $0x60] sm:$0xff]
      %v2144 = vld [vmem:[%s2130 + $0x68] sm:$0xff]
      %v2145 = vld [vmem:[%s2130 + $0x70] sm:$0xff]
      %v2146 = vld [vmem:[%s2130 + $0x78] sm:$0xff]
      %v2147 = vld [vmem:[%s2130 + $0x80] sm:$0xff]
      %v2148 = vld [vmem:[%s2130 + $0x88] sm:$0xff]
      %v2149 = vld [vmem:[%s2130 + $0x90] sm:$0xff]
      %v2150 = vld [vmem:[%s2130 + $0x98] sm:$0xff]
      %v2151 = vld [vmem:[%s2130 + $0xa0] sm:$0xff]
      %v2152 = vld [vmem:[%s2130 + $0xa8] sm:$0xff]
      %v2153 = vld [vmem:[%s2130 + $0xb0] sm:$0xff]
      %v2154 = vld [vmem:[%s2130 + $0xb8] sm:$0xff]
      %v2155 = vld [vmem:[%s2130 + $0xc0] sm:$0xff]
      %v2156 = vld [vmem:[%s2130 + $0xc8] sm:$0xff]
      %v2157 = vld [vmem:[%s2130 + $0xd0] sm:$0xff]
      %v2158 = vld [vmem:[%s2130 + $0xd8] sm:$0xff]
      %v2159 = vld [vmem:[%s2130 + $0xe0] sm:$0xff]
      %v2160 = vld [vmem:[%s2130 + $0xe8] sm:$0xff]
      %v2161 = vld [vmem:[%s2130 + $0xf0] sm:$0xff]
      %v2162 = vld [vmem:[%s2130 + $0xf8] sm:$0xff]
      %v2163 = vld [vmem:[%s2130 + $0x100] sm:$0xff]
      %v2164 = vld [vmem:[%s2130 + $0x108] sm:$0xff]
      %v2165 = vld [vmem:[%s2130 + $0x110] sm:$0xff]
      %v2166 = vld [vmem:[%s2130 + $0x118] sm:$0xff]
      %v2167 = vld [vmem:[%s2130 + $0x120] sm:$0xff]
      %v2168 = vld [vmem:[%s2130 + $0x128] sm:$0xff]
      %v2169 = vld [vmem:[%s2130 + $0x130] sm:$0xff]
      %v2170 = vld [vmem:[%s2130 + $0x138] sm:$0xff]
      %v2171 = vld [vmem:[%s2130 + $0x140] sm:$0xff]
      %v2172 = vld [vmem:[%s2130 + $0x148] sm:$0xff]
      %v2173 = vld [vmem:[%s2130 + $0x150] sm:$0xff]
      %v2174 = vld [vmem:[%s2130 + $0x158] sm:$0xff]
      %v2175 = vld [vmem:[%s2130 + $0x160] sm:$0xff]
      %v2176 = vld [vmem:[%s2130 + $0x168] sm:$0xff]
      %v2177 = vld [vmem:[%s2130 + $0x170] sm:$0xff]
      %v2178 = vld [vmem:[%s2130 + $0x178] sm:$0xff]
      %v2179 = vld [vmem:[%s2130 + $0x180] sm:$0xff]
      %v2180 = vld [vmem:[%s2130 + $0x188] sm:$0xff]
      %v2181 = vld [vmem:[%s2130 + $0x190] sm:$0xff]
      %v2182 = vld [vmem:[%s2130 + $0x198] sm:$0xff]
      %v2183 = vld [vmem:[%s2130 + $0x1a0] sm:$0xff]
      %v2184 = vld [vmem:[%s2130 + $0x1a8] sm:$0xff]
      %v2185 = vld [vmem:[%s2130 + $0x1b0] sm:$0xff]
      %v2186 = vld [vmem:[%s2130 + $0x1b8] sm:$0xff]
      %v2187 = vld [vmem:[%s2130 + $0x1c0] sm:$0xff]
      %v2188 = vld [vmem:[%s2130 + $0x1c8] sm:$0xff]
      %v2189 = vld [vmem:[%s2130 + $0x1d0] sm:$0xff]
      %v2190 = vld [vmem:[%s2130 + $0x1d8] sm:$0xff]
      %v2191 = vld [vmem:[%s2130 + $0x1e0] sm:$0xff]
      %v2192 = vld [vmem:[%s2130 + $0x1e8] sm:$0xff]
      %v2193 = vld [vmem:[%s2130 + $0x1f0] sm:$0xff]
      %v2194 = vld [vmem:[%s2130 + $0x1f8] sm:$0xff]
      %v2195 = vld [vmem:[%s2130 + $0x200] sm:$0xff]
      %v2196 = vld [vmem:[%s2130 + $0x208] sm:$0xff]
      %v2197 = vld [vmem:[%s2130 + $0x210] sm:$0xff]
      %v2198 = vld [vmem:[%s2130 + $0x218] sm:$0xff]
      %v2199 = vld [vmem:[%s2130 + $0x220] sm:$0xff]
      %v2200 = vld [vmem:[%s2130 + $0x228] sm:$0xff]
      %v2201 = vld [vmem:[%s2130 + $0x230] sm:$0xff]
      %v2202 = vld [vmem:[%s2130 + $0x238] sm:$0xff]
      %v2203 = vld [vmem:[%s2130 + $0x240] sm:$0xff]
      %v2204 = vld [vmem:[%s2130 + $0x248] sm:$0xff]
      %v2205 = vld [vmem:[%s2130 + $0x250] sm:$0xff]
      %v2206 = vld [vmem:[%s2130 + $0x258] sm:$0xff]
      %v2207 = vld [vmem:[%s2130 + $0x260] sm:$0xff]
      %v2208 = vld [vmem:[%s2130 + $0x268] sm:$0xff]
      %v2209 = vld [vmem:[%s2130 + $0x270] sm:$0xff]
      %v2210 = vld [vmem:[%s2130 + $0x278] sm:$0xff]
      %s2211 = scalar_lea.vmem %s3, 4
      %v2212 = vld [vmem:[%s2211] sm:$0x1]
      %v2214 = vperm.slane %v2212, 0
      %2216 = vmatpush.msra.mxu0 %v2146
      %2217 = vmatpush.msra.mxu0 %v2145
      %2218 = vmatpush.msra.mxu0 %v2144
      %2219 = vmatpush.msra.mxu0 %v2143
      %2220 = vmatpush.msra.mxu0 %v2142
      %2221 = vmatpush.msra.mxu0 %v2141
      %2222 = vmatpush.msra.mxu0 %v2140
      %2223 = vmatpush.msra.mxu0 %v2139
      %2224 = vmatpush.msra.mxu0 %v2138
      %2225 = vmatpush.msra.mxu0 %v2137
      %2226 = vmatpush.msra.mxu0 %v2136
      %2227 = vmatpush.msra.mxu0 %v2135
      %2228 = vmatpush.msra.mxu0 %v2134
      %2229 = vmatpush.msra.mxu0 %v2133
      %2230 = vmatpush.msra.mxu0 %v2132
      %2231 = vmatpush.msra.mxu0 %v2131
      %2232 = vmatmul.f32.gmra.mxu0 %v2120
      %v2233 = vpop.f32.mrf.mxu0
      %v2234 = vadd.f32 %v2214, %v2233
      %2235 = vmatmul.f32.gmra.mxu0 %v2125
      %v2236 = vpop.f32.mrf.mxu0
      %v2237 = vadd.f32 %v2214, %v2236
      %2238 = vdwg.mxu0
      %2239 = vmatpush.msra.mxu0 %v2162
      %2240 = vmatpush.msra.mxu0 %v2161
      %2241 = vmatpush.msra.mxu0 %v2160
      %2242 = vmatpush.msra.mxu0 %v2159
      %2243 = vmatpush.msra.mxu0 %v2158
      %2244 = vmatpush.msra.mxu0 %v2157
      %2245 = vmatpush.msra.mxu0 %v2156
      %2246 = vmatpush.msra.mxu0 %v2155
      %2247 = vmatpush.msra.mxu0 %v2154
      %2248 = vmatpush.msra.mxu0 %v2153
      %2249 = vmatpush.msra.mxu0 %v2152
      %2250 = vmatpush.msra.mxu0 %v2151
      %2251 = vmatpush.msra.mxu0 %v2150
      %2252 = vmatpush.msra.mxu0 %v2149
      %2253 = vmatpush.msra.mxu0 %v2148
      %2254 = vmatpush.msra.mxu0 %v2147
      %2255 = vmatmul.f32.gmra.mxu0 %v2121
      %v2256 = vpop.f32.mrf.mxu0
      %v2257 = vadd.f32 %v2234, %v2256
      %2258 = vmatmul.f32.gmra.mxu0 %v2126
      %v2259 = vpop.f32.mrf.mxu0
      %v2260 = vadd.f32 %v2237, %v2259
      %2261 = vdwg.mxu0
      %2262 = vmatpush.msra.mxu0 %v2178
      %2263 = vmatpush.msra.mxu0 %v2177
      %2264 = vmatpush.msra.mxu0 %v2176
      %2265 = vmatpush.msra.mxu0 %v2175
      %2266 = vmatpush.msra.mxu0 %v2174
      %2267 = vmatpush.msra.mxu0 %v2173
      %2268 = vmatpush.msra.mxu0 %v2172
      %2269 = vmatpush.msra.mxu0 %v2171
      %2270 = vmatpush.msra.mxu0 %v2170
      %2271 = vmatpush.msra.mxu0 %v2169
      %2272 = vmatpush.msra.mxu0 %v2168
      %2273 = vmatpush.msra.mxu0 %v2167
      %2274 = vmatpush.msra.mxu0 %v2166
      %2275 = vmatpush.msra.mxu0 %v2165
      %2276 = vmatpush.msra.mxu0 %v2164
      %2277 = vmatpush.msra.mxu0 %v2163
      %2278 = vmatmul.f32.gmra.mxu0 %v2122
      %v2279 = vpop.f32.mrf.mxu0
      %v2280 = vadd.f32 %v2257, %v2279
      %2281 = vmatmul.f32.gmra.mxu0 %v2127
      %v2282 = vpop.f32.mrf.mxu0
      %v2283 = vadd.f32 %v2260, %v2282
      %2284 = vdwg.mxu0
      %2285 = vmatpush.msra.mxu0 %v2194
      %2286 = vmatpush.msra.mxu0 %v2193
      %2287 = vmatpush.msra.mxu0 %v2192
      %2288 = vmatpush.msra.mxu0 %v2191
      %2289 = vmatpush.msra.mxu0 %v2190
      %2290 = vmatpush.msra.mxu0 %v2189
      %2291 = vmatpush.msra.mxu0 %v2188
      %2292 = vmatpush.msra.mxu0 %v2187
      %2293 = vmatpush.msra.mxu0 %v2186
      %2294 = vmatpush.msra.mxu0 %v2185
      %2295 = vmatpush.msra.mxu0 %v2184
      %2296 = vmatpush.msra.mxu0 %v2183
      %2297 = vmatpush.msra.mxu0 %v2182
      %2298 = vmatpush.msra.mxu0 %v2181
      %2299 = vmatpush.msra.mxu0 %v2180
      %2300 = vmatpush.msra.mxu0 %v2179
      %2301 = vmatmul.f32.gmra.mxu0 %v2123
      %v2302 = vpop.f32.mrf.mxu0
      %v2303 = vadd.f32 %v2280, %v2302
      %2304 = vmatmul.f32.gmra.mxu0 %v2128
      %v2305 = vpop.f32.mrf.mxu0
      %v2306 = vadd.f32 %v2283, %v2305
      %2307 = vdwg.mxu0
      %2308 = vmatpush.msra.mxu0 %v2210
      %2309 = vmatpush.msra.mxu0 %v2209
      %2310 = vmatpush.msra.mxu0 %v2208
      %2311 = vmatpush.msra.mxu0 %v2207
      %2312 = vmatpush.msra.mxu0 %v2206
      %2313 = vmatpush.msra.mxu0 %v2205
      %2314 = vmatpush.msra.mxu0 %v2204
      %2315 = vmatpush.msra.mxu0 %v2203
      %2316 = vmatpush.msra.mxu0 %v2202
      %2317 = vmatpush.msra.mxu0 %v2201
      %2318 = vmatpush.msra.mxu0 %v2200
      %2319 = vmatpush.msra.mxu0 %v2199
      %2320 = vmatpush.msra.mxu0 %v2198
      %2321 = vmatpush.msra.mxu0 %v2197
      %2322 = vmatpush.msra.mxu0 %v2196
      %2323 = vmatpush.msra.mxu0 %v2195
      %2324 = vmatmul.f32.gmra.mxu0 %v2124
      %v2325 = vpop.f32.mrf.mxu0
      %v2326 = vadd.f32 %v2303, %v2325
      %2327 = vmatmul.f32.gmra.mxu0 %v2129
      %v2328 = vpop.f32.mrf.mxu0
      %v2329 = vadd.f32 %v2306, %v2328
      %2330 = vdwg.mxu0
      %vm2331 = vcmp.ge.f32.partialorder %v2326, 0.0
      %vm2332 = vcmp.ge.f32.partialorder %v2329, 0.0
      %v2333 = vmul.f32 %v2326, 0.2
      %v2334 = vmul.f32 %v2329, 0.2
      %v2335 = vsel %vm2331, %v2326, %v2333
      %v2336 = vsel %vm2332, %v2329, %v2334
      %2337 = vst [vmem:[%s388] sm:$0xff] %v2335
      %2338 = vst [vmem:[%s388 + $0x8] sm:$0xff] %v2336
      %s2339 = scalar_lea.vmem %s2, 400
      %v2340 = vld [vmem:[%s2339] sm:$0xff]
      %v2341 = vld [vmem:[%s2339 + $0x8] sm:$0xff]
      %v2343 = vsel %vm398, %v2340, 0
      %v2346 = vsel %vm398, %v2341, 0
      %2348 = vmatpush.msra.mxu0 0.0
      %2349 = vmatpush.msra.mxu0 0.0
      %2350 = vmatpush.msra.mxu0 0.0
      %2351 = vmatpush.msra.mxu0 0.0
      %2352 = vmatpush.msra.mxu0 0.0
      %2353 = vmatpush.msra.mxu0 0.0
      %2354 = vmatpush.msra.mxu0 0.0
      %2355 = vmatpush.msra.mxu0 0.0
      %2356 = vmatpush.msra.mxu0 0.0
      %2357 = vmatpush.msra.mxu0 0.0
      %2358 = vmatpush.msra.mxu0 0.0
      %2359 = vmatpush.msra.mxu0 0.0
      %2360 = vmatpush.msra.mxu0 0.0
      %2361 = vmatpush.msra.mxu0 0.0
      %2362 = vmatpush.msra.mxu0 %v2336
      %2363 = vmatpush.msra.mxu0 %v2335
      %2364 = vmatmul.f32.gmra.mxu0 %v2343
      %v2365 = vpop.f32.mrf.mxu0
      %v2366 = vadd.f32 0.0, %v2365
      %2367 = vmatmul.f32.gmra.mxu0 %v2346
      %v2368 = vpop.f32.mrf.mxu0
      %v2369 = vadd.f32 0.0, %v2368
      %2370 = vdwg.mxu0
      %2371 = vst [vmem:[#allocation2] sm:$0xff] %v2366
      %2372 = vst [vmem:[#allocation2 + $0x28] sm:$0xff] %v2369
      %s2373 = scalar_lea.vmem %s2, 416
      %v2374 = vld [vmem:[%s2373] sm:$0xff]
      %v2375 = vld [vmem:[%s2373 + $0x8] sm:$0xff]
      %v2377 = vsel %vm398, %v2374, 0
      %v2380 = vsel %vm398, %v2375, 0
      %2382 = vmatpush.msra.mxu0 0.0
      %2383 = vmatpush.msra.mxu0 0.0
      %2384 = vmatpush.msra.mxu0 0.0
      %2385 = vmatpush.msra.mxu0 0.0
      %2386 = vmatpush.msra.mxu0 0.0
      %2387 = vmatpush.msra.mxu0 0.0
      %2388 = vmatpush.msra.mxu0 0.0
      %2389 = vmatpush.msra.mxu0 0.0
      %2390 = vmatpush.msra.mxu0 0.0
      %2391 = vmatpush.msra.mxu0 0.0
      %2392 = vmatpush.msra.mxu0 0.0
      %2393 = vmatpush.msra.mxu0 0.0
      %2394 = vmatpush.msra.mxu0 0.0
      %2395 = vmatpush.msra.mxu0 0.0
      %2396 = vmatpush.msra.mxu0 %v2336
      %2397 = vmatpush.msra.mxu0 %v2335
      %2398 = vmatmul.f32.gmra.mxu0 %v2377
      %v2399 = vpop.f32.mrf.mxu0
      %v2400 = vadd.f32 0.0, %v2399
      %2401 = vmatmul.f32.gmra.mxu0 %v2380
      %v2402 = vpop.f32.mrf.mxu0
      %v2403 = vadd.f32 0.0, %v2402
      %2404 = vdwg.mxu0
      %2405 = vst [vmem:[#allocation2 + $0x8] sm:$0xff] %v2400
      %2406 = vst [vmem:[#allocation2 + $0x30] sm:$0xff] %v2403
      %s2407 = scalar_lea.vmem %s2, 432
      %v2408 = vld [vmem:[%s2407] sm:$0xff]
      %v2409 = vld [vmem:[%s2407 + $0x8] sm:$0xff]
      %v2411 = vsel %vm398, %v2408, 0
      %v2414 = vsel %vm398, %v2409, 0
      %2416 = vmatpush.msra.mxu0 0.0
      %2417 = vmatpush.msra.mxu0 0.0
      %2418 = vmatpush.msra.mxu0 0.0
      %2419 = vmatpush.msra.mxu0 0.0
      %2420 = vmatpush.msra.mxu0 0.0
      %2421 = vmatpush.msra.mxu0 0.0
      %2422 = vmatpush.msra.mxu0 0.0
      %2423 = vmatpush.msra.mxu0 0.0
      %2424 = vmatpush.msra.mxu0 0.0
      %2425 = vmatpush.msra.mxu0 0.0
      %2426 = vmatpush.msra.mxu0 0.0
      %2427 = vmatpush.msra.mxu0 0.0
      %2428 = vmatpush.msra.mxu0 0.0
      %2429 = vmatpush.msra.mxu0 0.0
      %2430 = vmatpush.msra.mxu0 %v2336
      %2431 = vmatpush.msra.mxu0 %v2335
      %2432 = vmatmul.f32.gmra.mxu0 %v2411
      %v2433 = vpop.f32.mrf.mxu0
      %v2434 = vadd.f32 0.0, %v2433
      %2435 = vmatmul.f32.gmra.mxu0 %v2414
      %v2436 = vpop.f32.mrf.mxu0
      %v2437 = vadd.f32 0.0, %v2436
      %2438 = vdwg.mxu0
      %2439 = vst [vmem:[#allocation2 + $0x10] sm:$0xff] %v2434
      %2440 = vst [vmem:[#allocation2 + $0x38] sm:$0xff] %v2437
      %s2441 = scalar_lea.vmem %s2, 448
      %v2442 = vld [vmem:[%s2441] sm:$0xff]
      %v2443 = vld [vmem:[%s2441 + $0x8] sm:$0xff]
      %v2445 = vsel %vm398, %v2442, 0
      %v2448 = vsel %vm398, %v2443, 0
      %2450 = vmatpush.msra.mxu0 0.0
      %2451 = vmatpush.msra.mxu0 0.0
      %2452 = vmatpush.msra.mxu0 0.0
      %2453 = vmatpush.msra.mxu0 0.0
      %2454 = vmatpush.msra.mxu0 0.0
      %2455 = vmatpush.msra.mxu0 0.0
      %2456 = vmatpush.msra.mxu0 0.0
      %2457 = vmatpush.msra.mxu0 0.0
      %2458 = vmatpush.msra.mxu0 0.0
      %2459 = vmatpush.msra.mxu0 0.0
      %2460 = vmatpush.msra.mxu0 0.0
      %2461 = vmatpush.msra.mxu0 0.0
      %2462 = vmatpush.msra.mxu0 0.0
      %2463 = vmatpush.msra.mxu0 0.0
      %2464 = vmatpush.msra.mxu0 %v2336
      %2465 = vmatpush.msra.mxu0 %v2335
      %2466 = vmatmul.f32.gmra.mxu0 %v2445
      %v2467 = vpop.f32.mrf.mxu0
      %v2468 = vadd.f32 0.0, %v2467
      %2469 = vmatmul.f32.gmra.mxu0 %v2448
      %v2470 = vpop.f32.mrf.mxu0
      %v2471 = vadd.f32 0.0, %v2470
      %2472 = vdwg.mxu0
      %2473 = vst [vmem:[#allocation2 + $0x18] sm:$0xff] %v2468
      %2474 = vst [vmem:[#allocation2 + $0x40] sm:$0xff] %v2471
      %s2475 = scalar_lea.vmem %s2, 464
      %v2476 = vld [vmem:[%s2475] sm:$0xff]
      %v2477 = vld [vmem:[%s2475 + $0x8] sm:$0xff]
      %v2479 = vsel %vm398, %v2476, 0
      %v2482 = vsel %vm398, %v2477, 0
      %2484 = vmatpush.msra.mxu0 0.0
      %2485 = vmatpush.msra.mxu0 0.0
      %2486 = vmatpush.msra.mxu0 0.0
      %2487 = vmatpush.msra.mxu0 0.0
      %2488 = vmatpush.msra.mxu0 0.0
      %2489 = vmatpush.msra.mxu0 0.0
      %2490 = vmatpush.msra.mxu0 0.0
      %2491 = vmatpush.msra.mxu0 0.0
      %2492 = vmatpush.msra.mxu0 0.0
      %2493 = vmatpush.msra.mxu0 0.0
      %2494 = vmatpush.msra.mxu0 0.0
      %2495 = vmatpush.msra.mxu0 0.0
      %2496 = vmatpush.msra.mxu0 0.0
      %2497 = vmatpush.msra.mxu0 0.0
      %2498 = vmatpush.msra.mxu0 %v2336
      %2499 = vmatpush.msra.mxu0 %v2335
      %2500 = vmatmul.f32.gmra.mxu0 %v2479
      %v2501 = vpop.f32.mrf.mxu0
      %v2502 = vadd.f32 0.0, %v2501
      %2503 = vmatmul.f32.gmra.mxu0 %v2482
      %v2504 = vpop.f32.mrf.mxu0
      %v2505 = vadd.f32 0.0, %v2504
      %2506 = vdwg.mxu0
      %2507 = vst [vmem:[#allocation2 + $0x20] sm:$0xff] %v2502
      %2508 = vst [vmem:[#allocation2 + $0x48] sm:$0xff] %v2505
      %v2509 = vld [vmem:[#allocation2] sm:$0xff]
      %v2510 = vld [vmem:[#allocation2 + $0x8] sm:$0xff]
      %v2511 = vld [vmem:[#allocation2 + $0x10] sm:$0xff]
      %v2512 = vld [vmem:[#allocation2 + $0x18] sm:$0xff]
      %v2513 = vld [vmem:[#allocation2 + $0x20] sm:$0xff]
      %v2514 = vld [vmem:[#allocation2 + $0x28] sm:$0xff]
      %v2515 = vld [vmem:[#allocation2 + $0x30] sm:$0xff]
      %v2516 = vld [vmem:[#allocation2 + $0x38] sm:$0xff]
      %v2517 = vld [vmem:[#allocation2 + $0x40] sm:$0xff]
      %v2518 = vld [vmem:[#allocation2 + $0x48] sm:$0xff]
      %s2519 = scalar_lea.vmem %s1, 3200
      %v2520 = vld [vmem:[%s2519] sm:$0xff]
      %v2521 = vld [vmem:[%s2519 + $0x8] sm:$0xff]
      %v2522 = vld [vmem:[%s2519 + $0x10] sm:$0xff]
      %v2523 = vld [vmem:[%s2519 + $0x18] sm:$0xff]
      %v2524 = vld [vmem:[%s2519 + $0x20] sm:$0xff]
      %v2525 = vld [vmem:[%s2519 + $0x28] sm:$0xff]
      %v2526 = vld [vmem:[%s2519 + $0x30] sm:$0xff]
      %v2527 = vld [vmem:[%s2519 + $0x38] sm:$0xff]
      %v2528 = vld [vmem:[%s2519 + $0x40] sm:$0xff]
      %v2529 = vld [vmem:[%s2519 + $0x48] sm:$0xff]
      %v2530 = vld [vmem:[%s2519 + $0x50] sm:$0xff]
      %v2531 = vld [vmem:[%s2519 + $0x58] sm:$0xff]
      %v2532 = vld [vmem:[%s2519 + $0x60] sm:$0xff]
      %v2533 = vld [vmem:[%s2519 + $0x68] sm:$0xff]
      %v2534 = vld [vmem:[%s2519 + $0x70] sm:$0xff]
      %v2535 = vld [vmem:[%s2519 + $0x78] sm:$0xff]
      %v2536 = vld [vmem:[%s2519 + $0x80] sm:$0xff]
      %v2537 = vld [vmem:[%s2519 + $0x88] sm:$0xff]
      %v2538 = vld [vmem:[%s2519 + $0x90] sm:$0xff]
      %v2539 = vld [vmem:[%s2519 + $0x98] sm:$0xff]
      %v2540 = vld [vmem:[%s2519 + $0xa0] sm:$0xff]
      %v2541 = vld [vmem:[%s2519 + $0xa8] sm:$0xff]
      %v2542 = vld [vmem:[%s2519 + $0xb0] sm:$0xff]
      %v2543 = vld [vmem:[%s2519 + $0xb8] sm:$0xff]
      %v2544 = vld [vmem:[%s2519 + $0xc0] sm:$0xff]
      %v2545 = vld [vmem:[%s2519 + $0xc8] sm:$0xff]
      %v2546 = vld [vmem:[%s2519 + $0xd0] sm:$0xff]
      %v2547 = vld [vmem:[%s2519 + $0xd8] sm:$0xff]
      %v2548 = vld [vmem:[%s2519 + $0xe0] sm:$0xff]
      %v2549 = vld [vmem:[%s2519 + $0xe8] sm:$0xff]
      %v2550 = vld [vmem:[%s2519 + $0xf0] sm:$0xff]
      %v2551 = vld [vmem:[%s2519 + $0xf8] sm:$0xff]
      %v2552 = vld [vmem:[%s2519 + $0x100] sm:$0xff]
      %v2553 = vld [vmem:[%s2519 + $0x108] sm:$0xff]
      %v2554 = vld [vmem:[%s2519 + $0x110] sm:$0xff]
      %v2555 = vld [vmem:[%s2519 + $0x118] sm:$0xff]
      %v2556 = vld [vmem:[%s2519 + $0x120] sm:$0xff]
      %v2557 = vld [vmem:[%s2519 + $0x128] sm:$0xff]
      %v2558 = vld [vmem:[%s2519 + $0x130] sm:$0xff]
      %v2559 = vld [vmem:[%s2519 + $0x138] sm:$0xff]
      %v2560 = vld [vmem:[%s2519 + $0x140] sm:$0xff]
      %v2561 = vld [vmem:[%s2519 + $0x148] sm:$0xff]
      %v2562 = vld [vmem:[%s2519 + $0x150] sm:$0xff]
      %v2563 = vld [vmem:[%s2519 + $0x158] sm:$0xff]
      %v2564 = vld [vmem:[%s2519 + $0x160] sm:$0xff]
      %v2565 = vld [vmem:[%s2519 + $0x168] sm:$0xff]
      %v2566 = vld [vmem:[%s2519 + $0x170] sm:$0xff]
      %v2567 = vld [vmem:[%s2519 + $0x178] sm:$0xff]
      %v2568 = vld [vmem:[%s2519 + $0x180] sm:$0xff]
      %v2569 = vld [vmem:[%s2519 + $0x188] sm:$0xff]
      %v2570 = vld [vmem:[%s2519 + $0x190] sm:$0xff]
      %v2571 = vld [vmem:[%s2519 + $0x198] sm:$0xff]
      %v2572 = vld [vmem:[%s2519 + $0x1a0] sm:$0xff]
      %v2573 = vld [vmem:[%s2519 + $0x1a8] sm:$0xff]
      %v2574 = vld [vmem:[%s2519 + $0x1b0] sm:$0xff]
      %v2575 = vld [vmem:[%s2519 + $0x1b8] sm:$0xff]
      %v2576 = vld [vmem:[%s2519 + $0x1c0] sm:$0xff]
      %v2577 = vld [vmem:[%s2519 + $0x1c8] sm:$0xff]
      %v2578 = vld [vmem:[%s2519 + $0x1d0] sm:$0xff]
      %v2579 = vld [vmem:[%s2519 + $0x1d8] sm:$0xff]
      %v2580 = vld [vmem:[%s2519 + $0x1e0] sm:$0xff]
      %v2581 = vld [vmem:[%s2519 + $0x1e8] sm:$0xff]
      %v2582 = vld [vmem:[%s2519 + $0x1f0] sm:$0xff]
      %v2583 = vld [vmem:[%s2519 + $0x1f8] sm:$0xff]
      %v2584 = vld [vmem:[%s2519 + $0x200] sm:$0xff]
      %v2585 = vld [vmem:[%s2519 + $0x208] sm:$0xff]
      %v2586 = vld [vmem:[%s2519 + $0x210] sm:$0xff]
      %v2587 = vld [vmem:[%s2519 + $0x218] sm:$0xff]
      %v2588 = vld [vmem:[%s2519 + $0x220] sm:$0xff]
      %v2589 = vld [vmem:[%s2519 + $0x228] sm:$0xff]
      %v2590 = vld [vmem:[%s2519 + $0x230] sm:$0xff]
      %v2591 = vld [vmem:[%s2519 + $0x238] sm:$0xff]
      %v2592 = vld [vmem:[%s2519 + $0x240] sm:$0xff]
      %v2593 = vld [vmem:[%s2519 + $0x248] sm:$0xff]
      %v2594 = vld [vmem:[%s2519 + $0x250] sm:$0xff]
      %v2595 = vld [vmem:[%s2519 + $0x258] sm:$0xff]
      %v2596 = vld [vmem:[%s2519 + $0x260] sm:$0xff]
      %v2597 = vld [vmem:[%s2519 + $0x268] sm:$0xff]
      %v2598 = vld [vmem:[%s2519 + $0x270] sm:$0xff]
      %v2599 = vld [vmem:[%s2519 + $0x278] sm:$0xff]
      %s2600 = scalar_lea.vmem %s3, 5
      %v2601 = vld [vmem:[%s2600] sm:$0x1]
      %v2603 = vperm.slane %v2601, 0
      %2605 = vmatpush.msra.mxu0 %v2535
      %2606 = vmatpush.msra.mxu0 %v2534
      %2607 = vmatpush.msra.mxu0 %v2533
      %2608 = vmatpush.msra.mxu0 %v2532
      %2609 = vmatpush.msra.mxu0 %v2531
      %2610 = vmatpush.msra.mxu0 %v2530
      %2611 = vmatpush.msra.mxu0 %v2529
      %2612 = vmatpush.msra.mxu0 %v2528
      %2613 = vmatpush.msra.mxu0 %v2527
      %2614 = vmatpush.msra.mxu0 %v2526
      %2615 = vmatpush.msra.mxu0 %v2525
      %2616 = vmatpush.msra.mxu0 %v2524
      %2617 = vmatpush.msra.mxu0 %v2523
      %2618 = vmatpush.msra.mxu0 %v2522
      %2619 = vmatpush.msra.mxu0 %v2521
      %2620 = vmatpush.msra.mxu0 %v2520
      %2621 = vmatmul.f32.gmra.mxu0 %v2509
      %v2622 = vpop.f32.mrf.mxu0
      %v2623 = vadd.f32 %v2603, %v2622
      %2624 = vmatmul.f32.gmra.mxu0 %v2514
      %v2625 = vpop.f32.mrf.mxu0
      %v2626 = vadd.f32 %v2603, %v2625
      %2627 = vdwg.mxu0
      %2628 = vmatpush.msra.mxu0 %v2551
      %2629 = vmatpush.msra.mxu0 %v2550
      %2630 = vmatpush.msra.mxu0 %v2549
      %2631 = vmatpush.msra.mxu0 %v2548
      %2632 = vmatpush.msra.mxu0 %v2547
      %2633 = vmatpush.msra.mxu0 %v2546
      %2634 = vmatpush.msra.mxu0 %v2545
      %2635 = vmatpush.msra.mxu0 %v2544
      %2636 = vmatpush.msra.mxu0 %v2543
      %2637 = vmatpush.msra.mxu0 %v2542
      %2638 = vmatpush.msra.mxu0 %v2541
      %2639 = vmatpush.msra.mxu0 %v2540
      %2640 = vmatpush.msra.mxu0 %v2539
      %2641 = vmatpush.msra.mxu0 %v2538
      %2642 = vmatpush.msra.mxu0 %v2537
      %2643 = vmatpush.msra.mxu0 %v2536
      %2644 = vmatmul.f32.gmra.mxu0 %v2510
      %v2645 = vpop.f32.mrf.mxu0
      %v2646 = vadd.f32 %v2623, %v2645
      %2647 = vmatmul.f32.gmra.mxu0 %v2515
      %v2648 = vpop.f32.mrf.mxu0
      %v2649 = vadd.f32 %v2626, %v2648
      %2650 = vdwg.mxu0
      %2651 = vmatpush.msra.mxu0 %v2567
      %2652 = vmatpush.msra.mxu0 %v2566
      %2653 = vmatpush.msra.mxu0 %v2565
      %2654 = vmatpush.msra.mxu0 %v2564
      %2655 = vmatpush.msra.mxu0 %v2563
      %2656 = vmatpush.msra.mxu0 %v2562
      %2657 = vmatpush.msra.mxu0 %v2561
      %2658 = vmatpush.msra.mxu0 %v2560
      %2659 = vmatpush.msra.mxu0 %v2559
      %2660 = vmatpush.msra.mxu0 %v2558
      %2661 = vmatpush.msra.mxu0 %v2557
      %2662 = vmatpush.msra.mxu0 %v2556
      %2663 = vmatpush.msra.mxu0 %v2555
      %2664 = vmatpush.msra.mxu0 %v2554
      %2665 = vmatpush.msra.mxu0 %v2553
      %2666 = vmatpush.msra.mxu0 %v2552
      %2667 = vmatmul.f32.gmra.mxu0 %v2511
      %v2668 = vpop.f32.mrf.mxu0
      %v2669 = vadd.f32 %v2646, %v2668
      %2670 = vmatmul.f32.gmra.mxu0 %v2516
      %v2671 = vpop.f32.mrf.mxu0
      %v2672 = vadd.f32 %v2649, %v2671
      %2673 = vdwg.mxu0
      %2674 = vmatpush.msra.mxu0 %v2583
      %2675 = vmatpush.msra.mxu0 %v2582
      %2676 = vmatpush.msra.mxu0 %v2581
      %2677 = vmatpush.msra.mxu0 %v2580
      %2678 = vmatpush.msra.mxu0 %v2579
      %2679 = vmatpush.msra.mxu0 %v2578
      %2680 = vmatpush.msra.mxu0 %v2577
      %2681 = vmatpush.msra.mxu0 %v2576
      %2682 = vmatpush.msra.mxu0 %v2575
      %2683 = vmatpush.msra.mxu0 %v2574
      %2684 = vmatpush.msra.mxu0 %v2573
      %2685 = vmatpush.msra.mxu0 %v2572
      %2686 = vmatpush.msra.mxu0 %v2571
      %2687 = vmatpush.msra.mxu0 %v2570
      %2688 = vmatpush.msra.mxu0 %v2569
      %2689 = vmatpush.msra.mxu0 %v2568
      %2690 = vmatmul.f32.gmra.mxu0 %v2512
      %v2691 = vpop.f32.mrf.mxu0
      %v2692 = vadd.f32 %v2669, %v2691
      %2693 = vmatmul.f32.gmra.mxu0 %v2517
      %v2694 = vpop.f32.mrf.mxu0
      %v2695 = vadd.f32 %v2672, %v2694
      %2696 = vdwg.mxu0
      %2697 = vmatpush.msra.mxu0 %v2599
      %2698 = vmatpush.msra.mxu0 %v2598
      %2699 = vmatpush.msra.mxu0 %v2597
      %2700 = vmatpush.msra.mxu0 %v2596
      %2701 = vmatpush.msra.mxu0 %v2595
      %2702 = vmatpush.msra.mxu0 %v2594
      %2703 = vmatpush.msra.mxu0 %v2593
      %2704 = vmatpush.msra.mxu0 %v2592
      %2705 = vmatpush.msra.mxu0 %v2591
      %2706 = vmatpush.msra.mxu0 %v2590
      %2707 = vmatpush.msra.mxu0 %v2589
      %2708 = vmatpush.msra.mxu0 %v2588
      %2709 = vmatpush.msra.mxu0 %v2587
      %2710 = vmatpush.msra.mxu0 %v2586
      %2711 = vmatpush.msra.mxu0 %v2585
      %2712 = vmatpush.msra.mxu0 %v2584
      %2713 = vmatmul.f32.gmra.mxu0 %v2513
      %v2714 = vpop.f32.mrf.mxu0
      %v2715 = vadd.f32 %v2692, %v2714
      %2716 = vmatmul.f32.gmra.mxu0 %v2518
      %v2717 = vpop.f32.mrf.mxu0
      %v2718 = vadd.f32 %v2695, %v2717
      %2719 = vdwg.mxu0
      %vm2720 = vcmp.ge.f32.partialorder %v2715, 0.0
      %vm2721 = vcmp.ge.f32.partialorder %v2718, 0.0
      %v2722 = vmul.f32 %v2715, 0.2
      %v2723 = vmul.f32 %v2718, 0.2
      %v2724 = vsel %vm2720, %v2715, %v2722
      %v2725 = vsel %vm2721, %v2718, %v2723
      %2726 = vst [vmem:[%s393] sm:$0xff] %v2724
      %2727 = vst [vmem:[%s393 + $0x8] sm:$0xff] %v2725
      %p2728 = scmp.lt.s32.totalorder %s21, 1
      %s2729 = scalar_select %p2728, %s21, 1
      %s2730 = smul.addr %s2729, 2
      %s2731 = smul.addr %s2730, 8
      %s2732 = scalar_lea.vmem %s4, %s2731
      %p2733 = scmp.lt.s32.totalorder %s21, 1
      %s2734 = scalar_select %p2733, %s21, 1
      %s2735 = smul.addr %s2734, 2
      %s2736 = smul.addr %s2735, 8
      %s2737 = scalar_lea.vmem %s5, %s2736
      %p2738 = scmp.lt.s32.totalorder %s21, 1
      %s2739 = scalar_select %p2738, %s21, 1
      %s2740 = smul.addr %s2739, 2
      %s2741 = smul.addr %s2740, 8
      %s2742 = scalar_lea.vmem %s6, %s2741
      %p2743 = scmp.lt.s32.totalorder %s21, 1
      %s2744 = scalar_select %p2743, %s21, 1
      %s2745 = smul.addr %s2744, 2
      %s2746 = smul.addr %s2745, 8
      %s2747 = scalar_lea.vmem %s7, %s2746
      %p2748 = scmp.lt.s32.totalorder %s21, 1
      %s2749 = scalar_select %p2748, %s21, 1
      %s2750 = smul.addr %s2749, 2
      %s2751 = smul.addr %s2750, 8
      %s2752 = scalar_lea.vmem %s8, %s2751
      %p2753 = scmp.lt.s32.totalorder %s21, 1
      %s2754 = scalar_select %p2753, %s21, 1
      %s2755 = smul.addr %s2754, 2
      %s2756 = smul.addr %s2755, 8
      %s2757 = scalar_lea.vmem %s9, %s2756
      // Predicated region
      $region37: #{discriminator3_forward.1} parent=35 // pred_check
        %p2758 = pneg %p128
      $region38: #{discriminator3_forward.1} parent=35 // pred_check_branch
        %2760 = sbr.rel (%p2758) target = $region40
      $region39: #{discriminator3_forward.1} parent=35 // pred_region
        _
      $region40: #{discriminator3_forward.1} parent=35 // pred_fallthru
        _
      // Predicated region
      $region41: #{discriminator3_forward.1} parent=35 // pred_check
        %p2761 = pneg %p154
      $region42: #{discriminator3_forward.1} parent=35 // pred_check_branch
        %2763 = sbr.rel (%p2761) target = $region44
      $region43: #{discriminator3_forward.1} parent=35 // pred_region
        _
      $region44: #{discriminator3_forward.1} parent=35 // pred_fallthru
        _
      // Predicated region
      $region45: #{discriminator3_forward.1} parent=35 // pred_check
        %p2764 = pneg %p180
      $region46: #{discriminator3_forward.1} parent=35 // pred_check_branch
        %2766 = sbr.rel (%p2764) target = $region48
      $region47: #{discriminator3_forward.1} parent=35 // pred_region
        _
      $region48: #{discriminator3_forward.1} parent=35 // pred_fallthru
        _
      // Predicated region
      $region49: #{discriminator3_forward.1} parent=35 // pred_check
        %p2767 = pneg %p206
      $region50: #{discriminator3_forward.1} parent=35 // pred_check_branch
        %2769 = sbr.rel (%p2767) target = $region52
      $region51: #{discriminator3_forward.1} parent=35 // pred_region
        _
      $region52: #{discriminator3_forward.1} parent=35 // pred_fallthru
        _
      // Predicated region
      $region53: #{discriminator3_forward.1} parent=35 // pred_check
        %p2770 = pneg %p232
      $region54: #{discriminator3_forward.1} parent=35 // pred_check_branch
        %2772 = sbr.rel (%p2770) target = $region56
      $region55: #{discriminator3_forward.1} parent=35 // pred_region
        _
      $region56: #{discriminator3_forward.1} parent=35 // pred_fallthru
        _
      // Predicated region
      $region57: #{discriminator3_forward.1} parent=35 // pred_check
        %p2773 = pneg %p258
      $region58: #{discriminator3_forward.1} parent=35 // pred_check_branch
        %2775 = sbr.rel (%p2773) target = $region60
      $region59: #{discriminator3_forward.1} parent=35 // pred_region
        _
      $region60: #{discriminator3_forward.1} parent=35 // pred_fallthru
        _
    $region36: #{discriminator3_forward.1} parent=5 // pred_fallthru
      _
    %p2776 = scmp.le.s32.totalorder 2, %s16
    // Predicated region
    $region61: #{discriminator3_forward.1} parent=5 // pred_check
      %p2777 = pneg %p2776
    $region62: #{discriminator3_forward.1} parent=5 // pred_check_branch
      %2779 = sbr.rel (%p2777) target = $region64
    $region63: #{discriminator3_forward.1} parent=5 // pred_region
      %s2780 = ssub.s32 %s16, 2
      // Predicated region
      $region65: #{discriminator3_forward.1} parent=63 // pred_check
        %p2781 = pneg %p134
      $region66: #{discriminator3_forward.1} parent=63 // pred_check_branch
        %2783 = sbr.rel (%p2781) target = $region68
      $region67: #{discriminator3_forward.1} parent=63 // pred_region
        %p2784 = scmp.lt.s32.totalorder %s22, 1
        %s2785 = scalar_select %p2784, %s22, 1
        %s2786 = smul.addr %s2785, 2
        %s2787 = smul.addr %s2786, 8
        %s2788 = scalar_lea.vmem %s4, %s2787
      $region68: #{discriminator3_forward.1} parent=63 // pred_fallthru
        _
      // Predicated region
      $region69: #{discriminator3_forward.1} parent=63 // pred_check
        %p2789 = pneg %p160
      $region70: #{discriminator3_forward.1} parent=63 // pred_check_branch
        %2791 = sbr.rel (%p2789) target = $region72
      $region71: #{discriminator3_forward.1} parent=63 // pred_region
        %p2792 = scmp.lt.s32.totalorder %s22, 1
        %s2793 = scalar_select %p2792, %s22, 1
        %s2794 = smul.addr %s2793, 2
        %s2795 = smul.addr %s2794, 8
        %s2796 = scalar_lea.vmem %s5, %s2795
      $region72: #{discriminator3_forward.1} parent=63 // pred_fallthru
        _
      // Predicated region
      $region73: #{discriminator3_forward.1} parent=63 // pred_check
        %p2797 = pneg %p186
      $region74: #{discriminator3_forward.1} parent=63 // pred_check_branch
        %2799 = sbr.rel (%p2797) target = $region76
      $region75: #{discriminator3_forward.1} parent=63 // pred_region
        %p2800 = scmp.lt.s32.totalorder %s22, 1
        %s2801 = scalar_select %p2800, %s22, 1
        %s2802 = smul.addr %s2801, 2
        %s2803 = smul.addr %s2802, 8
        %s2804 = scalar_lea.vmem %s6, %s2803
      $region76: #{discriminator3_forward.1} parent=63 // pred_fallthru
        _
      // Predicated region
      $region77: #{discriminator3_forward.1} parent=63 // pred_check
        %p2805 = pneg %p212
      $region78: #{discriminator3_forward.1} parent=63 // pred_check_branch
        %2807 = sbr.rel (%p2805) target = $region80
      $region79: #{discriminator3_forward.1} parent=63 // pred_region
        %p2808 = scmp.lt.s32.totalorder %s22, 1
        %s2809 = scalar_select %p2808, %s22, 1
        %s2810 = smul.addr %s2809, 2
        %s2811 = smul.addr %s2810, 8
        %s2812 = scalar_lea.vmem %s7, %s2811
      $region80: #{discriminator3_forward.1} parent=63 // pred_fallthru
        _
      // Predicated region
      $region81: #{discriminator3_forward.1} parent=63 // pred_check
        %p2813 = pneg %p238
      $region82: #{discriminator3_forward.1} parent=63 // pred_check_branch
        %2815 = sbr.rel (%p2813) target = $region84
      $region83: #{discriminator3_forward.1} parent=63 // pred_region
        %p2816 = scmp.lt.s32.totalorder %s22, 1
        %s2817 = scalar_select %p2816, %s22, 1
        %s2818 = smul.addr %s2817, 2
        %s2819 = smul.addr %s2818, 8
        %s2820 = scalar_lea.vmem %s8, %s2819
      $region84: #{discriminator3_forward.1} parent=63 // pred_fallthru
        _
      // Predicated region
      $region85: #{discriminator3_forward.1} parent=63 // pred_check
        %p2821 = pneg %p264
      $region86: #{discriminator3_forward.1} parent=63 // pred_check_branch
        %2823 = sbr.rel (%p2821) target = $region88
      $region87: #{discriminator3_forward.1} parent=63 // pred_region
        %p2824 = scmp.lt.s32.totalorder %s22, 1
        %s2825 = scalar_select %p2824, %s22, 1
        %s2826 = smul.addr %s2825, 2
        %s2827 = smul.addr %s2826, 8
        %s2828 = scalar_lea.vmem %s9, %s2827
      $region88: #{discriminator3_forward.1} parent=63 // pred_fallthru
        _
    $region64: #{discriminator3_forward.1} parent=5 // pred_fallthru
      _
  $region6: #{discriminator3_forward.1} parent=0 // loop_footer
    %s20 = sadd.s32 1, %s16
  $region7: #{discriminator3_forward.1} parent=0 // loop_footer_branch
    %15 = sbr.rel target = $region3
  $region8: #{discriminator3_forward.1} parent=0 // loop_exit
    _

</llo_original>
